<compile_context>
chip_gen: v5e
topology: v5e:2x2
jax: 0.10.0
libtpu: 0.0.40
codegen_flags: <defaults>
</compile_context>

<pallas_src>
import functools

import jax
import jax.numpy as jnp
from jax.experimental import pallas as pl
from jax.experimental.pallas import tpu as pltpu

SCALE_FACTOR = 2.0
CLAMP_MIN = -10.0
CLAMP_MAX = 10.0


def _vmem_capacity_bytes():
    """Physical VMEM of the attached chip; conservative (v7x, 64 MiB) fallback if unknown."""
    try:
        info = pltpu.get_tpu_info()
        cap = getattr(info, "vmem_capacity_bytes", None)
        if cap:
            return int(cap)
    except Exception:
        pass
    return 64 << 20


def _pick_bm(B):
    """Batch tile: multiple of 8, <= 256 (256-wide MXU on v6e/v7x), and n_b >= 2 whenever
    possible so the 'parallel' batch axis can shard across v7x's two TensorCores."""
    if B <= 8:
        return B
    for c in (256, 128, 64, 32, 16, 8):
        if c <= B and B % c == 0 and B // c >= 2:
            return c
    for c in (256, 128, 64, 32, 16, 8):
        if c <= B and B % c == 0:
            return c
    return B


def _epilogue(acc, b_ref, o_ref, out_scale, clamp_min, clamp_max):
    # acc: (bm, H) f32 = x @ W.T ; b_ref: (1, H) pre-scaled bias ; o_ref: (bm, 1)
    y = acc * out_scale + b_ref[...]                   # = (x @ W.T + b) * scale * 2
    y = jnp.clip(y, clamp_min, clamp_max)
    # numerically-stable logsumexp over the hidden dim (axis=1), keepdim
    m = jnp.max(y, axis=1, keepdims=True)
    lse = m + jnp.log(jnp.sum(jnp.exp(y - m), axis=1, keepdims=True))
    # out = lse * mish(lse); stable softplus = max(x, 0) + log1p(exp(-|x|))
    sp = jnp.maximum(lse, 0.0) + jnp.log1p(jnp.exp(-jnp.abs(lse)))
    o_ref[...] = (lse * (lse * jnp.tanh(sp))).astype(o_ref.dtype)


def _fused_kernel_single(x_ref, w_ref, b_ref, o_ref, *,
                         out_scale, clamp_min, clamp_max):
    # x_ref: (bm, K) f32 (cast to bf16 here, on the VPU); w_ref: (K, H) bf16.
    acc = jnp.dot(x_ref[...].astype(jnp.bfloat16), w_ref[...],
                  preferred_element_type=jnp.float32)
    _epilogue(acc, b_ref, o_ref, out_scale, clamp_min, clamp_max)


def _fused_kernel_ktiled(x_ref, w_ref, b_ref, o_ref, acc_ref, *,
                         out_scale, clamp_min, clamp_max):
    k = pl.program_id(1)

    @pl.when(k == 0)
    def _():
        acc_ref[...] = jnp.zeros_like(acc_ref)

    acc_ref[...] += jnp.dot(x_ref[...].astype(jnp.bfloat16), w_ref[...],
                            preferred_element_type=jnp.float32)

    @pl.when(k == pl.num_programs(1) - 1)
    def _():
        _epilogue(acc_ref[...], b_ref, o_ref, out_scale, clamp_min, clamp_max)


def prepare_params(weight, bias, scale_factor=SCALE_FACTOR):
    """One-time (init) parameter prep: (H, K) -> (K, H) bf16 weight, bias folded with 2*scale.
    This is the only place the weight layout / dtype is touched; the per-call hot path
    (fused_forward) performs no wrapper-side HBM passes over the parameters."""
    out_scale = 2.0 * float(scale_factor)
    w_t = jnp.asarray(weight).T.astype(jnp.bfloat16)                      # (K, H)
    b_scaled = (jnp.asarray(bias).astype(jnp.float32) * out_scale).reshape(1, -1)
    return w_t, b_scaled


def fused_forward(x, w_t, b_scaled, *, scale_factor=SCALE_FACTOR,
                  clamp_min=CLAMP_MIN, clamp_max=CLAMP_MAX, bm=None):
    """Hot path. x: (B, K) f32, w_t: (K, H) bf16, b_scaled: (1, H) f32 -> (B, 1) f32."""
    B, K = x.shape
    K2, H = w_t.shape
    assert K2 == K and b_scaled.shape == (1, H)
    out_scale = 2.0 * float(scale_factor)

    if bm is None:
        bm = _pick_bm(B)
    assert B % bm == 0, "batch must be divisible by the batch tile"
    n_b = B // bm

    cap = _vmem_capacity_bytes()
    budget = int(0.70 * cap)            # fit-check budget (generation-aware)
    vmem_limit = int(0.75 * cap)        # scoped VMEM limit passed to Mosaic

    misc = 2 * (H * 4 + bm * 4)                         # bias + output buffers
    single_need = (2 * bm * K * 4                       # f32 x tile (double-buffered)
                   + 2 * K * H * 2                      # bf16 weight (double-buffered)
                   + 3 * bm * H * 4                     # acc / y / exp(y-m) f32 temps
                   + misc)

    common_kwargs = dict(out_scale=out_scale, clamp_min=clamp_min, clamp_max=clamp_max)

    if single_need <= budget:
        # Single-shot: whole K contraction per batch tile, no scratch accumulator.
        kernel = functools.partial(_fused_kernel_single, **common_kwargs)
        grid_spec = pltpu.PrefetchScalarGridSpec(
            num_scalar_prefetch=0,
            grid=(n_b,),
            in_specs=[
                pl.BlockSpec((bm, K), lambda i: (i, 0)),    # x tile, f32
                pl.BlockSpec((K, H), lambda i: (0, 0)),     # full weight, (K, H) bf16
                pl.BlockSpec((1, H), lambda i: (0, 0)),     # pre-scaled bias, f32
            ],
            out_specs=pl.BlockSpec((bm, 1), lambda i: (i, 0)),
        )
        dims = ("parallel",)
    else:
        # K-tiled fallback (reduction axis last); pick largest fitting tk (multiple of 128).
        tk = None
        cand = 128
        while cand < K:
            if K % cand == 0:
                need = (2 * bm * cand * 4                   # f32 x tiles
                        + 3 * cand * H * 2                  # bf16 weight tiles (3-deep)
                        + bm * H * 4                        # f32 accumulator scratch
                        + 2 * bm * H * 4                    # epilogue temps
                        + misc)
                if need <= budget:
                    tk = cand
            cand += 128
        if tk is None:
            # TODO(synk): add H-tiling with an online (flash-style) running-max logsumexp for
            # configs where even a (128, H) weight tile + (bm, H) accumulator exceed VMEM.
            tk = 128
        n_k = K // tk

        try:
            w_spec = pl.BlockSpec((tk, H), lambda i, k: (k, 0),
                                  pipeline_mode=pl.Buffered(3))
        except TypeError:  # older BlockSpec without pipeline_mode
            w_spec = pl.BlockSpec((tk, H), lambda i, k: (k, 0))

        kernel = functools.partial(_fused_kernel_ktiled, **common_kwargs)
        grid_spec = pltpu.PrefetchScalarGridSpec(
            num_scalar_prefetch=0,
            grid=(n_b, n_k),                                # reduction axis last
            in_specs=[
                pl.BlockSpec((bm, tk), lambda i, k: (i, k)),
                w_spec,
                pl.BlockSpec((1, H), lambda i, k: (0, 0)),
            ],
            out_specs=pl.BlockSpec((bm, 1), lambda i, k: (i, 0)),
            scratch_shapes=[pltpu.VMEM((bm, H), jnp.float32)],
        )
        dims = ("parallel", "arbitrary")

    return pl.pallas_call(
        kernel,
        out_shape=jax.ShapeDtypeStruct((B, 1), jnp.float32),
        grid_spec=grid_spec,
        compiler_params=pltpu.CompilerParams(
            dimension_semantics=dims, vmem_limit_bytes=vmem_limit),
    )(x, w_t, b_scaled)


def model_forward(x, weight, bias, *, scale_factor=SCALE_FACTOR,
                  clamp_min=CLAMP_MIN, clamp_max=CLAMP_MAX, bm=None):
    """Convenience wrapper matching the torch module signature (weight in (H, K) layout)."""
    w_t, b_scaled = prepare_params(weight, bias, scale_factor)
    return fused_forward(x, w_t, b_scaled, scale_factor=scale_factor,
                         clamp_min=clamp_min, clamp_max=clamp_max, bm=bm)


def _reference(x, weight, bias, scale_factor, clamp_min, clamp_max):
    # Matches the kernel's numerics: bf16 matmul operands, f32 accumulate + f32 epilogue.
    y = jnp.dot(x.astype(jnp.bfloat16), weight.T.astype(jnp.bfloat16),
                preferred_element_type=jnp.float32)
    y = (y + bias) * scale_factor
    y = y + y
    y = jnp.clip(y, clamp_min, clamp_max)
    lse = jax.scipy.special.logsumexp(y, axis=1, keepdims=True)
    mish = lse * jnp.tanh(jax.nn.softplus(lse))
    return lse * mish


if __name__ == "__main__":
    # Shapes consistent with the module constants (input_size=512, hidden_size=1024).
    batch, input_size, hidden_size = 128, 512, 1024

    key = jax.random.PRNGKey(0)
    kx, kw, kb = jax.random.split(key, 3)
    x = jax.random.normal(kx, (batch, input_size), dtype=jnp.float32)
    # Deterministic nn.Linear-style init (+0.02 bias shift like the module).
    bound = 1.0 / (input_size ** 0.5)
    weight = jax.random.uniform(kw, (hidden_size, input_size),
                                minval=-bound, maxval=bound, dtype=jnp.float32)
    bias = jax.random.uniform(kb, (hidden_size,),
                              minval=-bound, maxval=bound,
                              dtype=jnp.float32) + 0.02

    # One-time parameter prep (layout + dtype + bias folding) done at "init" time.
    w_t, b_scaled = prepare_params(weight, bias, SCALE_FACTOR)
    w_t, b_scaled = jax.block_until_ready((w_t, b_scaled))

    out = fused_forward(x, w_t, b_scaled,
                        scale_factor=SCALE_FACTOR,
                        clamp_min=CLAMP_MIN, clamp_max=CLAMP_MAX)
    out = jax.block_until_ready(out)

    ref = _reference(x, weight, bias, SCALE_FACTOR, CLAMP_MIN, CLAMP_MAX)
    assert out.shape == (batch, 1)
    assert jnp.allclose(out, ref, atol=2e-3, rtol=2e-3), (out, ref)

    print("KERNEL_OK")
</pallas_src>

<mosaic_0001>
module attributes {stable_mosaic.version = 11 : i64} {
  func.func @_fused_kernel_single(%arg0: i32, %arg1: memref<64x512xf32, #tpu.memory_space<vmem>>, %arg2: memref<512x1024xbf16, #tpu.memory_space<vmem>>, %arg3: memref<1x1024xf32, #tpu.memory_space<vmem>>, %arg4: memref<64x1xf32, #tpu.memory_space<vmem>>) attributes {dimension_semantics = [#tpu.dimension_semantics<parallel>], iteration_bounds = array<i64: 2>, scalar_prefetch = 0 : i64, scratch_operands = 0 : i64, tpu.core_type = #tpu.core_type<tc>, window_params = [{transform_indices = @transform_0, window_bounds = array<i64: 64, 512>}, {pipeline_mode = #tpu.pipeline_mode<synchronous>, transform_indices = @transform_1, window_bounds = array<i64: 512, 1024>}, {pipeline_mode = #tpu.pipeline_mode<synchronous>, transform_indices = @transform_2, window_bounds = array<i64: 1, 1024>}, {transform_indices = @transform_3, window_bounds = array<i64: 64, 1>}]} {
    %c0 = arith.constant 0 : index
    %c0_0 = arith.constant 0 : index
    %0 = vector.load %arg1[%c0, %c0_0] : memref<64x512xf32, #tpu.memory_space<vmem>>, vector<64x512xf32>
    %1 = arith.truncf %0 : vector<64x512xf32> to vector<64x512xbf16>
    %c0_1 = arith.constant 0 : index
    %c0_2 = arith.constant 0 : index
    %2 = vector.load %arg2[%c0_1, %c0_2] : memref<512x1024xbf16, #tpu.memory_space<vmem>>, vector<512x1024xbf16>
    %cst = arith.constant dense<0.000000e+00> : vector<64x1024xf32>
    %3 = tpu.matmul %1, %2, %cst {dimension_numbers = #tpu.dot_dimension_numbers<[1], [0], [0], [1], [0, 0, 1, 1], [], []>} : vector<64x512xbf16>, vector<512x1024xbf16>, vector<64x1024xf32> -> vector<64x1024xf32>
    %cst_3 = arith.constant 4.000000e+00 : f32
    %4 = vector.broadcast %cst_3 : f32 to vector<64x1024xf32>
    %5 = arith.mulf %3, %4 : vector<64x1024xf32>
    %c0_4 = arith.constant 0 : index
    %c0_5 = arith.constant 0 : index
    %6 = vector.load %arg3[%c0_4, %c0_5] : memref<1x1024xf32, #tpu.memory_space<vmem>>, vector<1x1024xf32>
    %7 = vector.broadcast %6 : vector<1x1024xf32> to vector<64x1024xf32>
    %8 = arith.addf %5, %7 : vector<64x1024xf32>
    %cst_6 = arith.constant -1.000000e+01 : f32
    %cst_7 = arith.constant 1.000000e+01 : f32
    %9 = vector.broadcast %cst_6 : f32 to vector<64x1024xf32>
    %10 = arith.maximumf %9, %8 : vector<64x1024xf32>
    %11 = vector.broadcast %cst_7 : f32 to vector<64x1024xf32>
    %12 = arith.minimumf %11, %10 : vector<64x1024xf32>
    %cst_8 = arith.constant dense<0xFF800000> : vector<64xf32>
    %13 = vector.multi_reduction <maximumf>, %12, %cst_8 [1] : vector<64x1024xf32> to vector<64xf32>
    %14 = vector.shape_cast %13 : vector<64xf32> to vector<64x1xf32>
    %15 = vector.broadcast %14 : vector<64x1xf32> to vector<64x1024xf32>
    %16 = arith.subf %12, %15 : vector<64x1024xf32>
    %17 = math.exp %16 : vector<64x1024xf32>
    %cst_9 = arith.constant dense<0.000000e+00> : vector<64xf32>
    %18 = vector.multi_reduction <add>, %17, %cst_9 [1] : vector<64x1024xf32> to vector<64xf32>
    %19 = vector.shape_cast %18 : vector<64xf32> to vector<64x1xf32>
    %20 = math.log %19 : vector<64x1xf32>
    %21 = arith.addf %14, %20 : vector<64x1xf32>
    %cst_10 = arith.constant 0.000000e+00 : f32
    %22 = vector.broadcast %cst_10 : f32 to vector<64x1xf32>
    %23 = arith.maximumf %21, %22 : vector<64x1xf32>
    %24 = math.absf %21 : vector<64x1xf32>
    %cst_11 = arith.constant 0.000000e+00 : f32
    %25 = vector.broadcast %cst_11 : f32 to vector<64x1xf32>
    %26 = arith.subf %25, %24 : vector<64x1xf32>
    %27 = math.exp %26 : vector<64x1xf32>
    %28 = math.log1p %27 : vector<64x1xf32>
    %29 = arith.addf %23, %28 : vector<64x1xf32>
    %30 = math.tanh %29 : vector<64x1xf32>
    %31 = arith.mulf %21, %30 : vector<64x1xf32>
    %32 = arith.mulf %21, %31 : vector<64x1xf32>
    %c0_12 = arith.constant 0 : index
    %c0_13 = arith.constant 0 : index
    %33 = vector.load %arg4[%c0_12, %c0_13] : memref<64x1xf32, #tpu.memory_space<vmem>>, vector<64x1xf32>
    tpu.vector_store %arg4[%c0_12, %c0_13], %32 {strides = array<i32>} : memref<64x1xf32, #tpu.memory_space<vmem>>, vector<64x1xf32>,
    return
  }
  func.func @transform_0(%arg0: i32) -> (i32, i32) {
    %c0_i32 = arith.constant 0 : i32
    %c0_i32_0 = arith.constant 0 : i32
    return %arg0, %c0_i32 : i32, i32
  }
  func.func @transform_1(%arg0: i32) -> (i32, i32) {
    %c0_i32 = arith.constant 0 : i32
    %c0_i32_0 = arith.constant 0 : i32
    %c0_i32_1 = arith.constant 0 : i32
    return %c0_i32, %c0_i32_0 : i32, i32
  }
  func.func @transform_2(%arg0: i32) -> (i32, i32) {
    %c0_i32 = arith.constant 0 : i32
    %c0_i32_0 = arith.constant 0 : i32
    %c0_i32_1 = arith.constant 0 : i32
    return %c0_i32, %c0_i32_0 : i32, i32
  }
  func.func @transform_3(%arg0: i32) -> (i32, i32) {
    %c0_i32 = arith.constant 0 : i32
    %c0_i32_0 = arith.constant 0 : i32
    return %arg0, %c0_i32 : i32, i32
  }
}

</mosaic_0001>

<llo_original>
// kernel: tpu_custom_call.1
$region0: #{tpu_custom_call.1}
  #allocation0 [shape = 'u32[]', space=smem, size = 0x4, offset = 0x4, fixed_abs, tag = 'smem constant byte address 0x4 - core index']
  #allocation1 [shape = 'u32[72,128]{1,0:T(1,128)}', space=vmem, size = 0x9000, scoped, tag = 'internal scratch']
  %s0 = inlined_call_operand.hbm [shape: f32[128,512], index: 0, kind: input, shape index: {}]
  %s1 = inlined_call_operand.hbm [shape: bf16[512,1024], index: 1, kind: input, shape index: {}]
  %s2 = inlined_call_operand.hbm [shape: f32[1,1024], index: 2, kind: input, shape index: {}]
  %s3 = inlined_call_operand.vmem [shape: f32[128,1], index: 3, kind: output, shape index: {}]
  %s4 = sld [smem:[#allocation0]]
  $region57: #{tpu_custom_call.1} parent=0
    _
  %s6 = ssub.s32 1, %s4
  %s7 = scalar_select 0, %s6, %s4
  $region1: #{tpu_custom_call.1} parent=0
    #allocation2 [shape = 'u8[262144]{0}', space=vmem, size = 0x40000, scoped, tag = 'input window, operand 0']
    #allocation3 [shape = 's32[2]{0}', space=sflag, size = 0x8, scoped, tag = 'scoped memory for tpu_custom_call.1']
    #allocation4 [shape = 'u8[1048576]{0}', space=vmem, size = 0x100000, scoped, tag = 'input window, operand 1, single buffered']
    #allocation5 [shape = 's32[1]{0}', space=sflag, size = 0x4, scoped, tag = 'scoped memory for tpu_custom_call.1']
    #allocation6 [shape = 'u8[4096]{0}', space=vmem, size = 0x1000, scoped, tag = 'input window, operand 2, single buffered']
    %8 = vsyncpa [#allocation3], 0
    %s9 = scalar_lea.sflag [#allocation3], 1
    %10 = vsyncpa %s9, 0
    %11 = vsyncpa [#allocation5], 0
    loop: start=0, step=1, limit=4
    $region2: #{tpu_custom_call.1} parent=1 // loop_pre_header
      _
    $region3: #{tpu_custom_call.1} parent=1 // loop_header
      %s13 = sphi 0, %s17
      %p14 = scmp.ge.s32.totalorder %s13, 4
      %s23 = sphi 0, %s25
      %s26 = sphi 0, %s23
      %s27 = sphi 0, %s26
      %s43 = sphi 0, %s27
      %s47 = sphi 0, %s47
      %s49 = sphi 0, %s47
      %s50 = sphi 0, %s49
      %s64 = sphi 0, %s50
      %s68 = sphi 0, %s68
      %s70 = sphi 0, %s68
      %s71 = sphi 0, %s70
      %s85 = sphi 0, %s71
      %s91 = sphi 0, %s93
      %s94 = sphi 0, %s91
      %s95 = sphi 0, %s94
      %s111 = sphi 0, %s95
    $region4: #{tpu_custom_call.1} parent=1 // loop_header_branch
      %16 = sbr.rel (%p14) target = $region8
    $region5: #{tpu_custom_call.1} parent=1 // loop_body
      %s18 = ssub.s32 %s13, 1
      %s19 = ssub.s32 %s13, 2
      %s20 = sadd.s32 %s13, 1
      %s21 = ssub.s32 %s13, %s20
      %p22 = scmp.eq.s32.totalorder %s21, 0
      %s24 = sadd.s32 %s23, 1
      %s25 = scalar_select %p22, %s23, %s24
      %p28 = pneg %p22
      %p29 = scmp.eq.s32.totalorder %s13, 1
      %p30 = por %p28, %p29
      %p31 = scmp.ne.s32.totalorder %s23, %s26
      %p32 = scmp.eq.s32.totalorder %s13, 0
      %p33 = por %p31, %p32
      %p34 = scmp.ne.s32.totalorder %s23, %s26
      %p35 = scmp.eq.s32.totalorder %s18, 1
      %p36 = por %p34, %p35
      %p37 = scmp.ne.s32.totalorder %s26, %s27
      %p38 = scmp.eq.s32.totalorder %s18, 0
      %p39 = por %p37, %p38
      %p40 = scmp.ne.s32.totalorder %s26, %s27
      %p41 = scmp.eq.s32.totalorder %s19, 1
      %p42 = por %p40, %p41
      %p44 = scmp.ne.s32.totalorder %s27, %s43
      %p45 = scmp.eq.s32.totalorder %s19, 0
      %p46 = por %p44, %p45
      %s48 = sadd.s32 %s47, 1
      %p51 = scmp.eq.s32.totalorder %s13, 1
      %p52 = scmp.ne.s32.totalorder %s47, %s49
      %p53 = scmp.eq.s32.totalorder %s13, 0
      %p54 = por %p52, %p53
      %p55 = scmp.ne.s32.totalorder %s47, %s49
      %p56 = scmp.eq.s32.totalorder %s18, 1
      %p57 = por %p55, %p56
      %p58 = scmp.ne.s32.totalorder %s49, %s50
      %p59 = scmp.eq.s32.totalorder %s18, 0
      %p60 = por %p58, %p59
      %p61 = scmp.ne.s32.totalorder %s49, %s50
      %p62 = scmp.eq.s32.totalorder %s19, 1
      %p63 = por %p61, %p62
      %p65 = scmp.ne.s32.totalorder %s50, %s64
      %p66 = scmp.eq.s32.totalorder %s19, 0
      %p67 = por %p65, %p66
      %s69 = sadd.s32 %s68, 1
      %p72 = scmp.eq.s32.totalorder %s13, 1
      %p73 = scmp.ne.s32.totalorder %s68, %s70
      %p74 = scmp.eq.s32.totalorder %s13, 0
      %p75 = por %p73, %p74
      %p76 = scmp.ne.s32.totalorder %s68, %s70
      %p77 = scmp.eq.s32.totalorder %s18, 1
      %p78 = por %p76, %p77
      %p79 = scmp.ne.s32.totalorder %s70, %s71
      %p80 = scmp.eq.s32.totalorder %s18, 0
      %p81 = por %p79, %p80
      %p82 = scmp.ne.s32.totalorder %s70, %s71
      %p83 = scmp.eq.s32.totalorder %s19, 1
      %p84 = por %p82, %p83
      %p86 = scmp.ne.s32.totalorder %s71, %s85
      %p87 = scmp.eq.s32.totalorder %s19, 0
      %p88 = por %p86, %p87
      %s89 = ssub.s32 %s13, %s20
      %p90 = scmp.eq.s32.totalorder %s89, 0
      %s92 = sadd.s32 %s91, 1
      %s93 = scalar_select %p90, %s91, %s92
      %p96 = pneg %p90
      %p97 = scmp.eq.s32.totalorder %s13, 1
      %p98 = por %p96, %p97
      %p99 = scmp.ne.s32.totalorder %s91, %s94
      %p100 = scmp.eq.s32.totalorder %s13, 0
      %p101 = por %p99, %p100
      %p102 = scmp.ne.s32.totalorder %s91, %s94
      %p103 = scmp.eq.s32.totalorder %s18, 1
      %p104 = por %p102, %p103
      %p105 = scmp.ne.s32.totalorder %s94, %s95
      %p106 = scmp.eq.s32.totalorder %s18, 0
      %p107 = por %p105, %p106
      %p108 = scmp.ne.s32.totalorder %s94, %s95
      %p109 = scmp.eq.s32.totalorder %s19, 1
      %p110 = por %p108, %p109
      %p112 = scmp.ne.s32.totalorder %s95, %s111
      %p113 = scmp.eq.s32.totalorder %s19, 0
      %p114 = por %p112, %p113
      %p115 = scmp.le.s32.totalorder 1, %s13
      %p116 = scmp.lt.s32.totalorder %s13, 3
      %p117 = pnand %p115, %p116
      %p118 = pneg %p117
      // Predicated region
      $region9: #{tpu_custom_call.1} parent=5 // pred_check
        _
      $region10: #{tpu_custom_call.1} parent=5 // pred_check_branch
        %120 = sbr.rel (%p117) target = $region12
      $region11: #{tpu_custom_call.1} parent=5 // pred_region
        %s121 = ssub.s32 %s13, 1
        // Predicated region
        $region13: #{tpu_custom_call.1} parent=11 // pred_check
          %p122 = pneg %p60
        $region14: #{tpu_custom_call.1} parent=11 // pred_check_branch
          %124 = sbr.rel (%p122) target = $region16
        $region15: #{tpu_custom_call.1} parent=11 // pred_region
          %126 = vsyncadd [#allocation5], 0
          %s127 = sshll.u32 %s1, 4
          %s128 = int_to_ptr.hbm [resolvable:$true] %s127
          %s129 = sshll.u32 [#allocation4], 4
          %s130 = int_to_ptr.vmem [resolvable:$true] %s129
          %135 = dma.hbm_to_vmem [thread:$0]  %s128, 32768, %s130, [#allocation5], 512, 512, 32
        $region16: #{tpu_custom_call.1} parent=11 // pred_fallthru
          _
        // Predicated region
        $region17: #{tpu_custom_call.1} parent=11 // pred_check
          %p136 = pneg %p81
        $region18: #{tpu_custom_call.1} parent=11 // pred_check_branch
          %138 = sbr.rel (%p136) target = $region20
        $region19: #{tpu_custom_call.1} parent=11 // pred_region
          %140 = vsyncadd [#allocation5], 0
          %s142 = sshll.u32 %s2, 4
          %s143 = int_to_ptr.hbm [resolvable:$true] %s142
          %s144 = sshll.u32 [#allocation6], 4
          %s145 = int_to_ptr.vmem [resolvable:$true] %s144
          %147 = dma.hbm_to_vmem [thread:$0]  %s143, 128, %s145, [#allocation5]
        $region20: #{tpu_custom_call.1} parent=11 // pred_fallthru
          _
      $region12: #{tpu_custom_call.1} parent=5 // pred_fallthru
        _
      %p148 = scmp.lt.s32.totalorder %s13, 2
      // Predicated region
      $region21: #{tpu_custom_call.1} parent=5 // pred_check
        %p149 = pneg %p148
      $region22: #{tpu_custom_call.1} parent=5 // pred_check_branch
        %151 = sbr.rel (%p149) target = $region24
      $region23: #{tpu_custom_call.1} parent=5 // pred_region
        // Predicated region
        $region25: #{tpu_custom_call.1} parent=23 // pred_check
          %p152 = pneg %p33
        $region26: #{tpu_custom_call.1} parent=23 // pred_check_branch
          %154 = sbr.rel (%p152) target = $region28
        $region27: #{tpu_custom_call.1} parent=23 // pred_region
          %s155 = sand.u32 %s23, 1
          %s156 = scalar_lea.sflag [#allocation3], %s155
          %s157 = sand.u32 %s23, 1
          %s158 = smul.addr %s157, 256
          %s159 = scalar_lea.vmem [#allocation2], %s158
          %s160 = smul.u32 8, %s13
          %162 = vsyncadd %s156, 0
          %s163 = smul.addr %s160, 4
          %s164 = smul.addr %s163, 8
          %s165 = scalar_lea.hbm %s0, %s164
          %s166 = sshll.u32 %s165, 4
          %s167 = int_to_ptr.hbm [resolvable:$true] %s166
          %s168 = sshll.u32 %s159, 4
          %s169 = int_to_ptr.vmem [resolvable:$true] %s168
          %174 = dma.hbm_to_vmem [thread:$0]  %s167, 4096, %s169, %s156, 512, 512, 32
        $region28: #{tpu_custom_call.1} parent=23 // pred_fallthru
          _
      $region24: #{tpu_custom_call.1} parent=5 // pred_fallthru
        _
      %p175 = scmp.le.s32.totalorder 1, %s13
      %p176 = scmp.lt.s32.totalorder %s13, 3
      %p177 = pnand %p175, %p176
      %p178 = pneg %p177
      // Predicated region
      $region29: #{tpu_custom_call.1} parent=5 // pred_check
        _
      $region30: #{tpu_custom_call.1} parent=5 // pred_check_branch
        %180 = sbr.rel (%p177) target = $region32
      $region31: #{tpu_custom_call.1} parent=5 // pred_region
        %s181 = ssub.s32 %s13, 1
        %s182 = sand.u32 %s26, 1
        %s183 = scalar_lea.sflag [#allocation3], %s182
        %s184 = sand.u32 %s26, 1
        %s185 = smul.addr %s184, 256
        %s186 = scalar_lea.vmem [#allocation2], %s185
        // Predicated region
        $region33: #{tpu_custom_call.1} parent=31 // pred_check
          %p187 = pneg %p39
        $region34: #{tpu_custom_call.1} parent=31 // pred_check_branch
          %189 = sbr.rel (%p187) target = $region36
        $region35: #{tpu_custom_call.1} parent=31 // pred_region
          %191 = dma.done %s183, 4096
        $region36: #{tpu_custom_call.1} parent=31 // pred_fallthru
          _
        // Predicated region
        $region37: #{tpu_custom_call.1} parent=31 // pred_check
          %p192 = pneg %p60
        $region38: #{tpu_custom_call.1} parent=31 // pred_check_branch
          %194 = sbr.rel (%p192) target = $region40
        $region39: #{tpu_custom_call.1} parent=31 // pred_region
          %196 = dma.done [#allocation5], 32768
        $region40: #{tpu_custom_call.1} parent=31 // pred_fallthru
          _
        // Predicated region
        $region41: #{tpu_custom_call.1} parent=31 // pred_check
          %p197 = pneg %p81
        $region42: #{tpu_custom_call.1} parent=31 // pred_check_branch
          %199 = sbr.rel (%p197) target = $region44
        $region43: #{tpu_custom_call.1} parent=31 // pred_region
          %201 = dma.done [#allocation5], 128
        $region44: #{tpu_custom_call.1} parent=31 // pred_fallthru
          _
        %s202 = sand.u32 %s26, 1
        %s203 = scalar_lea.sflag [#allocation3], %s202
        %s204 = sand.u32 %s26, 1
        %s205 = smul.addr %s204, 256
        %s206 = scalar_lea.vmem [#allocation2], %s205
        %p207 = pneg %p39
        %p208 = pneg %p36
        %p209 = pneg %p60
        %p210 = pneg %p57
        %p211 = pneg %p81
        %p212 = pneg %p78
        %p213 = pneg %p107
        %p214 = pneg %p104
        %s215 = smul.u32 8, %s18
        %p216 = scmp.lt.s32.totalorder %s215, 15
        %s217 = scalar_select %p216, %s215, 15
        %s218 = smul.addr %s217, 8
        %s219 = scalar_lea.vmem %s3, %s218
        %s220 = smul.u32 8, %s18
        %s221 = smul.u32 8, %s18
        %p222 = scmp.lt.s32.totalorder %s221, 15
        %s223 = scalar_select %p222, %s221, 15
        %s224 = smul.addr %s223, 8
        %s225 = scalar_lea.vmem %s3, %s224
        %s226 = smul.u32 8, %s18
        %v227 = vld [vmem:[%s186] sm:$0xff]
        %v228 = vld [vmem:[%s186 + $0x8] sm:$0xff]
        %v229 = vld [vmem:[%s186 + $0x10] sm:$0xff]
        %v230 = vld [vmem:[%s186 + $0x18] sm:$0xff]
        %v231 = vld [vmem:[%s186 + $0x20] sm:$0xff]
        %v232 = vld [vmem:[%s186 + $0x28] sm:$0xff]
        %v233 = vld [vmem:[%s186 + $0x30] sm:$0xff]
        %v234 = vld [vmem:[%s186 + $0x38] sm:$0xff]
        %v235 = vld [vmem:[%s186 + $0x40] sm:$0xff]
        %v236 = vld [vmem:[%s186 + $0x48] sm:$0xff]
        %v237 = vld [vmem:[%s186 + $0x50] sm:$0xff]
        %v238 = vld [vmem:[%s186 + $0x58] sm:$0xff]
        %v239 = vld [vmem:[%s186 + $0x60] sm:$0xff]
        %v240 = vld [vmem:[%s186 + $0x68] sm:$0xff]
        %v241 = vld [vmem:[%s186 + $0x70] sm:$0xff]
        %v242 = vld [vmem:[%s186 + $0x78] sm:$0xff]
        %v243 = vld [vmem:[%s186 + $0x80] sm:$0xff]
        %v244 = vld [vmem:[%s186 + $0x88] sm:$0xff]
        %v245 = vld [vmem:[%s186 + $0x90] sm:$0xff]
        %v246 = vld [vmem:[%s186 + $0x98] sm:$0xff]
        %v247 = vld [vmem:[%s186 + $0xa0] sm:$0xff]
        %v248 = vld [vmem:[%s186 + $0xa8] sm:$0xff]
        %v249 = vld [vmem:[%s186 + $0xb0] sm:$0xff]
        %v250 = vld [vmem:[%s186 + $0xb8] sm:$0xff]
        %v251 = vld [vmem:[%s186 + $0xc0] sm:$0xff]
        %v252 = vld [vmem:[%s186 + $0xc8] sm:$0xff]
        %v253 = vld [vmem:[%s186 + $0xd0] sm:$0xff]
        %v254 = vld [vmem:[%s186 + $0xd8] sm:$0xff]
        %v255 = vld [vmem:[%s186 + $0xe0] sm:$0xff]
        %v256 = vld [vmem:[%s186 + $0xe8] sm:$0xff]
        %v257 = vld [vmem:[%s186 + $0xf0] sm:$0xff]
        %v258 = vld [vmem:[%s186 + $0xf8] sm:$0xff]
        %v259 = vpack.c.bf16 %v231, %v227
        %v260 = vpack.c.bf16 %v232, %v228
        %v261 = vpack.c.bf16 %v233, %v229
        %v262 = vpack.c.bf16 %v234, %v230
        %v263 = vpack.c.bf16 %v239, %v235
        %v264 = vpack.c.bf16 %v240, %v236
        %v265 = vpack.c.bf16 %v241, %v237
        %v266 = vpack.c.bf16 %v242, %v238
        %v267 = vpack.c.bf16 %v247, %v243
        %v268 = vpack.c.bf16 %v248, %v244
        %v269 = vpack.c.bf16 %v249, %v245
        %v270 = vpack.c.bf16 %v250, %v246
        %v271 = vpack.c.bf16 %v255, %v251
        %v272 = vpack.c.bf16 %v256, %v252
        %v273 = vpack.c.bf16 %v257, %v253
        %v274 = vpack.c.bf16 %v258, %v254
        %v275 = vld [vmem:[#allocation4] sm:$0xff]
        %v276 = vld [vmem:[#allocation4 + $0x8] sm:$0xff]
        %v277 = vld [vmem:[#allocation4 + $0x10] sm:$0xff]
        %v278 = vld [vmem:[#allocation4 + $0x18] sm:$0xff]
        %v279 = vld [vmem:[#allocation4 + $0x20] sm:$0xff]
        %v280 = vld [vmem:[#allocation4 + $0x28] sm:$0xff]
        %v281 = vld [vmem:[#allocation4 + $0x30] sm:$0xff]
        %v282 = vld [vmem:[#allocation4 + $0x38] sm:$0xff]
        %v283 = vld [vmem:[#allocation4 + $0x40] sm:$0xff]
        %v284 = vld [vmem:[#allocation4 + $0x48] sm:$0xff]
        %v285 = vld [vmem:[#allocation4 + $0x50] sm:$0xff]
        %v286 = vld [vmem:[#allocation4 + $0x58] sm:$0xff]
        %v287 = vld [vmem:[#allocation4 + $0x60] sm:$0xff]
        %v288 = vld [vmem:[#allocation4 + $0x68] sm:$0xff]
        %v289 = vld [vmem:[#allocation4 + $0x70] sm:$0xff]
        %v290 = vld [vmem:[#allocation4 + $0x78] sm:$0xff]
        %v291 = vld [vmem:[#allocation4 + $0x80] sm:$0xff]
        %v292 = vld [vmem:[#allocation4 + $0x88] sm:$0xff]
        %v293 = vld [vmem:[#allocation4 + $0x90] sm:$0xff]
        %v294 = vld [vmem:[#allocation4 + $0x98] sm:$0xff]
        %v295 = vld [vmem:[#allocation4 + $0xa0] sm:$0xff]
        %v296 = vld [vmem:[#allocation4 + $0xa8] sm:$0xff]
        %v297 = vld [vmem:[#allocation4 + $0xb0] sm:$0xff]
        %v298 = vld [vmem:[#allocation4 + $0xb8] sm:$0xff]
        %v299 = vld [vmem:[#allocation4 + $0xc0] sm:$0xff]
        %v300 = vld [vmem:[#allocation4 + $0xc8] sm:$0xff]
        %v301 = vld [vmem:[#allocation4 + $0xd0] sm:$0xff]
        %v302 = vld [vmem:[#allocation4 + $0xd8] sm:$0xff]
        %v303 = vld [vmem:[#allocation4 + $0xe0] sm:$0xff]
        %v304 = vld [vmem:[#allocation4 + $0xe8] sm:$0xff]
        %v305 = vld [vmem:[#allocation4 + $0xf0] sm:$0xff]
        %v306 = vld [vmem:[#allocation4 + $0xf8] sm:$0xff]
        %v307 = vld [vmem:[#allocation4 + $0x100] sm:$0xff]
        %v308 = vld [vmem:[#allocation4 + $0x108] sm:$0xff]
        %v309 = vld [vmem:[#allocation4 + $0x110] sm:$0xff]
        %v310 = vld [vmem:[#allocation4 + $0x118] sm:$0xff]
        %v311 = vld [vmem:[#allocation4 + $0x120] sm:$0xff]
        %v312 = vld [vmem:[#allocation4 + $0x128] sm:$0xff]
        %v313 = vld [vmem:[#allocation4 + $0x130] sm:$0xff]
        %v314 = vld [vmem:[#allocation4 + $0x138] sm:$0xff]
        %v315 = vld [vmem:[#allocation4 + $0x140] sm:$0xff]
        %v316 = vld [vmem:[#allocation4 + $0x148] sm:$0xff]
        %v317 = vld [vmem:[#allocation4 + $0x150] sm:$0xff]
        %v318 = vld [vmem:[#allocation4 + $0x158] sm:$0xff]
        %v319 = vld [vmem:[#allocation4 + $0x160] sm:$0xff]
        %v320 = vld [vmem:[#allocation4 + $0x168] sm:$0xff]
        %v321 = vld [vmem:[#allocation4 + $0x170] sm:$0xff]
        %v322 = vld [vmem:[#allocation4 + $0x178] sm:$0xff]
        %v323 = vld [vmem:[#allocation4 + $0x180] sm:$0xff]
        %v324 = vld [vmem:[#allocation4 + $0x188] sm:$0xff]
        %v325 = vld [vmem:[#allocation4 + $0x190] sm:$0xff]
        %v326 = vld [vmem:[#allocation4 + $0x198] sm:$0xff]
        %v327 = vld [vmem:[#allocation4 + $0x1a0] sm:$0xff]
        %v328 = vld [vmem:[#allocation4 + $0x1a8] sm:$0xff]
        %v329 = vld [vmem:[#allocation4 + $0x1b0] sm:$0xff]
        %v330 = vld [vmem:[#allocation4 + $0x1b8] sm:$0xff]
        %v331 = vld [vmem:[#allocation4 + $0x1c0] sm:$0xff]
        %v332 = vld [vmem:[#allocation4 + $0x1c8] sm:$0xff]
        %v333 = vld [vmem:[#allocation4 + $0x1d0] sm:$0xff]
        %v334 = vld [vmem:[#allocation4 + $0x1d8] sm:$0xff]
        %v335 = vld [vmem:[#allocation4 + $0x1e0] sm:$0xff]
        %v336 = vld [vmem:[#allocation4 + $0x1e8] sm:$0xff]
        %v337 = vld [vmem:[#allocation4 + $0x1f0] sm:$0xff]
        %v338 = vld [vmem:[#allocation4 + $0x1f8] sm:$0xff]
        %v339 = vld [vmem:[#allocation4 + $0x200] sm:$0xff]
        %v340 = vld [vmem:[#allocation4 + $0x208] sm:$0xff]
        %v341 = vld [vmem:[#allocation4 + $0x210] sm:$0xff]
        %v342 = vld [vmem:[#allocation4 + $0x218] sm:$0xff]
        %v343 = vld [vmem:[#allocation4 + $0x220] sm:$0xff]
        %v344 = vld [vmem:[#allocation4 + $0x228] sm:$0xff]
        %v345 = vld [vmem:[#allocation4 + $0x230] sm:$0xff]
        %v346 = vld [vmem:[#allocation4 + $0x238] sm:$0xff]
        %v347 = vld [vmem:[#allocation4 + $0x240] sm:$0xff]
        %v348 = vld [vmem:[#allocation4 + $0x248] sm:$0xff]
        %v349 = vld [vmem:[#allocation4 + $0x250] sm:$0xff]
        %v350 = vld [vmem:[#allocation4 + $0x258] sm:$0xff]
        %v351 = vld [vmem:[#allocation4 + $0x260] sm:$0xff]
        %v352 = vld [vmem:[#allocation4 + $0x268] sm:$0xff]
        %v353 = vld [vmem:[#allocation4 + $0x270] sm:$0xff]
        %v354 = vld [vmem:[#allocation4 + $0x278] sm:$0xff]
        %v355 = vld [vmem:[#allocation4 + $0x280] sm:$0xff]
        %v356 = vld [vmem:[#allocation4 + $0x288] sm:$0xff]
        %v357 = vld [vmem:[#allocation4 + $0x290] sm:$0xff]
        %v358 = vld [vmem:[#allocation4 + $0x298] sm:$0xff]
        %v359 = vld [vmem:[#allocation4 + $0x2a0] sm:$0xff]
        %v360 = vld [vmem:[#allocation4 + $0x2a8] sm:$0xff]
        %v361 = vld [vmem:[#allocation4 + $0x2b0] sm:$0xff]
        %v362 = vld [vmem:[#allocation4 + $0x2b8] sm:$0xff]
        %v363 = vld [vmem:[#allocation4 + $0x2c0] sm:$0xff]
        %v364 = vld [vmem:[#allocation4 + $0x2c8] sm:$0xff]
        %v365 = vld [vmem:[#allocation4 + $0x2d0] sm:$0xff]
        %v366 = vld [vmem:[#allocation4 + $0x2d8] sm:$0xff]
        %v367 = vld [vmem:[#allocation4 + $0x2e0] sm:$0xff]
        %v368 = vld [vmem:[#allocation4 + $0x2e8] sm:$0xff]
        %v369 = vld [vmem:[#allocation4 + $0x2f0] sm:$0xff]
        %v370 = vld [vmem:[#allocation4 + $0x2f8] sm:$0xff]
        %v371 = vld [vmem:[#allocation4 + $0x300] sm:$0xff]
        %v372 = vld [vmem:[#allocation4 + $0x308] sm:$0xff]
        %v373 = vld [vmem:[#allocation4 + $0x310] sm:$0xff]
        %v374 = vld [vmem:[#allocation4 + $0x318] sm:$0xff]
        %v375 = vld [vmem:[#allocation4 + $0x320] sm:$0xff]
        %v376 = vld [vmem:[#allocation4 + $0x328] sm:$0xff]
        %v377 = vld [vmem:[#allocation4 + $0x330] sm:$0xff]
        %v378 = vld [vmem:[#allocation4 + $0x338] sm:$0xff]
        %v379 = vld [vmem:[#allocation4 + $0x340] sm:$0xff]
        %v380 = vld [vmem:[#allocation4 + $0x348] sm:$0xff]
        %v381 = vld [vmem:[#allocation4 + $0x350] sm:$0xff]
        %v382 = vld [vmem:[#allocation4 + $0x358] sm:$0xff]
        %v383 = vld [vmem:[#allocation4 + $0x360] sm:$0xff]
        %v384 = vld [vmem:[#allocation4 + $0x368] sm:$0xff]
        %v385 = vld [vmem:[#allocation4 + $0x370] sm:$0xff]
        %v386 = vld [vmem:[#allocation4 + $0x378] sm:$0xff]
        %v387 = vld [vmem:[#allocation4 + $0x380] sm:$0xff]
        %v388 = vld [vmem:[#allocation4 + $0x388] sm:$0xff]
        %v389 = vld [vmem:[#allocation4 + $0x390] sm:$0xff]
        %v390 = vld [vmem:[#allocation4 + $0x398] sm:$0xff]
        %v391 = vld [vmem:[#allocation4 + $0x3a0] sm:$0xff]
        %v392 = vld [vmem:[#allocation4 + $0x3a8] sm:$0xff]
        %v393 = vld [vmem:[#allocation4 + $0x3b0] sm:$0xff]
        %v394 = vld [vmem:[#allocation4 + $0x3b8] sm:$0xff]
        %v395 = vld [vmem:[#allocation4 + $0x3c0] sm:$0xff]
        %v396 = vld [vmem:[#allocation4 + $0x3c8] sm:$0xff]
        %v397 = vld [vmem:[#allocation4 + $0x3d0] sm:$0xff]
        %v398 = vld [vmem:[#allocation4 + $0x3d8] sm:$0xff]
        %v399 = vld [vmem:[#allocation4 + $0x3e0] sm:$0xff]
        %v400 = vld [vmem:[#allocation4 + $0x3e8] sm:$0xff]
        %v401 = vld [vmem:[#allocation4 + $0x3f0] sm:$0xff]
        %v402 = vld [vmem:[#allocation4 + $0x3f8] sm:$0xff]
        %v403 = vld [vmem:[#allocation4 + $0x400] sm:$0xff]
        %v404 = vld [vmem:[#allocation4 + $0x408] sm:$0xff]
        %v405 = vld [vmem:[#allocation4 + $0x410] sm:$0xff]
        %v406 = vld [vmem:[#allocation4 + $0x418] sm:$0xff]
        %v407 = vld [vmem:[#allocation4 + $0x420] sm:$0xff]
        %v408 = vld [vmem:[#allocation4 + $0x428] sm:$0xff]
        %v409 = vld [vmem:[#allocation4 + $0x430] sm:$0xff]
        %v410 = vld [vmem:[#allocation4 + $0x438] sm:$0xff]
        %v411 = vld [vmem:[#allocation4 + $0x440] sm:$0xff]
        %v412 = vld [vmem:[#allocation4 + $0x448] sm:$0xff]
        %v413 = vld [vmem:[#allocation4 + $0x450] sm:$0xff]
        %v414 = vld [vmem:[#allocation4 + $0x458] sm:$0xff]
        %v415 = vld [vmem:[#allocation4 + $0x460] sm:$0xff]
        %v416 = vld [vmem:[#allocation4 + $0x468] sm:$0xff]
        %v417 = vld [vmem:[#allocation4 + $0x470] sm:$0xff]
        %v418 = vld [vmem:[#allocation4 + $0x478] sm:$0xff]
        %v419 = vld [vmem:[#allocation4 + $0x480] sm:$0xff]
        %v420 = vld [vmem:[#allocation4 + $0x488] sm:$0xff]
        %v421 = vld [vmem:[#allocation4 + $0x490] sm:$0xff]
        %v422 = vld [vmem:[#allocation4 + $0x498] sm:$0xff]
        %v423 = vld [vmem:[#allocation4 + $0x4a0] sm:$0xff]
        %v424 = vld [vmem:[#allocation4 + $0x4a8] sm:$0xff]
        %v425 = vld [vmem:[#allocation4 + $0x4b0] sm:$0xff]
        %v426 = vld [vmem:[#allocation4 + $0x4b8] sm:$0xff]
        %v427 = vld [vmem:[#allocation4 + $0x4c0] sm:$0xff]
        %v428 = vld [vmem:[#allocation4 + $0x4c8] sm:$0xff]
        %v429 = vld [vmem:[#allocation4 + $0x4d0] sm:$0xff]
        %v430 = vld [vmem:[#allocation4 + $0x4d8] sm:$0xff]
        %v431 = vld [vmem:[#allocation4 + $0x4e0] sm:$0xff]
        %v432 = vld [vmem:[#allocation4 + $0x4e8] sm:$0xff]
        %v433 = vld [vmem:[#allocation4 + $0x4f0] sm:$0xff]
        %v434 = vld [vmem:[#allocation4 + $0x4f8] sm:$0xff]
        %v435 = vld [vmem:[#allocation4 + $0x500] sm:$0xff]
        %v436 = vld [vmem:[#allocation4 + $0x508] sm:$0xff]
        %v437 = vld [vmem:[#allocation4 + $0x510] sm:$0xff]
        %v438 = vld [vmem:[#allocation4 + $0x518] sm:$0xff]
        %v439 = vld [vmem:[#allocation4 + $0x520] sm:$0xff]
        %v440 = vld [vmem:[#allocation4 + $0x528] sm:$0xff]
        %v441 = vld [vmem:[#allocation4 + $0x530] sm:$0xff]
        %v442 = vld [vmem:[#allocation4 + $0x538] sm:$0xff]
        %v443 = vld [vmem:[#allocation4 + $0x540] sm:$0xff]
        %v444 = vld [vmem:[#allocation4 + $0x548] sm:$0xff]
        %v445 = vld [vmem:[#allocation4 + $0x550] sm:$0xff]
        %v446 = vld [vmem:[#allocation4 + $0x558] sm:$0xff]
        %v447 = vld [vmem:[#allocation4 + $0x560] sm:$0xff]
        %v448 = vld [vmem:[#allocation4 + $0x568] sm:$0xff]
        %v449 = vld [vmem:[#allocation4 + $0x570] sm:$0xff]
        %v450 = vld [vmem:[#allocation4 + $0x578] sm:$0xff]
        %v451 = vld [vmem:[#allocation4 + $0x580] sm:$0xff]
        %v452 = vld [vmem:[#allocation4 + $0x588] sm:$0xff]
        %v453 = vld [vmem:[#allocation4 + $0x590] sm:$0xff]
        %v454 = vld [vmem:[#allocation4 + $0x598] sm:$0xff]
        %v455 = vld [vmem:[#allocation4 + $0x5a0] sm:$0xff]
        %v456 = vld [vmem:[#allocation4 + $0x5a8] sm:$0xff]
        %v457 = vld [vmem:[#allocation4 + $0x5b0] sm:$0xff]
        %v458 = vld [vmem:[#allocation4 + $0x5b8] sm:$0xff]
        %v459 = vld [vmem:[#allocation4 + $0x5c0] sm:$0xff]
        %v460 = vld [vmem:[#allocation4 + $0x5c8] sm:$0xff]
        %v461 = vld [vmem:[#allocation4 + $0x5d0] sm:$0xff]
        %v462 = vld [vmem:[#allocation4 + $0x5d8] sm:$0xff]
        %v463 = vld [vmem:[#allocation4 + $0x5e0] sm:$0xff]
        %v464 = vld [vmem:[#allocation4 + $0x5e8] sm:$0xff]
        %v465 = vld [vmem:[#allocation4 + $0x5f0] sm:$0xff]
        %v466 = vld [vmem:[#allocation4 + $0x5f8] sm:$0xff]
        %v467 = vld [vmem:[#allocation4 + $0x600] sm:$0xff]
        %v468 = vld [vmem:[#allocation4 + $0x608] sm:$0xff]
        %v469 = vld [vmem:[#allocation4 + $0x610] sm:$0xff]
        %v470 = vld [vmem:[#allocation4 + $0x618] sm:$0xff]
        %v471 = vld [vmem:[#allocation4 + $0x620] sm:$0xff]
        %v472 = vld [vmem:[#allocation4 + $0x628] sm:$0xff]
        %v473 = vld [vmem:[#allocation4 + $0x630] sm:$0xff]
        %v474 = vld [vmem:[#allocation4 + $0x638] sm:$0xff]
        %v475 = vld [vmem:[#allocation4 + $0x640] sm:$0xff]
        %v476 = vld [vmem:[#allocation4 + $0x648] sm:$0xff]
        %v477 = vld [vmem:[#allocation4 + $0x650] sm:$0xff]
        %v478 = vld [vmem:[#allocation4 + $0x658] sm:$0xff]
        %v479 = vld [vmem:[#allocation4 + $0x660] sm:$0xff]
        %v480 = vld [vmem:[#allocation4 + $0x668] sm:$0xff]
        %v481 = vld [vmem:[#allocation4 + $0x670] sm:$0xff]
        %v482 = vld [vmem:[#allocation4 + $0x678] sm:$0xff]
        %v483 = vld [vmem:[#allocation4 + $0x680] sm:$0xff]
        %v484 = vld [vmem:[#allocation4 + $0x688] sm:$0xff]
        %v485 = vld [vmem:[#allocation4 + $0x690] sm:$0xff]
        %v486 = vld [vmem:[#allocation4 + $0x698] sm:$0xff]
        %v487 = vld [vmem:[#allocation4 + $0x6a0] sm:$0xff]
        %v488 = vld [vmem:[#allocation4 + $0x6a8] sm:$0xff]
        %v489 = vld [vmem:[#allocation4 + $0x6b0] sm:$0xff]
        %v490 = vld [vmem:[#allocation4 + $0x6b8] sm:$0xff]
        %v491 = vld [vmem:[#allocation4 + $0x6c0] sm:$0xff]
        %v492 = vld [vmem:[#allocation4 + $0x6c8] sm:$0xff]
        %v493 = vld [vmem:[#allocation4 + $0x6d0] sm:$0xff]
        %v494 = vld [vmem:[#allocation4 + $0x6d8] sm:$0xff]
        %v495 = vld [vmem:[#allocation4 + $0x6e0] sm:$0xff]
        %v496 = vld [vmem:[#allocation4 + $0x6e8] sm:$0xff]
        %v497 = vld [vmem:[#allocation4 + $0x6f0] sm:$0xff]
        %v498 = vld [vmem:[#allocation4 + $0x6f8] sm:$0xff]
        %v499 = vld [vmem:[#allocation4 + $0x700] sm:$0xff]
        %v500 = vld [vmem:[#allocation4 + $0x708] sm:$0xff]
        %v501 = vld [vmem:[#allocation4 + $0x710] sm:$0xff]
        %v502 = vld [vmem:[#allocation4 + $0x718] sm:$0xff]
        %v503 = vld [vmem:[#allocation4 + $0x720] sm:$0xff]
        %v504 = vld [vmem:[#allocation4 + $0x728] sm:$0xff]
        %v505 = vld [vmem:[#allocation4 + $0x730] sm:$0xff]
        %v506 = vld [vmem:[#allocation4 + $0x738] sm:$0xff]
        %v507 = vld [vmem:[#allocation4 + $0x740] sm:$0xff]
        %v508 = vld [vmem:[#allocation4 + $0x748] sm:$0xff]
        %v509 = vld [vmem:[#allocation4 + $0x750] sm:$0xff]
        %v510 = vld [vmem:[#allocation4 + $0x758] sm:$0xff]
        %v511 = vld [vmem:[#allocation4 + $0x760] sm:$0xff]
        %v512 = vld [vmem:[#allocation4 + $0x768] sm:$0xff]
        %v513 = vld [vmem:[#allocation4 + $0x770] sm:$0xff]
        %v514 = vld [vmem:[#allocation4 + $0x778] sm:$0xff]
        %v515 = vld [vmem:[#allocation4 + $0x780] sm:$0xff]
        %v516 = vld [vmem:[#allocation4 + $0x788] sm:$0xff]
        %v517 = vld [vmem:[#allocation4 + $0x790] sm:$0xff]
        %v518 = vld [vmem:[#allocation4 + $0x798] sm:$0xff]
        %v519 = vld [vmem:[#allocation4 + $0x7a0] sm:$0xff]
        %v520 = vld [vmem:[#allocation4 + $0x7a8] sm:$0xff]
        %v521 = vld [vmem:[#allocation4 + $0x7b0] sm:$0xff]
        %v522 = vld [vmem:[#allocation4 + $0x7b8] sm:$0xff]
        %v523 = vld [vmem:[#allocation4 + $0x7c0] sm:$0xff]
        %v524 = vld [vmem:[#allocation4 + $0x7c8] sm:$0xff]
        %v525 = vld [vmem:[#allocation4 + $0x7d0] sm:$0xff]
        %v526 = vld [vmem:[#allocation4 + $0x7d8] sm:$0xff]
        %v527 = vld [vmem:[#allocation4 + $0x7e0] sm:$0xff]
        %v528 = vld [vmem:[#allocation4 + $0x7e8] sm:$0xff]
        %v529 = vld [vmem:[#allocation4 + $0x7f0] sm:$0xff]
        %v530 = vld [vmem:[#allocation4 + $0x7f8] sm:$0xff]
        %v787 = vunpack.c.l.b16 %v275
        %v788 = vunpack.c.h.b16 %v275
        %v789 = vunpack.c.l.b16 %v276
        %v790 = vunpack.c.h.b16 %v276
        %v791 = vunpack.c.l.b16 %v277
        %v792 = vunpack.c.h.b16 %v277
        %v793 = vunpack.c.l.b16 %v278
        %v794 = vunpack.c.h.b16 %v278
        %v795 = vunpack.c.l.b16 %v279
        %v796 = vunpack.c.h.b16 %v279
        %v797 = vunpack.c.l.b16 %v280
        %v798 = vunpack.c.h.b16 %v280
        %v799 = vunpack.c.l.b16 %v281
        %v800 = vunpack.c.h.b16 %v281
        %v801 = vunpack.c.l.b16 %v282
        %v802 = vunpack.c.h.b16 %v282
        %v803 = vunpack.c.l.b16 %v283
        %v804 = vunpack.c.h.b16 %v283
        %v805 = vunpack.c.l.b16 %v284
        %v806 = vunpack.c.h.b16 %v284
        %v807 = vunpack.c.l.b16 %v285
        %v808 = vunpack.c.h.b16 %v285
        %v809 = vunpack.c.l.b16 %v286
        %v810 = vunpack.c.h.b16 %v286
        %v811 = vunpack.c.l.b16 %v287
        %v812 = vunpack.c.h.b16 %v287
        %v813 = vunpack.c.l.b16 %v288
        %v814 = vunpack.c.h.b16 %v288
        %v815 = vunpack.c.l.b16 %v289
        %v816 = vunpack.c.h.b16 %v289
        %v817 = vunpack.c.l.b16 %v290
        %v818 = vunpack.c.h.b16 %v290
        %v819 = vunpack.c.l.b16 %v291
        %v820 = vunpack.c.h.b16 %v291
        %v821 = vunpack.c.l.b16 %v292
        %v822 = vunpack.c.h.b16 %v292
        %v823 = vunpack.c.l.b16 %v293
        %v824 = vunpack.c.h.b16 %v293
        %v825 = vunpack.c.l.b16 %v294
        %v826 = vunpack.c.h.b16 %v294
        %v827 = vunpack.c.l.b16 %v295
        %v828 = vunpack.c.h.b16 %v295
        %v829 = vunpack.c.l.b16 %v296
        %v830 = vunpack.c.h.b16 %v296
        %v831 = vunpack.c.l.b16 %v297
        %v832 = vunpack.c.h.b16 %v297
        %v833 = vunpack.c.l.b16 %v298
        %v834 = vunpack.c.h.b16 %v298
        %v835 = vunpack.c.l.b16 %v299
        %v836 = vunpack.c.h.b16 %v299
        %v837 = vunpack.c.l.b16 %v300
        %v838 = vunpack.c.h.b16 %v300
        %v839 = vunpack.c.l.b16 %v301
        %v840 = vunpack.c.h.b16 %v301
        %v841 = vunpack.c.l.b16 %v302
        %v842 = vunpack.c.h.b16 %v302
        %v843 = vunpack.c.l.b16 %v303
        %v844 = vunpack.c.h.b16 %v303
        %v845 = vunpack.c.l.b16 %v304
        %v846 = vunpack.c.h.b16 %v304
        %v847 = vunpack.c.l.b16 %v305
        %v848 = vunpack.c.h.b16 %v305
        %v849 = vunpack.c.l.b16 %v306
        %v850 = vunpack.c.h.b16 %v306
        %v851 = vunpack.c.l.b16 %v307
        %v852 = vunpack.c.h.b16 %v307
        %v853 = vunpack.c.l.b16 %v308
        %v854 = vunpack.c.h.b16 %v308
        %v855 = vunpack.c.l.b16 %v309
        %v856 = vunpack.c.h.b16 %v309
        %v857 = vunpack.c.l.b16 %v310
        %v858 = vunpack.c.h.b16 %v310
        %v859 = vunpack.c.l.b16 %v311
        %v860 = vunpack.c.h.b16 %v311
        %v861 = vunpack.c.l.b16 %v312
        %v862 = vunpack.c.h.b16 %v312
        %v863 = vunpack.c.l.b16 %v313
        %v864 = vunpack.c.h.b16 %v313
        %v865 = vunpack.c.l.b16 %v314
        %v866 = vunpack.c.h.b16 %v314
        %v867 = vunpack.c.l.b16 %v315
        %v868 = vunpack.c.h.b16 %v315
        %v869 = vunpack.c.l.b16 %v316
        %v870 = vunpack.c.h.b16 %v316
        %v871 = vunpack.c.l.b16 %v317
        %v872 = vunpack.c.h.b16 %v317
        %v873 = vunpack.c.l.b16 %v318
        %v874 = vunpack.c.h.b16 %v318
        %v875 = vunpack.c.l.b16 %v319
        %v876 = vunpack.c.h.b16 %v319
        %v877 = vunpack.c.l.b16 %v320
        %v878 = vunpack.c.h.b16 %v320
        %v879 = vunpack.c.l.b16 %v321
        %v880 = vunpack.c.h.b16 %v321
        %v881 = vunpack.c.l.b16 %v322
        %v882 = vunpack.c.h.b16 %v322
        %v883 = vunpack.c.l.b16 %v323
        %v884 = vunpack.c.h.b16 %v323
        %v885 = vunpack.c.l.b16 %v324
        %v886 = vunpack.c.h.b16 %v324
        %v887 = vunpack.c.l.b16 %v325
        %v888 = vunpack.c.h.b16 %v325
        %v889 = vunpack.c.l.b16 %v326
        %v890 = vunpack.c.h.b16 %v326
        %v891 = vunpack.c.l.b16 %v327
        %v892 = vunpack.c.h.b16 %v327
        %v893 = vunpack.c.l.b16 %v328
        %v894 = vunpack.c.h.b16 %v328
        %v895 = vunpack.c.l.b16 %v329
        %v896 = vunpack.c.h.b16 %v329
        %v897 = vunpack.c.l.b16 %v330
        %v898 = vunpack.c.h.b16 %v330
        %v899 = vunpack.c.l.b16 %v331
        %v900 = vunpack.c.h.b16 %v331
        %v901 = vunpack.c.l.b16 %v332
        %v902 = vunpack.c.h.b16 %v332
        %v903 = vunpack.c.l.b16 %v333
        %v904 = vunpack.c.h.b16 %v333
        %v905 = vunpack.c.l.b16 %v334
        %v906 = vunpack.c.h.b16 %v334
        %v907 = vunpack.c.l.b16 %v335
        %v908 = vunpack.c.h.b16 %v335
        %v909 = vunpack.c.l.b16 %v336
        %v910 = vunpack.c.h.b16 %v336
        %v911 = vunpack.c.l.b16 %v337
        %v912 = vunpack.c.h.b16 %v337
        %v913 = vunpack.c.l.b16 %v338
        %v914 = vunpack.c.h.b16 %v338
        %v915 = vunpack.c.l.b16 %v339
        %v916 = vunpack.c.h.b16 %v339
        %v917 = vunpack.c.l.b16 %v340
        %v918 = vunpack.c.h.b16 %v340
        %v919 = vunpack.c.l.b16 %v341
        %v920 = vunpack.c.h.b16 %v341
        %v921 = vunpack.c.l.b16 %v342
        %v922 = vunpack.c.h.b16 %v342
        %v923 = vunpack.c.l.b16 %v343
        %v924 = vunpack.c.h.b16 %v343
        %v925 = vunpack.c.l.b16 %v344
        %v926 = vunpack.c.h.b16 %v344
        %v927 = vunpack.c.l.b16 %v345
        %v928 = vunpack.c.h.b16 %v345
        %v929 = vunpack.c.l.b16 %v346
        %v930 = vunpack.c.h.b16 %v346
        %v931 = vunpack.c.l.b16 %v347
        %v932 = vunpack.c.h.b16 %v347
        %v933 = vunpack.c.l.b16 %v348
        %v934 = vunpack.c.h.b16 %v348
        %v935 = vunpack.c.l.b16 %v349
        %v936 = vunpack.c.h.b16 %v349
        %v937 = vunpack.c.l.b16 %v350
        %v938 = vunpack.c.h.b16 %v350
        %v939 = vunpack.c.l.b16 %v351
        %v940 = vunpack.c.h.b16 %v351
        %v941 = vunpack.c.l.b16 %v352
        %v942 = vunpack.c.h.b16 %v352
        %v943 = vunpack.c.l.b16 %v353
        %v944 = vunpack.c.h.b16 %v353
        %v945 = vunpack.c.l.b16 %v354
        %v946 = vunpack.c.h.b16 %v354
        %v947 = vunpack.c.l.b16 %v355
        %v948 = vunpack.c.h.b16 %v355
        %v949 = vunpack.c.l.b16 %v356
        %v950 = vunpack.c.h.b16 %v356
        %v951 = vunpack.c.l.b16 %v357
        %v952 = vunpack.c.h.b16 %v357
        %v953 = vunpack.c.l.b16 %v358
        %v954 = vunpack.c.h.b16 %v358
        %v955 = vunpack.c.l.b16 %v359
        %v956 = vunpack.c.h.b16 %v359
        %v957 = vunpack.c.l.b16 %v360
        %v958 = vunpack.c.h.b16 %v360
        %v959 = vunpack.c.l.b16 %v361
        %v960 = vunpack.c.h.b16 %v361
        %v961 = vunpack.c.l.b16 %v362
        %v962 = vunpack.c.h.b16 %v362
        %v963 = vunpack.c.l.b16 %v363
        %v964 = vunpack.c.h.b16 %v363
        %v965 = vunpack.c.l.b16 %v364
        %v966 = vunpack.c.h.b16 %v364
        %v967 = vunpack.c.l.b16 %v365
        %v968 = vunpack.c.h.b16 %v365
        %v969 = vunpack.c.l.b16 %v366
        %v970 = vunpack.c.h.b16 %v366
        %v971 = vunpack.c.l.b16 %v367
        %v972 = vunpack.c.h.b16 %v367
        %v973 = vunpack.c.l.b16 %v368
        %v974 = vunpack.c.h.b16 %v368
        %v975 = vunpack.c.l.b16 %v369
        %v976 = vunpack.c.h.b16 %v369
        %v977 = vunpack.c.l.b16 %v370
        %v978 = vunpack.c.h.b16 %v370
        %v979 = vunpack.c.l.b16 %v371
        %v980 = vunpack.c.h.b16 %v371
        %v981 = vunpack.c.l.b16 %v372
        %v982 = vunpack.c.h.b16 %v372
        %v983 = vunpack.c.l.b16 %v373
        %v984 = vunpack.c.h.b16 %v373
        %v985 = vunpack.c.l.b16 %v374
        %v986 = vunpack.c.h.b16 %v374
        %v987 = vunpack.c.l.b16 %v375
        %v988 = vunpack.c.h.b16 %v375
        %v989 = vunpack.c.l.b16 %v376
        %v990 = vunpack.c.h.b16 %v376
        %v991 = vunpack.c.l.b16 %v377
        %v992 = vunpack.c.h.b16 %v377
        %v993 = vunpack.c.l.b16 %v378
        %v994 = vunpack.c.h.b16 %v378
        %v995 = vunpack.c.l.b16 %v379
        %v996 = vunpack.c.h.b16 %v379
        %v997 = vunpack.c.l.b16 %v380
        %v998 = vunpack.c.h.b16 %v380
        %v999 = vunpack.c.l.b16 %v381
        %v1000 = vunpack.c.h.b16 %v381
        %v1001 = vunpack.c.l.b16 %v382
        %v1002 = vunpack.c.h.b16 %v382
        %v1003 = vunpack.c.l.b16 %v383
        %v1004 = vunpack.c.h.b16 %v383
        %v1005 = vunpack.c.l.b16 %v384
        %v1006 = vunpack.c.h.b16 %v384
        %v1007 = vunpack.c.l.b16 %v385
        %v1008 = vunpack.c.h.b16 %v385
        %v1009 = vunpack.c.l.b16 %v386
        %v1010 = vunpack.c.h.b16 %v386
        %v1011 = vunpack.c.l.b16 %v387
        %v1012 = vunpack.c.h.b16 %v387
        %v1013 = vunpack.c.l.b16 %v388
        %v1014 = vunpack.c.h.b16 %v388
        %v1015 = vunpack.c.l.b16 %v389
        %v1016 = vunpack.c.h.b16 %v389
        %v1017 = vunpack.c.l.b16 %v390
        %v1018 = vunpack.c.h.b16 %v390
        %v1019 = vunpack.c.l.b16 %v391
        %v1020 = vunpack.c.h.b16 %v391
        %v1021 = vunpack.c.l.b16 %v392
        %v1022 = vunpack.c.h.b16 %v392
        %v1023 = vunpack.c.l.b16 %v393
        %v1024 = vunpack.c.h.b16 %v393
        %v1025 = vunpack.c.l.b16 %v394
        %v1026 = vunpack.c.h.b16 %v394
        %v1027 = vunpack.c.l.b16 %v395
        %v1028 = vunpack.c.h.b16 %v395
        %v1029 = vunpack.c.l.b16 %v396
        %v1030 = vunpack.c.h.b16 %v396
        %v1031 = vunpack.c.l.b16 %v397
        %v1032 = vunpack.c.h.b16 %v397
        %v1033 = vunpack.c.l.b16 %v398
        %v1034 = vunpack.c.h.b16 %v398
        %v1035 = vunpack.c.l.b16 %v399
        %v1036 = vunpack.c.h.b16 %v399
        %v1037 = vunpack.c.l.b16 %v400
        %v1038 = vunpack.c.h.b16 %v400
        %v1039 = vunpack.c.l.b16 %v401
        %v1040 = vunpack.c.h.b16 %v401
        %v1041 = vunpack.c.l.b16 %v402
        %v1042 = vunpack.c.h.b16 %v402
        %v1043 = vunpack.c.l.b16 %v403
        %v1044 = vunpack.c.h.b16 %v403
        %v1045 = vunpack.c.l.b16 %v404
        %v1046 = vunpack.c.h.b16 %v404
        %v1047 = vunpack.c.l.b16 %v405
        %v1048 = vunpack.c.h.b16 %v405
        %v1049 = vunpack.c.l.b16 %v406
        %v1050 = vunpack.c.h.b16 %v406
        %v1051 = vunpack.c.l.b16 %v407
        %v1052 = vunpack.c.h.b16 %v407
        %v1053 = vunpack.c.l.b16 %v408
        %v1054 = vunpack.c.h.b16 %v408
        %v1055 = vunpack.c.l.b16 %v409
        %v1056 = vunpack.c.h.b16 %v409
        %v1057 = vunpack.c.l.b16 %v410
        %v1058 = vunpack.c.h.b16 %v410
        %v1059 = vunpack.c.l.b16 %v411
        %v1060 = vunpack.c.h.b16 %v411
        %v1061 = vunpack.c.l.b16 %v412
        %v1062 = vunpack.c.h.b16 %v412
        %v1063 = vunpack.c.l.b16 %v413
        %v1064 = vunpack.c.h.b16 %v413
        %v1065 = vunpack.c.l.b16 %v414
        %v1066 = vunpack.c.h.b16 %v414
        %v1067 = vunpack.c.l.b16 %v415
        %v1068 = vunpack.c.h.b16 %v415
        %v1069 = vunpack.c.l.b16 %v416
        %v1070 = vunpack.c.h.b16 %v416
        %v1071 = vunpack.c.l.b16 %v417
        %v1072 = vunpack.c.h.b16 %v417
        %v1073 = vunpack.c.l.b16 %v418
        %v1074 = vunpack.c.h.b16 %v418
        %v1075 = vunpack.c.l.b16 %v419
        %v1076 = vunpack.c.h.b16 %v419
        %v1077 = vunpack.c.l.b16 %v420
        %v1078 = vunpack.c.h.b16 %v420
        %v1079 = vunpack.c.l.b16 %v421
        %v1080 = vunpack.c.h.b16 %v421
        %v1081 = vunpack.c.l.b16 %v422
        %v1082 = vunpack.c.h.b16 %v422
        %v1083 = vunpack.c.l.b16 %v423
        %v1084 = vunpack.c.h.b16 %v423
        %v1085 = vunpack.c.l.b16 %v424
        %v1086 = vunpack.c.h.b16 %v424
        %v1087 = vunpack.c.l.b16 %v425
        %v1088 = vunpack.c.h.b16 %v425
        %v1089 = vunpack.c.l.b16 %v426
        %v1090 = vunpack.c.h.b16 %v426
        %v1091 = vunpack.c.l.b16 %v427
        %v1092 = vunpack.c.h.b16 %v427
        %v1093 = vunpack.c.l.b16 %v428
        %v1094 = vunpack.c.h.b16 %v428
        %v1095 = vunpack.c.l.b16 %v429
        %v1096 = vunpack.c.h.b16 %v429
        %v1097 = vunpack.c.l.b16 %v430
        %v1098 = vunpack.c.h.b16 %v430
        %v1099 = vunpack.c.l.b16 %v431
        %v1100 = vunpack.c.h.b16 %v431
        %v1101 = vunpack.c.l.b16 %v432
        %v1102 = vunpack.c.h.b16 %v432
        %v1103 = vunpack.c.l.b16 %v433
        %v1104 = vunpack.c.h.b16 %v433
        %v1105 = vunpack.c.l.b16 %v434
        %v1106 = vunpack.c.h.b16 %v434
        %v1107 = vunpack.c.l.b16 %v435
        %v1108 = vunpack.c.h.b16 %v435
        %v1109 = vunpack.c.l.b16 %v436
        %v1110 = vunpack.c.h.b16 %v436
        %v1111 = vunpack.c.l.b16 %v437
        %v1112 = vunpack.c.h.b16 %v437
        %v1113 = vunpack.c.l.b16 %v438
        %v1114 = vunpack.c.h.b16 %v438
        %v1115 = vunpack.c.l.b16 %v439
        %v1116 = vunpack.c.h.b16 %v439
        %v1117 = vunpack.c.l.b16 %v440
        %v1118 = vunpack.c.h.b16 %v440
        %v1119 = vunpack.c.l.b16 %v441
        %v1120 = vunpack.c.h.b16 %v441
        %v1121 = vunpack.c.l.b16 %v442
        %v1122 = vunpack.c.h.b16 %v442
        %v1123 = vunpack.c.l.b16 %v443
        %v1124 = vunpack.c.h.b16 %v443
        %v1125 = vunpack.c.l.b16 %v444
        %v1126 = vunpack.c.h.b16 %v444
        %v1127 = vunpack.c.l.b16 %v445
        %v1128 = vunpack.c.h.b16 %v445
        %v1129 = vunpack.c.l.b16 %v446
        %v1130 = vunpack.c.h.b16 %v446
        %v1131 = vunpack.c.l.b16 %v447
        %v1132 = vunpack.c.h.b16 %v447
        %v1133 = vunpack.c.l.b16 %v448
        %v1134 = vunpack.c.h.b16 %v448
        %v1135 = vunpack.c.l.b16 %v449
        %v1136 = vunpack.c.h.b16 %v449
        %v1137 = vunpack.c.l.b16 %v450
        %v1138 = vunpack.c.h.b16 %v450
        %v1139 = vunpack.c.l.b16 %v451
        %v1140 = vunpack.c.h.b16 %v451
        %v1141 = vunpack.c.l.b16 %v452
        %v1142 = vunpack.c.h.b16 %v452
        %v1143 = vunpack.c.l.b16 %v453
        %v1144 = vunpack.c.h.b16 %v453
        %v1145 = vunpack.c.l.b16 %v454
        %v1146 = vunpack.c.h.b16 %v454
        %v1147 = vunpack.c.l.b16 %v455
        %v1148 = vunpack.c.h.b16 %v455
        %v1149 = vunpack.c.l.b16 %v456
        %v1150 = vunpack.c.h.b16 %v456
        %v1151 = vunpack.c.l.b16 %v457
        %v1152 = vunpack.c.h.b16 %v457
        %v1153 = vunpack.c.l.b16 %v458
        %v1154 = vunpack.c.h.b16 %v458
        %v1155 = vunpack.c.l.b16 %v459
        %v1156 = vunpack.c.h.b16 %v459
        %v1157 = vunpack.c.l.b16 %v460
        %v1158 = vunpack.c.h.b16 %v460
        %v1159 = vunpack.c.l.b16 %v461
        %v1160 = vunpack.c.h.b16 %v461
        %v1161 = vunpack.c.l.b16 %v462
        %v1162 = vunpack.c.h.b16 %v462
        %v1163 = vunpack.c.l.b16 %v463
        %v1164 = vunpack.c.h.b16 %v463
        %v1165 = vunpack.c.l.b16 %v464
        %v1166 = vunpack.c.h.b16 %v464
        %v1167 = vunpack.c.l.b16 %v465
        %v1168 = vunpack.c.h.b16 %v465
        %v1169 = vunpack.c.l.b16 %v466
        %v1170 = vunpack.c.h.b16 %v466
        %v1171 = vunpack.c.l.b16 %v467
        %v1172 = vunpack.c.h.b16 %v467
        %v1173 = vunpack.c.l.b16 %v468
        %v1174 = vunpack.c.h.b16 %v468
        %v1175 = vunpack.c.l.b16 %v469
        %v1176 = vunpack.c.h.b16 %v469
        %v1177 = vunpack.c.l.b16 %v470
        %v1178 = vunpack.c.h.b16 %v470
        %v1179 = vunpack.c.l.b16 %v471
        %v1180 = vunpack.c.h.b16 %v471
        %v1181 = vunpack.c.l.b16 %v472
        %v1182 = vunpack.c.h.b16 %v472
        %v1183 = vunpack.c.l.b16 %v473
        %v1184 = vunpack.c.h.b16 %v473
        %v1185 = vunpack.c.l.b16 %v474
        %v1186 = vunpack.c.h.b16 %v474
        %v1187 = vunpack.c.l.b16 %v475
        %v1188 = vunpack.c.h.b16 %v475
        %v1189 = vunpack.c.l.b16 %v476
        %v1190 = vunpack.c.h.b16 %v476
        %v1191 = vunpack.c.l.b16 %v477
        %v1192 = vunpack.c.h.b16 %v477
        %v1193 = vunpack.c.l.b16 %v478
        %v1194 = vunpack.c.h.b16 %v478
        %v1195 = vunpack.c.l.b16 %v479
        %v1196 = vunpack.c.h.b16 %v479
        %v1197 = vunpack.c.l.b16 %v480
        %v1198 = vunpack.c.h.b16 %v480
        %v1199 = vunpack.c.l.b16 %v481
        %v1200 = vunpack.c.h.b16 %v481
        %v1201 = vunpack.c.l.b16 %v482
        %v1202 = vunpack.c.h.b16 %v482
        %v1203 = vunpack.c.l.b16 %v483
        %v1204 = vunpack.c.h.b16 %v483
        %v1205 = vunpack.c.l.b16 %v484
        %v1206 = vunpack.c.h.b16 %v484
        %v1207 = vunpack.c.l.b16 %v485
        %v1208 = vunpack.c.h.b16 %v485
        %v1209 = vunpack.c.l.b16 %v486
        %v1210 = vunpack.c.h.b16 %v486
        %v1211 = vunpack.c.l.b16 %v487
        %v1212 = vunpack.c.h.b16 %v487
        %v1213 = vunpack.c.l.b16 %v488
        %v1214 = vunpack.c.h.b16 %v488
        %v1215 = vunpack.c.l.b16 %v489
        %v1216 = vunpack.c.h.b16 %v489
        %v1217 = vunpack.c.l.b16 %v490
        %v1218 = vunpack.c.h.b16 %v490
        %v1219 = vunpack.c.l.b16 %v491
        %v1220 = vunpack.c.h.b16 %v491
        %v1221 = vunpack.c.l.b16 %v492
        %v1222 = vunpack.c.h.b16 %v492
        %v1223 = vunpack.c.l.b16 %v493
        %v1224 = vunpack.c.h.b16 %v493
        %v1225 = vunpack.c.l.b16 %v494
        %v1226 = vunpack.c.h.b16 %v494
        %v1227 = vunpack.c.l.b16 %v495
        %v1228 = vunpack.c.h.b16 %v495
        %v1229 = vunpack.c.l.b16 %v496
        %v1230 = vunpack.c.h.b16 %v496
        %v1231 = vunpack.c.l.b16 %v497
        %v1232 = vunpack.c.h.b16 %v497
        %v1233 = vunpack.c.l.b16 %v498
        %v1234 = vunpack.c.h.b16 %v498
        %v1235 = vunpack.c.l.b16 %v499
        %v1236 = vunpack.c.h.b16 %v499
        %v1237 = vunpack.c.l.b16 %v500
        %v1238 = vunpack.c.h.b16 %v500
        %v1239 = vunpack.c.l.b16 %v501
        %v1240 = vunpack.c.h.b16 %v501
        %v1241 = vunpack.c.l.b16 %v502
        %v1242 = vunpack.c.h.b16 %v502
        %v1243 = vunpack.c.l.b16 %v503
        %v1244 = vunpack.c.h.b16 %v503
        %v1245 = vunpack.c.l.b16 %v504
        %v1246 = vunpack.c.h.b16 %v504
        %v1247 = vunpack.c.l.b16 %v505
        %v1248 = vunpack.c.h.b16 %v505
        %v1249 = vunpack.c.l.b16 %v506
        %v1250 = vunpack.c.h.b16 %v506
        %v1251 = vunpack.c.l.b16 %v507
        %v1252 = vunpack.c.h.b16 %v507
        %v1253 = vunpack.c.l.b16 %v508
        %v1254 = vunpack.c.h.b16 %v508
        %v1255 = vunpack.c.l.b16 %v509
        %v1256 = vunpack.c.h.b16 %v509
        %v1257 = vunpack.c.l.b16 %v510
        %v1258 = vunpack.c.h.b16 %v510
        %v1259 = vunpack.c.l.b16 %v511
        %v1260 = vunpack.c.h.b16 %v511
        %v1261 = vunpack.c.l.b16 %v512
        %v1262 = vunpack.c.h.b16 %v512
        %v1263 = vunpack.c.l.b16 %v513
        %v1264 = vunpack.c.h.b16 %v513
        %v1265 = vunpack.c.l.b16 %v514
        %v1266 = vunpack.c.h.b16 %v514
        %v1267 = vunpack.c.l.b16 %v515
        %v1268 = vunpack.c.h.b16 %v515
        %v1269 = vunpack.c.l.b16 %v516
        %v1270 = vunpack.c.h.b16 %v516
        %v1271 = vunpack.c.l.b16 %v517
        %v1272 = vunpack.c.h.b16 %v517
        %v1273 = vunpack.c.l.b16 %v518
        %v1274 = vunpack.c.h.b16 %v518
        %v1275 = vunpack.c.l.b16 %v519
        %v1276 = vunpack.c.h.b16 %v519
        %v1277 = vunpack.c.l.b16 %v520
        %v1278 = vunpack.c.h.b16 %v520
        %v1279 = vunpack.c.l.b16 %v521
        %v1280 = vunpack.c.h.b16 %v521
        %v1281 = vunpack.c.l.b16 %v522
        %v1282 = vunpack.c.h.b16 %v522
        %v1283 = vunpack.c.l.b16 %v523
        %v1284 = vunpack.c.h.b16 %v523
        %v1285 = vunpack.c.l.b16 %v524
        %v1286 = vunpack.c.h.b16 %v524
        %v1287 = vunpack.c.l.b16 %v525
        %v1288 = vunpack.c.h.b16 %v525
        %v1289 = vunpack.c.l.b16 %v526
        %v1290 = vunpack.c.h.b16 %v526
        %v1291 = vunpack.c.l.b16 %v527
        %v1292 = vunpack.c.h.b16 %v527
        %v1293 = vunpack.c.l.b16 %v528
        %v1294 = vunpack.c.h.b16 %v528
        %v1295 = vunpack.c.l.b16 %v529
        %v1296 = vunpack.c.h.b16 %v529
        %v1297 = vunpack.c.l.b16 %v530
        %v1298 = vunpack.c.h.b16 %v530
        %v1299 = vpack.c.b16 %v795, %v787
        %v1300 = vpack.c.b16 %v796, %v788
        %v1301 = vpack.c.b16 %v797, %v789
        %v1302 = vpack.c.b16 %v798, %v790
        %v1303 = vpack.c.b16 %v799, %v791
        %v1304 = vpack.c.b16 %v800, %v792
        %v1305 = vpack.c.b16 %v801, %v793
        %v1306 = vpack.c.b16 %v802, %v794
        %v1307 = vpack.c.b16 %v811, %v803
        %v1308 = vpack.c.b16 %v812, %v804
        %v1309 = vpack.c.b16 %v813, %v805
        %v1310 = vpack.c.b16 %v814, %v806
        %v1311 = vpack.c.b16 %v815, %v807
        %v1312 = vpack.c.b16 %v816, %v808
        %v1313 = vpack.c.b16 %v817, %v809
        %v1314 = vpack.c.b16 %v818, %v810
        %v1315 = vpack.c.b16 %v827, %v819
        %v1316 = vpack.c.b16 %v828, %v820
        %v1317 = vpack.c.b16 %v829, %v821
        %v1318 = vpack.c.b16 %v830, %v822
        %v1319 = vpack.c.b16 %v831, %v823
        %v1320 = vpack.c.b16 %v832, %v824
        %v1321 = vpack.c.b16 %v833, %v825
        %v1322 = vpack.c.b16 %v834, %v826
        %v1323 = vpack.c.b16 %v843, %v835
        %v1324 = vpack.c.b16 %v844, %v836
        %v1325 = vpack.c.b16 %v845, %v837
        %v1326 = vpack.c.b16 %v846, %v838
        %v1327 = vpack.c.b16 %v847, %v839
        %v1328 = vpack.c.b16 %v848, %v840
        %v1329 = vpack.c.b16 %v849, %v841
        %v1330 = vpack.c.b16 %v850, %v842
        %v1331 = vpack.c.b16 %v859, %v851
        %v1332 = vpack.c.b16 %v860, %v852
        %v1333 = vpack.c.b16 %v861, %v853
        %v1334 = vpack.c.b16 %v862, %v854
        %v1335 = vpack.c.b16 %v863, %v855
        %v1336 = vpack.c.b16 %v864, %v856
        %v1337 = vpack.c.b16 %v865, %v857
        %v1338 = vpack.c.b16 %v866, %v858
        %v1339 = vpack.c.b16 %v875, %v867
        %v1340 = vpack.c.b16 %v876, %v868
        %v1341 = vpack.c.b16 %v877, %v869
        %v1342 = vpack.c.b16 %v878, %v870
        %v1343 = vpack.c.b16 %v879, %v871
        %v1344 = vpack.c.b16 %v880, %v872
        %v1345 = vpack.c.b16 %v881, %v873
        %v1346 = vpack.c.b16 %v882, %v874
        %v1347 = vpack.c.b16 %v891, %v883
        %v1348 = vpack.c.b16 %v892, %v884
        %v1349 = vpack.c.b16 %v893, %v885
        %v1350 = vpack.c.b16 %v894, %v886
        %v1351 = vpack.c.b16 %v895, %v887
        %v1352 = vpack.c.b16 %v896, %v888
        %v1353 = vpack.c.b16 %v897, %v889
        %v1354 = vpack.c.b16 %v898, %v890
        %v1355 = vpack.c.b16 %v907, %v899
        %v1356 = vpack.c.b16 %v908, %v900
        %v1357 = vpack.c.b16 %v909, %v901
        %v1358 = vpack.c.b16 %v910, %v902
        %v1359 = vpack.c.b16 %v911, %v903
        %v1360 = vpack.c.b16 %v912, %v904
        %v1361 = vpack.c.b16 %v913, %v905
        %v1362 = vpack.c.b16 %v914, %v906
        %v1363 = vpack.c.b16 %v923, %v915
        %v1364 = vpack.c.b16 %v924, %v916
        %v1365 = vpack.c.b16 %v925, %v917
        %v1366 = vpack.c.b16 %v926, %v918
        %v1367 = vpack.c.b16 %v927, %v919
        %v1368 = vpack.c.b16 %v928, %v920
        %v1369 = vpack.c.b16 %v929, %v921
        %v1370 = vpack.c.b16 %v930, %v922
        %v1371 = vpack.c.b16 %v939, %v931
        %v1372 = vpack.c.b16 %v940, %v932
        %v1373 = vpack.c.b16 %v941, %v933
        %v1374 = vpack.c.b16 %v942, %v934
        %v1375 = vpack.c.b16 %v943, %v935
        %v1376 = vpack.c.b16 %v944, %v936
        %v1377 = vpack.c.b16 %v945, %v937
        %v1378 = vpack.c.b16 %v946, %v938
        %v1379 = vpack.c.b16 %v955, %v947
        %v1380 = vpack.c.b16 %v956, %v948
        %v1381 = vpack.c.b16 %v957, %v949
        %v1382 = vpack.c.b16 %v958, %v950
        %v1383 = vpack.c.b16 %v959, %v951
        %v1384 = vpack.c.b16 %v960, %v952
        %v1385 = vpack.c.b16 %v961, %v953
        %v1386 = vpack.c.b16 %v962, %v954
        %v1387 = vpack.c.b16 %v971, %v963
        %v1388 = vpack.c.b16 %v972, %v964
        %v1389 = vpack.c.b16 %v973, %v965
        %v1390 = vpack.c.b16 %v974, %v966
        %v1391 = vpack.c.b16 %v975, %v967
        %v1392 = vpack.c.b16 %v976, %v968
        %v1393 = vpack.c.b16 %v977, %v969
        %v1394 = vpack.c.b16 %v978, %v970
        %v1395 = vpack.c.b16 %v987, %v979
        %v1396 = vpack.c.b16 %v988, %v980
        %v1397 = vpack.c.b16 %v989, %v981
        %v1398 = vpack.c.b16 %v990, %v982
        %v1399 = vpack.c.b16 %v991, %v983
        %v1400 = vpack.c.b16 %v992, %v984
        %v1401 = vpack.c.b16 %v993, %v985
        %v1402 = vpack.c.b16 %v994, %v986
        %v1403 = vpack.c.b16 %v1003, %v995
        %v1404 = vpack.c.b16 %v1004, %v996
        %v1405 = vpack.c.b16 %v1005, %v997
        %v1406 = vpack.c.b16 %v1006, %v998
        %v1407 = vpack.c.b16 %v1007, %v999
        %v1408 = vpack.c.b16 %v1008, %v1000
        %v1409 = vpack.c.b16 %v1009, %v1001
        %v1410 = vpack.c.b16 %v1010, %v1002
        %v1411 = vpack.c.b16 %v1019, %v1011
        %v1412 = vpack.c.b16 %v1020, %v1012
        %v1413 = vpack.c.b16 %v1021, %v1013
        %v1414 = vpack.c.b16 %v1022, %v1014
        %v1415 = vpack.c.b16 %v1023, %v1015
        %v1416 = vpack.c.b16 %v1024, %v1016
        %v1417 = vpack.c.b16 %v1025, %v1017
        %v1418 = vpack.c.b16 %v1026, %v1018
        %v1419 = vpack.c.b16 %v1035, %v1027
        %v1420 = vpack.c.b16 %v1036, %v1028
        %v1421 = vpack.c.b16 %v1037, %v1029
        %v1422 = vpack.c.b16 %v1038, %v1030
        %v1423 = vpack.c.b16 %v1039, %v1031
        %v1424 = vpack.c.b16 %v1040, %v1032
        %v1425 = vpack.c.b16 %v1041, %v1033
        %v1426 = vpack.c.b16 %v1042, %v1034
        %v1427 = vpack.c.b16 %v1051, %v1043
        %v1428 = vpack.c.b16 %v1052, %v1044
        %v1429 = vpack.c.b16 %v1053, %v1045
        %v1430 = vpack.c.b16 %v1054, %v1046
        %v1431 = vpack.c.b16 %v1055, %v1047
        %v1432 = vpack.c.b16 %v1056, %v1048
        %v1433 = vpack.c.b16 %v1057, %v1049
        %v1434 = vpack.c.b16 %v1058, %v1050
        %v1435 = vpack.c.b16 %v1067, %v1059
        %v1436 = vpack.c.b16 %v1068, %v1060
        %v1437 = vpack.c.b16 %v1069, %v1061
        %v1438 = vpack.c.b16 %v1070, %v1062
        %v1439 = vpack.c.b16 %v1071, %v1063
        %v1440 = vpack.c.b16 %v1072, %v1064
        %v1441 = vpack.c.b16 %v1073, %v1065
        %v1442 = vpack.c.b16 %v1074, %v1066
        %v1443 = vpack.c.b16 %v1083, %v1075
        %v1444 = vpack.c.b16 %v1084, %v1076
        %v1445 = vpack.c.b16 %v1085, %v1077
        %v1446 = vpack.c.b16 %v1086, %v1078
        %v1447 = vpack.c.b16 %v1087, %v1079
        %v1448 = vpack.c.b16 %v1088, %v1080
        %v1449 = vpack.c.b16 %v1089, %v1081
        %v1450 = vpack.c.b16 %v1090, %v1082
        %v1451 = vpack.c.b16 %v1099, %v1091
        %v1452 = vpack.c.b16 %v1100, %v1092
        %v1453 = vpack.c.b16 %v1101, %v1093
        %v1454 = vpack.c.b16 %v1102, %v1094
        %v1455 = vpack.c.b16 %v1103, %v1095
        %v1456 = vpack.c.b16 %v1104, %v1096
        %v1457 = vpack.c.b16 %v1105, %v1097
        %v1458 = vpack.c.b16 %v1106, %v1098
        %v1459 = vpack.c.b16 %v1115, %v1107
        %v1460 = vpack.c.b16 %v1116, %v1108
        %v1461 = vpack.c.b16 %v1117, %v1109
        %v1462 = vpack.c.b16 %v1118, %v1110
        %v1463 = vpack.c.b16 %v1119, %v1111
        %v1464 = vpack.c.b16 %v1120, %v1112
        %v1465 = vpack.c.b16 %v1121, %v1113
        %v1466 = vpack.c.b16 %v1122, %v1114
        %v1467 = vpack.c.b16 %v1131, %v1123
        %v1468 = vpack.c.b16 %v1132, %v1124
        %v1469 = vpack.c.b16 %v1133, %v1125
        %v1470 = vpack.c.b16 %v1134, %v1126
        %v1471 = vpack.c.b16 %v1135, %v1127
        %v1472 = vpack.c.b16 %v1136, %v1128
        %v1473 = vpack.c.b16 %v1137, %v1129
        %v1474 = vpack.c.b16 %v1138, %v1130
        %v1475 = vpack.c.b16 %v1147, %v1139
        %v1476 = vpack.c.b16 %v1148, %v1140
        %v1477 = vpack.c.b16 %v1149, %v1141
        %v1478 = vpack.c.b16 %v1150, %v1142
        %v1479 = vpack.c.b16 %v1151, %v1143
        %v1480 = vpack.c.b16 %v1152, %v1144
        %v1481 = vpack.c.b16 %v1153, %v1145
        %v1482 = vpack.c.b16 %v1154, %v1146
        %v1483 = vpack.c.b16 %v1163, %v1155
        %v1484 = vpack.c.b16 %v1164, %v1156
        %v1485 = vpack.c.b16 %v1165, %v1157
        %v1486 = vpack.c.b16 %v1166, %v1158
        %v1487 = vpack.c.b16 %v1167, %v1159
        %v1488 = vpack.c.b16 %v1168, %v1160
        %v1489 = vpack.c.b16 %v1169, %v1161
        %v1490 = vpack.c.b16 %v1170, %v1162
        %v1491 = vpack.c.b16 %v1179, %v1171
        %v1492 = vpack.c.b16 %v1180, %v1172
        %v1493 = vpack.c.b16 %v1181, %v1173
        %v1494 = vpack.c.b16 %v1182, %v1174
        %v1495 = vpack.c.b16 %v1183, %v1175
        %v1496 = vpack.c.b16 %v1184, %v1176
        %v1497 = vpack.c.b16 %v1185, %v1177
        %v1498 = vpack.c.b16 %v1186, %v1178
        %v1499 = vpack.c.b16 %v1195, %v1187
        %v1500 = vpack.c.b16 %v1196, %v1188
        %v1501 = vpack.c.b16 %v1197, %v1189
        %v1502 = vpack.c.b16 %v1198, %v1190
        %v1503 = vpack.c.b16 %v1199, %v1191
        %v1504 = vpack.c.b16 %v1200, %v1192
        %v1505 = vpack.c.b16 %v1201, %v1193
        %v1506 = vpack.c.b16 %v1202, %v1194
        %v1507 = vpack.c.b16 %v1211, %v1203
        %v1508 = vpack.c.b16 %v1212, %v1204
        %v1509 = vpack.c.b16 %v1213, %v1205
        %v1510 = vpack.c.b16 %v1214, %v1206
        %v1511 = vpack.c.b16 %v1215, %v1207
        %v1512 = vpack.c.b16 %v1216, %v1208
        %v1513 = vpack.c.b16 %v1217, %v1209
        %v1514 = vpack.c.b16 %v1218, %v1210
        %v1515 = vpack.c.b16 %v1227, %v1219
        %v1516 = vpack.c.b16 %v1228, %v1220
        %v1517 = vpack.c.b16 %v1229, %v1221
        %v1518 = vpack.c.b16 %v1230, %v1222
        %v1519 = vpack.c.b16 %v1231, %v1223
        %v1520 = vpack.c.b16 %v1232, %v1224
        %v1521 = vpack.c.b16 %v1233, %v1225
        %v1522 = vpack.c.b16 %v1234, %v1226
        %v1523 = vpack.c.b16 %v1243, %v1235
        %v1524 = vpack.c.b16 %v1244, %v1236
        %v1525 = vpack.c.b16 %v1245, %v1237
        %v1526 = vpack.c.b16 %v1246, %v1238
        %v1527 = vpack.c.b16 %v1247, %v1239
        %v1528 = vpack.c.b16 %v1248, %v1240
        %v1529 = vpack.c.b16 %v1249, %v1241
        %v1530 = vpack.c.b16 %v1250, %v1242
        %v1531 = vpack.c.b16 %v1259, %v1251
        %v1532 = vpack.c.b16 %v1260, %v1252
        %v1533 = vpack.c.b16 %v1261, %v1253
        %v1534 = vpack.c.b16 %v1262, %v1254
        %v1535 = vpack.c.b16 %v1263, %v1255
        %v1536 = vpack.c.b16 %v1264, %v1256
        %v1537 = vpack.c.b16 %v1265, %v1257
        %v1538 = vpack.c.b16 %v1266, %v1258
        %v1539 = vpack.c.b16 %v1275, %v1267
        %v1540 = vpack.c.b16 %v1276, %v1268
        %v1541 = vpack.c.b16 %v1277, %v1269
        %v1542 = vpack.c.b16 %v1278, %v1270
        %v1543 = vpack.c.b16 %v1279, %v1271
        %v1544 = vpack.c.b16 %v1280, %v1272
        %v1545 = vpack.c.b16 %v1281, %v1273
        %v1546 = vpack.c.b16 %v1282, %v1274
        %v1547 = vpack.c.b16 %v1291, %v1283
        %v1548 = vpack.c.b16 %v1292, %v1284
        %v1549 = vpack.c.b16 %v1293, %v1285
        %v1550 = vpack.c.b16 %v1294, %v1286
        %v1551 = vpack.c.b16 %v1295, %v1287
        %v1552 = vpack.c.b16 %v1296, %v1288
        %v1553 = vpack.c.b16 %v1297, %v1289
        %v1554 = vpack.c.b16 %v1298, %v1290
        %1811 = vmatpush.bf16.msra.mxu0 %v1355
        %1812 = vmatpush.bf16.msra.mxu0 %v1347
        %1813 = vmatpush.bf16.msra.mxu0 %v1339
        %1814 = vmatpush.bf16.msra.mxu0 %v1331
        %1815 = vmatpush.bf16.msra.mxu0 %v1323
        %1816 = vmatpush.bf16.msra.mxu0 %v1315
        %1817 = vmatpush.bf16.msra.mxu0 %v1307
        %1818 = vmatpush.bf16.msra.mxu0 %v1299
        %1819 = vmatmul.bf16.gmra.mxu0 %v259
        %v1820 = vpop.f32.mrf.mxu0
        %v1821 = vadd.f32 0.0, %v1820
        %v1822 = vpop.f32.mrf.mxu0
        %v1823 = vadd.f32 0.0, %v1822
        %1824 = vmatmul.bf16.gmra.mxu0 %v263
        %v1825 = vpop.f32.mrf.mxu0
        %v1826 = vadd.f32 0.0, %v1825
        %v1827 = vpop.f32.mrf.mxu0
        %v1828 = vadd.f32 0.0, %v1827
        %1829 = vmatmul.bf16.gmra.mxu0 %v267
        %v1830 = vpop.f32.mrf.mxu0
        %v1831 = vadd.f32 0.0, %v1830
        %v1832 = vpop.f32.mrf.mxu0
        %v1833 = vadd.f32 0.0, %v1832
        %1834 = vmatmul.bf16.gmra.mxu0 %v271
        %v1835 = vpop.f32.mrf.mxu0
        %v1836 = vadd.f32 0.0, %v1835
        %v1837 = vpop.f32.mrf.mxu0
        %v1838 = vadd.f32 0.0, %v1837
        %1839 = vdwg.mxu0
        %1840 = vmatpush.bf16.msra.mxu0 %v1419
        %1841 = vmatpush.bf16.msra.mxu0 %v1411
        %1842 = vmatpush.bf16.msra.mxu0 %v1403
        %1843 = vmatpush.bf16.msra.mxu0 %v1395
        %1844 = vmatpush.bf16.msra.mxu0 %v1387
        %1845 = vmatpush.bf16.msra.mxu0 %v1379
        %1846 = vmatpush.bf16.msra.mxu0 %v1371
        %1847 = vmatpush.bf16.msra.mxu0 %v1363
        %1848 = vmatmul.bf16.gmra.mxu0 %v260
        %v1849 = vpop.f32.mrf.mxu0
        %v1850 = vadd.f32 %v1821, %v1849
        %v1851 = vpop.f32.mrf.mxu0
        %v1852 = vadd.f32 %v1823, %v1851
        %1853 = vmatmul.bf16.gmra.mxu0 %v264
        %v1854 = vpop.f32.mrf.mxu0
        %v1855 = vadd.f32 %v1826, %v1854
        %v1856 = vpop.f32.mrf.mxu0
        %v1857 = vadd.f32 %v1828, %v1856
        %1858 = vmatmul.bf16.gmra.mxu0 %v268
        %v1859 = vpop.f32.mrf.mxu0
        %v1860 = vadd.f32 %v1831, %v1859
        %v1861 = vpop.f32.mrf.mxu0
        %v1862 = vadd.f32 %v1833, %v1861
        %1863 = vmatmul.bf16.gmra.mxu0 %v272
        %v1864 = vpop.f32.mrf.mxu0
        %v1865 = vadd.f32 %v1836, %v1864
        %v1866 = vpop.f32.mrf.mxu0
        %v1867 = vadd.f32 %v1838, %v1866
        %1868 = vdwg.mxu0
        %1869 = vmatpush.bf16.msra.mxu0 %v1483
        %1870 = vmatpush.bf16.msra.mxu0 %v1475
        %1871 = vmatpush.bf16.msra.mxu0 %v1467
        %1872 = vmatpush.bf16.msra.mxu0 %v1459
        %1873 = vmatpush.bf16.msra.mxu0 %v1451
        %1874 = vmatpush.bf16.msra.mxu0 %v1443
        %1875 = vmatpush.bf16.msra.mxu0 %v1435
        %1876 = vmatpush.bf16.msra.mxu0 %v1427
        %1877 = vmatmul.bf16.gmra.mxu0 %v261
        %v1878 = vpop.f32.mrf.mxu0
        %v1879 = vadd.f32 %v1850, %v1878
        %v1880 = vpop.f32.mrf.mxu0
        %v1881 = vadd.f32 %v1852, %v1880
        %1882 = vmatmul.bf16.gmra.mxu0 %v265
        %v1883 = vpop.f32.mrf.mxu0
        %v1884 = vadd.f32 %v1855, %v1883
        %v1885 = vpop.f32.mrf.mxu0
        %v1886 = vadd.f32 %v1857, %v1885
        %1887 = vmatmul.bf16.gmra.mxu0 %v269
        %v1888 = vpop.f32.mrf.mxu0
        %v1889 = vadd.f32 %v1860, %v1888
        %v1890 = vpop.f32.mrf.mxu0
        %v1891 = vadd.f32 %v1862, %v1890
        %1892 = vmatmul.bf16.gmra.mxu0 %v273
        %v1893 = vpop.f32.mrf.mxu0
        %v1894 = vadd.f32 %v1865, %v1893
        %v1895 = vpop.f32.mrf.mxu0
        %v1896 = vadd.f32 %v1867, %v1895
        %1897 = vdwg.mxu0
        %1898 = vmatpush.bf16.msra.mxu0 %v1547
        %1899 = vmatpush.bf16.msra.mxu0 %v1539
        %1900 = vmatpush.bf16.msra.mxu0 %v1531
        %1901 = vmatpush.bf16.msra.mxu0 %v1523
        %1902 = vmatpush.bf16.msra.mxu0 %v1515
        %1903 = vmatpush.bf16.msra.mxu0 %v1507
        %1904 = vmatpush.bf16.msra.mxu0 %v1499
        %1905 = vmatpush.bf16.msra.mxu0 %v1491
        %1906 = vmatmul.bf16.gmra.mxu0 %v262
        %v1907 = vpop.f32.mrf.mxu0
        %v1908 = vadd.f32 %v1879, %v1907
        %v1909 = vpop.f32.mrf.mxu0
        %v1910 = vadd.f32 %v1881, %v1909
        %1911 = vmatmul.bf16.gmra.mxu0 %v266
        %v1912 = vpop.f32.mrf.mxu0
        %v1913 = vadd.f32 %v1884, %v1912
        %v1914 = vpop.f32.mrf.mxu0
        %v1915 = vadd.f32 %v1886, %v1914
        %1916 = vmatmul.bf16.gmra.mxu0 %v270
        %v1917 = vpop.f32.mrf.mxu0
        %v1918 = vadd.f32 %v1889, %v1917
        %v1919 = vpop.f32.mrf.mxu0
        %v1920 = vadd.f32 %v1891, %v1919
        %1921 = vmatmul.bf16.gmra.mxu0 %v274
        %v1922 = vpop.f32.mrf.mxu0
        %v1923 = vadd.f32 %v1894, %v1922
        %v1924 = vpop.f32.mrf.mxu0
        %v1925 = vadd.f32 %v1896, %v1924
        %1926 = vdwg.mxu0
        %1927 = vmatpush.bf16.msra.mxu0 %v1356
        %1928 = vmatpush.bf16.msra.mxu0 %v1348
        %1929 = vmatpush.bf16.msra.mxu0 %v1340
        %1930 = vmatpush.bf16.msra.mxu0 %v1332
        %1931 = vmatpush.bf16.msra.mxu0 %v1324
        %1932 = vmatpush.bf16.msra.mxu0 %v1316
        %1933 = vmatpush.bf16.msra.mxu0 %v1308
        %1934 = vmatpush.bf16.msra.mxu0 %v1300
        %1935 = vmatmul.bf16.gmra.mxu0 %v259
        %v1936 = vpop.f32.mrf.mxu0
        %v1937 = vadd.f32 0.0, %v1936
        %v1938 = vpop.f32.mrf.mxu0
        %v1939 = vadd.f32 0.0, %v1938
        %1940 = vmatmul.bf16.gmra.mxu0 %v263
        %v1941 = vpop.f32.mrf.mxu0
        %v1942 = vadd.f32 0.0, %v1941
        %v1943 = vpop.f32.mrf.mxu0
        %v1944 = vadd.f32 0.0, %v1943
        %1945 = vmatmul.bf16.gmra.mxu0 %v267
        %v1946 = vpop.f32.mrf.mxu0
        %v1947 = vadd.f32 0.0, %v1946
        %v1948 = vpop.f32.mrf.mxu0
        %v1949 = vadd.f32 0.0, %v1948
        %1950 = vmatmul.bf16.gmra.mxu0 %v271
        %v1951 = vpop.f32.mrf.mxu0
        %v1952 = vadd.f32 0.0, %v1951
        %v1953 = vpop.f32.mrf.mxu0
        %v1954 = vadd.f32 0.0, %v1953
        %1955 = vdwg.mxu0
        %1956 = vmatpush.bf16.msra.mxu0 %v1420
        %1957 = vmatpush.bf16.msra.mxu0 %v1412
        %1958 = vmatpush.bf16.msra.mxu0 %v1404
        %1959 = vmatpush.bf16.msra.mxu0 %v1396
        %1960 = vmatpush.bf16.msra.mxu0 %v1388
        %1961 = vmatpush.bf16.msra.mxu0 %v1380
        %1962 = vmatpush.bf16.msra.mxu0 %v1372
        %1963 = vmatpush.bf16.msra.mxu0 %v1364
        %1964 = vmatmul.bf16.gmra.mxu0 %v260
        %v1965 = vpop.f32.mrf.mxu0
        %v1966 = vadd.f32 %v1937, %v1965
        %v1967 = vpop.f32.mrf.mxu0
        %v1968 = vadd.f32 %v1939, %v1967
        %1969 = vmatmul.bf16.gmra.mxu0 %v264
        %v1970 = vpop.f32.mrf.mxu0
        %v1971 = vadd.f32 %v1942, %v1970
        %v1972 = vpop.f32.mrf.mxu0
        %v1973 = vadd.f32 %v1944, %v1972
        %1974 = vmatmul.bf16.gmra.mxu0 %v268
        %v1975 = vpop.f32.mrf.mxu0
        %v1976 = vadd.f32 %v1947, %v1975
        %v1977 = vpop.f32.mrf.mxu0
        %v1978 = vadd.f32 %v1949, %v1977
        %1979 = vmatmul.bf16.gmra.mxu0 %v272
        %v1980 = vpop.f32.mrf.mxu0
        %v1981 = vadd.f32 %v1952, %v1980
        %v1982 = vpop.f32.mrf.mxu0
        %v1983 = vadd.f32 %v1954, %v1982
        %1984 = vdwg.mxu0
        %1985 = vmatpush.bf16.msra.mxu0 %v1484
        %1986 = vmatpush.bf16.msra.mxu0 %v1476
        %1987 = vmatpush.bf16.msra.mxu0 %v1468
        %1988 = vmatpush.bf16.msra.mxu0 %v1460
        %1989 = vmatpush.bf16.msra.mxu0 %v1452
        %1990 = vmatpush.bf16.msra.mxu0 %v1444
        %1991 = vmatpush.bf16.msra.mxu0 %v1436
        %1992 = vmatpush.bf16.msra.mxu0 %v1428
        %1993 = vmatmul.bf16.gmra.mxu0 %v261
        %v1994 = vpop.f32.mrf.mxu0
        %v1995 = vadd.f32 %v1966, %v1994
        %v1996 = vpop.f32.mrf.mxu0
        %v1997 = vadd.f32 %v1968, %v1996
        %1998 = vmatmul.bf16.gmra.mxu0 %v265
        %v1999 = vpop.f32.mrf.mxu0
        %v2000 = vadd.f32 %v1971, %v1999
        %v2001 = vpop.f32.mrf.mxu0
        %v2002 = vadd.f32 %v1973, %v2001
        %2003 = vmatmul.bf16.gmra.mxu0 %v269
        %v2004 = vpop.f32.mrf.mxu0
        %v2005 = vadd.f32 %v1976, %v2004
        %v2006 = vpop.f32.mrf.mxu0
        %v2007 = vadd.f32 %v1978, %v2006
        %2008 = vmatmul.bf16.gmra.mxu0 %v273
        %v2009 = vpop.f32.mrf.mxu0
        %v2010 = vadd.f32 %v1981, %v2009
        %v2011 = vpop.f32.mrf.mxu0
        %v2012 = vadd.f32 %v1983, %v2011
        %2013 = vdwg.mxu0
        %2014 = vmatpush.bf16.msra.mxu0 %v1548
        %2015 = vmatpush.bf16.msra.mxu0 %v1540
        %2016 = vmatpush.bf16.msra.mxu0 %v1532
        %2017 = vmatpush.bf16.msra.mxu0 %v1524
        %2018 = vmatpush.bf16.msra.mxu0 %v1516
        %2019 = vmatpush.bf16.msra.mxu0 %v1508
        %2020 = vmatpush.bf16.msra.mxu0 %v1500
        %2021 = vmatpush.bf16.msra.mxu0 %v1492
        %2022 = vmatmul.bf16.gmra.mxu0 %v262
        %v2023 = vpop.f32.mrf.mxu0
        %v2024 = vadd.f32 %v1995, %v2023
        %v2025 = vpop.f32.mrf.mxu0
        %v2026 = vadd.f32 %v1997, %v2025
        %2027 = vmatmul.bf16.gmra.mxu0 %v266
        %v2028 = vpop.f32.mrf.mxu0
        %v2029 = vadd.f32 %v2000, %v2028
        %v2030 = vpop.f32.mrf.mxu0
        %v2031 = vadd.f32 %v2002, %v2030
        %2032 = vmatmul.bf16.gmra.mxu0 %v270
        %v2033 = vpop.f32.mrf.mxu0
        %v2034 = vadd.f32 %v2005, %v2033
        %v2035 = vpop.f32.mrf.mxu0
        %v2036 = vadd.f32 %v2007, %v2035
        %2037 = vmatmul.bf16.gmra.mxu0 %v274
        %v2038 = vpop.f32.mrf.mxu0
        %v2039 = vadd.f32 %v2010, %v2038
        %v2040 = vpop.f32.mrf.mxu0
        %v2041 = vadd.f32 %v2012, %v2040
        %2042 = vdwg.mxu0
        %2043 = vmatpush.bf16.msra.mxu0 %v1357
        %2044 = vmatpush.bf16.msra.mxu0 %v1349
        %2045 = vmatpush.bf16.msra.mxu0 %v1341
        %2046 = vmatpush.bf16.msra.mxu0 %v1333
        %2047 = vmatpush.bf16.msra.mxu0 %v1325
        %2048 = vmatpush.bf16.msra.mxu0 %v1317
        %2049 = vmatpush.bf16.msra.mxu0 %v1309
        %2050 = vmatpush.bf16.msra.mxu0 %v1301
        %2051 = vmatmul.bf16.gmra.mxu0 %v259
        %v2052 = vpop.f32.mrf.mxu0
        %v2053 = vadd.f32 0.0, %v2052
        %v2054 = vpop.f32.mrf.mxu0
        %v2055 = vadd.f32 0.0, %v2054
        %2056 = vmatmul.bf16.gmra.mxu0 %v263
        %v2057 = vpop.f32.mrf.mxu0
        %v2058 = vadd.f32 0.0, %v2057
        %v2059 = vpop.f32.mrf.mxu0
        %v2060 = vadd.f32 0.0, %v2059
        %2061 = vmatmul.bf16.gmra.mxu0 %v267
        %v2062 = vpop.f32.mrf.mxu0
        %v2063 = vadd.f32 0.0, %v2062
        %v2064 = vpop.f32.mrf.mxu0
        %v2065 = vadd.f32 0.0, %v2064
        %2066 = vmatmul.bf16.gmra.mxu0 %v271
        %v2067 = vpop.f32.mrf.mxu0
        %v2068 = vadd.f32 0.0, %v2067
        %v2069 = vpop.f32.mrf.mxu0
        %v2070 = vadd.f32 0.0, %v2069
        %2071 = vdwg.mxu0
        %2072 = vmatpush.bf16.msra.mxu0 %v1421
        %2073 = vmatpush.bf16.msra.mxu0 %v1413
        %2074 = vmatpush.bf16.msra.mxu0 %v1405
        %2075 = vmatpush.bf16.msra.mxu0 %v1397
        %2076 = vmatpush.bf16.msra.mxu0 %v1389
        %2077 = vmatpush.bf16.msra.mxu0 %v1381
        %2078 = vmatpush.bf16.msra.mxu0 %v1373
        %2079 = vmatpush.bf16.msra.mxu0 %v1365
        %2080 = vmatmul.bf16.gmra.mxu0 %v260
        %v2081 = vpop.f32.mrf.mxu0
        %v2082 = vadd.f32 %v2053, %v2081
        %v2083 = vpop.f32.mrf.mxu0
        %v2084 = vadd.f32 %v2055, %v2083
        %2085 = vmatmul.bf16.gmra.mxu0 %v264
        %v2086 = vpop.f32.mrf.mxu0
        %v2087 = vadd.f32 %v2058, %v2086
        %v2088 = vpop.f32.mrf.mxu0
        %v2089 = vadd.f32 %v2060, %v2088
        %2090 = vmatmul.bf16.gmra.mxu0 %v268
        %v2091 = vpop.f32.mrf.mxu0
        %v2092 = vadd.f32 %v2063, %v2091
        %v2093 = vpop.f32.mrf.mxu0
        %v2094 = vadd.f32 %v2065, %v2093
        %2095 = vmatmul.bf16.gmra.mxu0 %v272
        %v2096 = vpop.f32.mrf.mxu0
        %v2097 = vadd.f32 %v2068, %v2096
        %v2098 = vpop.f32.mrf.mxu0
        %v2099 = vadd.f32 %v2070, %v2098
        %2100 = vdwg.mxu0
        %2101 = vmatpush.bf16.msra.mxu0 %v1485
        %2102 = vmatpush.bf16.msra.mxu0 %v1477
        %2103 = vmatpush.bf16.msra.mxu0 %v1469
        %2104 = vmatpush.bf16.msra.mxu0 %v1461
        %2105 = vmatpush.bf16.msra.mxu0 %v1453
        %2106 = vmatpush.bf16.msra.mxu0 %v1445
        %2107 = vmatpush.bf16.msra.mxu0 %v1437
        %2108 = vmatpush.bf16.msra.mxu0 %v1429
        %2109 = vmatmul.bf16.gmra.mxu0 %v261
        %v2110 = vpop.f32.mrf.mxu0
        %v2111 = vadd.f32 %v2082, %v2110
        %v2112 = vpop.f32.mrf.mxu0
        %v2113 = vadd.f32 %v2084, %v2112
        %2114 = vmatmul.bf16.gmra.mxu0 %v265
        %v2115 = vpop.f32.mrf.mxu0
        %v2116 = vadd.f32 %v2087, %v2115
        %v2117 = vpop.f32.mrf.mxu0
        %v2118 = vadd.f32 %v2089, %v2117
        %2119 = vmatmul.bf16.gmra.mxu0 %v269
        %v2120 = vpop.f32.mrf.mxu0
        %v2121 = vadd.f32 %v2092, %v2120
        %v2122 = vpop.f32.mrf.mxu0
        %v2123 = vadd.f32 %v2094, %v2122
        %2124 = vmatmul.bf16.gmra.mxu0 %v273
        %v2125 = vpop.f32.mrf.mxu0
        %v2126 = vadd.f32 %v2097, %v2125
        %v2127 = vpop.f32.mrf.mxu0
        %v2128 = vadd.f32 %v2099, %v2127
        %2129 = vdwg.mxu0
        %2130 = vmatpush.bf16.msra.mxu0 %v1549
        %2131 = vmatpush.bf16.msra.mxu0 %v1541
        %2132 = vmatpush.bf16.msra.mxu0 %v1533
        %2133 = vmatpush.bf16.msra.mxu0 %v1525
        %2134 = vmatpush.bf16.msra.mxu0 %v1517
        %2135 = vmatpush.bf16.msra.mxu0 %v1509
        %2136 = vmatpush.bf16.msra.mxu0 %v1501
        %2137 = vmatpush.bf16.msra.mxu0 %v1493
        %2138 = vmatmul.bf16.gmra.mxu0 %v262
        %v2139 = vpop.f32.mrf.mxu0
        %v2140 = vadd.f32 %v2111, %v2139
        %v2141 = vpop.f32.mrf.mxu0
        %v2142 = vadd.f32 %v2113, %v2141
        %2143 = vmatmul.bf16.gmra.mxu0 %v266
        %v2144 = vpop.f32.mrf.mxu0
        %v2145 = vadd.f32 %v2116, %v2144
        %v2146 = vpop.f32.mrf.mxu0
        %v2147 = vadd.f32 %v2118, %v2146
        %2148 = vmatmul.bf16.gmra.mxu0 %v270
        %v2149 = vpop.f32.mrf.mxu0
        %v2150 = vadd.f32 %v2121, %v2149
        %v2151 = vpop.f32.mrf.mxu0
        %v2152 = vadd.f32 %v2123, %v2151
        %2153 = vmatmul.bf16.gmra.mxu0 %v274
        %v2154 = vpop.f32.mrf.mxu0
        %v2155 = vadd.f32 %v2126, %v2154
        %v2156 = vpop.f32.mrf.mxu0
        %v2157 = vadd.f32 %v2128, %v2156
        %2158 = vdwg.mxu0
        %2159 = vmatpush.bf16.msra.mxu0 %v1358
        %2160 = vmatpush.bf16.msra.mxu0 %v1350
        %2161 = vmatpush.bf16.msra.mxu0 %v1342
        %2162 = vmatpush.bf16.msra.mxu0 %v1334
        %2163 = vmatpush.bf16.msra.mxu0 %v1326
        %2164 = vmatpush.bf16.msra.mxu0 %v1318
        %2165 = vmatpush.bf16.msra.mxu0 %v1310
        %2166 = vmatpush.bf16.msra.mxu0 %v1302
        %2167 = vmatmul.bf16.gmra.mxu0 %v259
        %v2168 = vpop.f32.mrf.mxu0
        %v2169 = vadd.f32 0.0, %v2168
        %v2170 = vpop.f32.mrf.mxu0
        %v2171 = vadd.f32 0.0, %v2170
        %2172 = vmatmul.bf16.gmra.mxu0 %v263
        %v2173 = vpop.f32.mrf.mxu0
        %v2174 = vadd.f32 0.0, %v2173
        %v2175 = vpop.f32.mrf.mxu0
        %v2176 = vadd.f32 0.0, %v2175
        %2177 = vmatmul.bf16.gmra.mxu0 %v267
        %v2178 = vpop.f32.mrf.mxu0
        %v2179 = vadd.f32 0.0, %v2178
        %v2180 = vpop.f32.mrf.mxu0
        %v2181 = vadd.f32 0.0, %v2180
        %2182 = vmatmul.bf16.gmra.mxu0 %v271
        %v2183 = vpop.f32.mrf.mxu0
        %v2184 = vadd.f32 0.0, %v2183
        %v2185 = vpop.f32.mrf.mxu0
        %v2186 = vadd.f32 0.0, %v2185
        %2187 = vdwg.mxu0
        %2188 = vmatpush.bf16.msra.mxu0 %v1422
        %2189 = vmatpush.bf16.msra.mxu0 %v1414
        %2190 = vmatpush.bf16.msra.mxu0 %v1406
        %2191 = vmatpush.bf16.msra.mxu0 %v1398
        %2192 = vmatpush.bf16.msra.mxu0 %v1390
        %2193 = vmatpush.bf16.msra.mxu0 %v1382
        %2194 = vmatpush.bf16.msra.mxu0 %v1374
        %2195 = vmatpush.bf16.msra.mxu0 %v1366
        %2196 = vmatmul.bf16.gmra.mxu0 %v260
        %v2197 = vpop.f32.mrf.mxu0
        %v2198 = vadd.f32 %v2169, %v2197
        %v2199 = vpop.f32.mrf.mxu0
        %v2200 = vadd.f32 %v2171, %v2199
        %2201 = vmatmul.bf16.gmra.mxu0 %v264
        %v2202 = vpop.f32.mrf.mxu0
        %v2203 = vadd.f32 %v2174, %v2202
        %v2204 = vpop.f32.mrf.mxu0
        %v2205 = vadd.f32 %v2176, %v2204
        %2206 = vmatmul.bf16.gmra.mxu0 %v268
        %v2207 = vpop.f32.mrf.mxu0
        %v2208 = vadd.f32 %v2179, %v2207
        %v2209 = vpop.f32.mrf.mxu0
        %v2210 = vadd.f32 %v2181, %v2209
        %2211 = vmatmul.bf16.gmra.mxu0 %v272
        %v2212 = vpop.f32.mrf.mxu0
        %v2213 = vadd.f32 %v2184, %v2212
        %v2214 = vpop.f32.mrf.mxu0
        %v2215 = vadd.f32 %v2186, %v2214
        %2216 = vdwg.mxu0
        %2217 = vmatpush.bf16.msra.mxu0 %v1486
        %2218 = vmatpush.bf16.msra.mxu0 %v1478
        %2219 = vmatpush.bf16.msra.mxu0 %v1470
        %2220 = vmatpush.bf16.msra.mxu0 %v1462
        %2221 = vmatpush.bf16.msra.mxu0 %v1454
        %2222 = vmatpush.bf16.msra.mxu0 %v1446
        %2223 = vmatpush.bf16.msra.mxu0 %v1438
        %2224 = vmatpush.bf16.msra.mxu0 %v1430
        %2225 = vmatmul.bf16.gmra.mxu0 %v261
        %v2226 = vpop.f32.mrf.mxu0
        %v2227 = vadd.f32 %v2198, %v2226
        %v2228 = vpop.f32.mrf.mxu0
        %v2229 = vadd.f32 %v2200, %v2228
        %2230 = vmatmul.bf16.gmra.mxu0 %v265
        %v2231 = vpop.f32.mrf.mxu0
        %v2232 = vadd.f32 %v2203, %v2231
        %v2233 = vpop.f32.mrf.mxu0
        %v2234 = vadd.f32 %v2205, %v2233
        %2235 = vmatmul.bf16.gmra.mxu0 %v269
        %v2236 = vpop.f32.mrf.mxu0
        %v2237 = vadd.f32 %v2208, %v2236
        %v2238 = vpop.f32.mrf.mxu0
        %v2239 = vadd.f32 %v2210, %v2238
        %2240 = vmatmul.bf16.gmra.mxu0 %v273
        %v2241 = vpop.f32.mrf.mxu0
        %v2242 = vadd.f32 %v2213, %v2241
        %v2243 = vpop.f32.mrf.mxu0
        %v2244 = vadd.f32 %v2215, %v2243
        %2245 = vdwg.mxu0
        %2246 = vmatpush.bf16.msra.mxu0 %v1550
        %2247 = vmatpush.bf16.msra.mxu0 %v1542
        %2248 = vmatpush.bf16.msra.mxu0 %v1534
        %2249 = vmatpush.bf16.msra.mxu0 %v1526
        %2250 = vmatpush.bf16.msra.mxu0 %v1518
        %2251 = vmatpush.bf16.msra.mxu0 %v1510
        %2252 = vmatpush.bf16.msra.mxu0 %v1502
        %2253 = vmatpush.bf16.msra.mxu0 %v1494
        %2254 = vmatmul.bf16.gmra.mxu0 %v262
        %v2255 = vpop.f32.mrf.mxu0
        %v2256 = vadd.f32 %v2227, %v2255
        %v2257 = vpop.f32.mrf.mxu0
        %v2258 = vadd.f32 %v2229, %v2257
        %2259 = vmatmul.bf16.gmra.mxu0 %v266
        %v2260 = vpop.f32.mrf.mxu0
        %v2261 = vadd.f32 %v2232, %v2260
        %v2262 = vpop.f32.mrf.mxu0
        %v2263 = vadd.f32 %v2234, %v2262
        %2264 = vmatmul.bf16.gmra.mxu0 %v270
        %v2265 = vpop.f32.mrf.mxu0
        %v2266 = vadd.f32 %v2237, %v2265
        %v2267 = vpop.f32.mrf.mxu0
        %v2268 = vadd.f32 %v2239, %v2267
        %2269 = vmatmul.bf16.gmra.mxu0 %v274
        %v2270 = vpop.f32.mrf.mxu0
        %v2271 = vadd.f32 %v2242, %v2270
        %v2272 = vpop.f32.mrf.mxu0
        %v2273 = vadd.f32 %v2244, %v2272
        %2274 = vdwg.mxu0
        %2275 = vmatpush.bf16.msra.mxu0 %v1359
        %2276 = vmatpush.bf16.msra.mxu0 %v1351
        %2277 = vmatpush.bf16.msra.mxu0 %v1343
        %2278 = vmatpush.bf16.msra.mxu0 %v1335
        %2279 = vmatpush.bf16.msra.mxu0 %v1327
        %2280 = vmatpush.bf16.msra.mxu0 %v1319
        %2281 = vmatpush.bf16.msra.mxu0 %v1311
        %2282 = vmatpush.bf16.msra.mxu0 %v1303
        %2283 = vmatmul.bf16.gmra.mxu0 %v259
        %v2284 = vpop.f32.mrf.mxu0
        %v2285 = vadd.f32 0.0, %v2284
        %v2286 = vpop.f32.mrf.mxu0
        %v2287 = vadd.f32 0.0, %v2286
        %2288 = vmatmul.bf16.gmra.mxu0 %v263
        %v2289 = vpop.f32.mrf.mxu0
        %v2290 = vadd.f32 0.0, %v2289
        %v2291 = vpop.f32.mrf.mxu0
        %v2292 = vadd.f32 0.0, %v2291
        %2293 = vmatmul.bf16.gmra.mxu0 %v267
        %v2294 = vpop.f32.mrf.mxu0
        %v2295 = vadd.f32 0.0, %v2294
        %v2296 = vpop.f32.mrf.mxu0
        %v2297 = vadd.f32 0.0, %v2296
        %2298 = vmatmul.bf16.gmra.mxu0 %v271
        %v2299 = vpop.f32.mrf.mxu0
        %v2300 = vadd.f32 0.0, %v2299
        %v2301 = vpop.f32.mrf.mxu0
        %v2302 = vadd.f32 0.0, %v2301
        %2303 = vdwg.mxu0
        %2304 = vmatpush.bf16.msra.mxu0 %v1423
        %2305 = vmatpush.bf16.msra.mxu0 %v1415
        %2306 = vmatpush.bf16.msra.mxu0 %v1407
        %2307 = vmatpush.bf16.msra.mxu0 %v1399
        %2308 = vmatpush.bf16.msra.mxu0 %v1391
        %2309 = vmatpush.bf16.msra.mxu0 %v1383
        %2310 = vmatpush.bf16.msra.mxu0 %v1375
        %2311 = vmatpush.bf16.msra.mxu0 %v1367
        %2312 = vmatmul.bf16.gmra.mxu0 %v260
        %v2313 = vpop.f32.mrf.mxu0
        %v2314 = vadd.f32 %v2285, %v2313
        %v2315 = vpop.f32.mrf.mxu0
        %v2316 = vadd.f32 %v2287, %v2315
        %2317 = vmatmul.bf16.gmra.mxu0 %v264
        %v2318 = vpop.f32.mrf.mxu0
        %v2319 = vadd.f32 %v2290, %v2318
        %v2320 = vpop.f32.mrf.mxu0
        %v2321 = vadd.f32 %v2292, %v2320
        %2322 = vmatmul.bf16.gmra.mxu0 %v268
        %v2323 = vpop.f32.mrf.mxu0
        %v2324 = vadd.f32 %v2295, %v2323
        %v2325 = vpop.f32.mrf.mxu0
        %v2326 = vadd.f32 %v2297, %v2325
        %2327 = vmatmul.bf16.gmra.mxu0 %v272
        %v2328 = vpop.f32.mrf.mxu0
        %v2329 = vadd.f32 %v2300, %v2328
        %v2330 = vpop.f32.mrf.mxu0
        %v2331 = vadd.f32 %v2302, %v2330
        %2332 = vdwg.mxu0
        %2333 = vmatpush.bf16.msra.mxu0 %v1487
        %2334 = vmatpush.bf16.msra.mxu0 %v1479
        %2335 = vmatpush.bf16.msra.mxu0 %v1471
        %2336 = vmatpush.bf16.msra.mxu0 %v1463
        %2337 = vmatpush.bf16.msra.mxu0 %v1455
        %2338 = vmatpush.bf16.msra.mxu0 %v1447
        %2339 = vmatpush.bf16.msra.mxu0 %v1439
        %2340 = vmatpush.bf16.msra.mxu0 %v1431
        %2341 = vmatmul.bf16.gmra.mxu0 %v261
        %v2342 = vpop.f32.mrf.mxu0
        %v2343 = vadd.f32 %v2314, %v2342
        %v2344 = vpop.f32.mrf.mxu0
        %v2345 = vadd.f32 %v2316, %v2344
        %2346 = vmatmul.bf16.gmra.mxu0 %v265
        %v2347 = vpop.f32.mrf.mxu0
        %v2348 = vadd.f32 %v2319, %v2347
        %v2349 = vpop.f32.mrf.mxu0
        %v2350 = vadd.f32 %v2321, %v2349
        %2351 = vmatmul.bf16.gmra.mxu0 %v269
        %v2352 = vpop.f32.mrf.mxu0
        %v2353 = vadd.f32 %v2324, %v2352
        %v2354 = vpop.f32.mrf.mxu0
        %v2355 = vadd.f32 %v2326, %v2354
        %2356 = vmatmul.bf16.gmra.mxu0 %v273
        %v2357 = vpop.f32.mrf.mxu0
        %v2358 = vadd.f32 %v2329, %v2357
        %v2359 = vpop.f32.mrf.mxu0
        %v2360 = vadd.f32 %v2331, %v2359
        %2361 = vdwg.mxu0
        %2362 = vmatpush.bf16.msra.mxu0 %v1551
        %2363 = vmatpush.bf16.msra.mxu0 %v1543
        %2364 = vmatpush.bf16.msra.mxu0 %v1535
        %2365 = vmatpush.bf16.msra.mxu0 %v1527
        %2366 = vmatpush.bf16.msra.mxu0 %v1519
        %2367 = vmatpush.bf16.msra.mxu0 %v1511
        %2368 = vmatpush.bf16.msra.mxu0 %v1503
        %2369 = vmatpush.bf16.msra.mxu0 %v1495
        %2370 = vmatmul.bf16.gmra.mxu0 %v262
        %v2371 = vpop.f32.mrf.mxu0
        %v2372 = vadd.f32 %v2343, %v2371
        %v2373 = vpop.f32.mrf.mxu0
        %v2374 = vadd.f32 %v2345, %v2373
        %2375 = vmatmul.bf16.gmra.mxu0 %v266
        %v2376 = vpop.f32.mrf.mxu0
        %v2377 = vadd.f32 %v2348, %v2376
        %v2378 = vpop.f32.mrf.mxu0
        %v2379 = vadd.f32 %v2350, %v2378
        %2380 = vmatmul.bf16.gmra.mxu0 %v270
        %v2381 = vpop.f32.mrf.mxu0
        %v2382 = vadd.f32 %v2353, %v2381
        %v2383 = vpop.f32.mrf.mxu0
        %v2384 = vadd.f32 %v2355, %v2383
        %2385 = vmatmul.bf16.gmra.mxu0 %v274
        %v2386 = vpop.f32.mrf.mxu0
        %v2387 = vadd.f32 %v2358, %v2386
        %v2388 = vpop.f32.mrf.mxu0
        %v2389 = vadd.f32 %v2360, %v2388
        %2390 = vdwg.mxu0
        %2391 = vmatpush.bf16.msra.mxu0 %v1360
        %2392 = vmatpush.bf16.msra.mxu0 %v1352
        %2393 = vmatpush.bf16.msra.mxu0 %v1344
        %2394 = vmatpush.bf16.msra.mxu0 %v1336
        %2395 = vmatpush.bf16.msra.mxu0 %v1328
        %2396 = vmatpush.bf16.msra.mxu0 %v1320
        %2397 = vmatpush.bf16.msra.mxu0 %v1312
        %2398 = vmatpush.bf16.msra.mxu0 %v1304
        %2399 = vmatmul.bf16.gmra.mxu0 %v259
        %v2400 = vpop.f32.mrf.mxu0
        %v2401 = vadd.f32 0.0, %v2400
        %v2402 = vpop.f32.mrf.mxu0
        %v2403 = vadd.f32 0.0, %v2402
        %2404 = vmatmul.bf16.gmra.mxu0 %v263
        %v2405 = vpop.f32.mrf.mxu0
        %v2406 = vadd.f32 0.0, %v2405
        %v2407 = vpop.f32.mrf.mxu0
        %v2408 = vadd.f32 0.0, %v2407
        %2409 = vmatmul.bf16.gmra.mxu0 %v267
        %v2410 = vpop.f32.mrf.mxu0
        %v2411 = vadd.f32 0.0, %v2410
        %v2412 = vpop.f32.mrf.mxu0
        %v2413 = vadd.f32 0.0, %v2412
        %2414 = vmatmul.bf16.gmra.mxu0 %v271
        %v2415 = vpop.f32.mrf.mxu0
        %v2416 = vadd.f32 0.0, %v2415
        %v2417 = vpop.f32.mrf.mxu0
        %v2418 = vadd.f32 0.0, %v2417
        %2419 = vdwg.mxu0
        %2420 = vmatpush.bf16.msra.mxu0 %v1424
        %2421 = vmatpush.bf16.msra.mxu0 %v1416
        %2422 = vmatpush.bf16.msra.mxu0 %v1408
        %2423 = vmatpush.bf16.msra.mxu0 %v1400
        %2424 = vmatpush.bf16.msra.mxu0 %v1392
        %2425 = vmatpush.bf16.msra.mxu0 %v1384
        %2426 = vmatpush.bf16.msra.mxu0 %v1376
        %2427 = vmatpush.bf16.msra.mxu0 %v1368
        %2428 = vmatmul.bf16.gmra.mxu0 %v260
        %v2429 = vpop.f32.mrf.mxu0
        %v2430 = vadd.f32 %v2401, %v2429
        %v2431 = vpop.f32.mrf.mxu0
        %v2432 = vadd.f32 %v2403, %v2431
        %2433 = vmatmul.bf16.gmra.mxu0 %v264
        %v2434 = vpop.f32.mrf.mxu0
        %v2435 = vadd.f32 %v2406, %v2434
        %v2436 = vpop.f32.mrf.mxu0
        %v2437 = vadd.f32 %v2408, %v2436
        %2438 = vmatmul.bf16.gmra.mxu0 %v268
        %v2439 = vpop.f32.mrf.mxu0
        %v2440 = vadd.f32 %v2411, %v2439
        %v2441 = vpop.f32.mrf.mxu0
        %v2442 = vadd.f32 %v2413, %v2441
        %2443 = vmatmul.bf16.gmra.mxu0 %v272
        %v2444 = vpop.f32.mrf.mxu0
        %v2445 = vadd.f32 %v2416, %v2444
        %v2446 = vpop.f32.mrf.mxu0
        %v2447 = vadd.f32 %v2418, %v2446
        %2448 = vdwg.mxu0
        %2449 = vmatpush.bf16.msra.mxu0 %v1488
        %2450 = vmatpush.bf16.msra.mxu0 %v1480
        %2451 = vmatpush.bf16.msra.mxu0 %v1472
        %2452 = vmatpush.bf16.msra.mxu0 %v1464
        %2453 = vmatpush.bf16.msra.mxu0 %v1456
        %2454 = vmatpush.bf16.msra.mxu0 %v1448
        %2455 = vmatpush.bf16.msra.mxu0 %v1440
        %2456 = vmatpush.bf16.msra.mxu0 %v1432
        %2457 = vmatmul.bf16.gmra.mxu0 %v261
        %v2458 = vpop.f32.mrf.mxu0
        %v2459 = vadd.f32 %v2430, %v2458
        %v2460 = vpop.f32.mrf.mxu0
        %v2461 = vadd.f32 %v2432, %v2460
        %2462 = vmatmul.bf16.gmra.mxu0 %v265
        %v2463 = vpop.f32.mrf.mxu0
        %v2464 = vadd.f32 %v2435, %v2463
        %v2465 = vpop.f32.mrf.mxu0
        %v2466 = vadd.f32 %v2437, %v2465
        %2467 = vmatmul.bf16.gmra.mxu0 %v269
        %v2468 = vpop.f32.mrf.mxu0
        %v2469 = vadd.f32 %v2440, %v2468
        %v2470 = vpop.f32.mrf.mxu0
        %v2471 = vadd.f32 %v2442, %v2470
        %2472 = vmatmul.bf16.gmra.mxu0 %v273
        %v2473 = vpop.f32.mrf.mxu0
        %v2474 = vadd.f32 %v2445, %v2473
        %v2475 = vpop.f32.mrf.mxu0
        %v2476 = vadd.f32 %v2447, %v2475
        %2477 = vdwg.mxu0
        %2478 = vmatpush.bf16.msra.mxu0 %v1552
        %2479 = vmatpush.bf16.msra.mxu0 %v1544
        %2480 = vmatpush.bf16.msra.mxu0 %v1536
        %2481 = vmatpush.bf16.msra.mxu0 %v1528
        %2482 = vmatpush.bf16.msra.mxu0 %v1520
        %2483 = vmatpush.bf16.msra.mxu0 %v1512
        %2484 = vmatpush.bf16.msra.mxu0 %v1504
        %2485 = vmatpush.bf16.msra.mxu0 %v1496
        %2486 = vmatmul.bf16.gmra.mxu0 %v262
        %v2487 = vpop.f32.mrf.mxu0
        %v2488 = vadd.f32 %v2459, %v2487
        %v2489 = vpop.f32.mrf.mxu0
        %v2490 = vadd.f32 %v2461, %v2489
        %2491 = vmatmul.bf16.gmra.mxu0 %v266
        %v2492 = vpop.f32.mrf.mxu0
        %v2493 = vadd.f32 %v2464, %v2492
        %v2494 = vpop.f32.mrf.mxu0
        %v2495 = vadd.f32 %v2466, %v2494
        %2496 = vmatmul.bf16.gmra.mxu0 %v270
        %v2497 = vpop.f32.mrf.mxu0
        %v2498 = vadd.f32 %v2469, %v2497
        %v2499 = vpop.f32.mrf.mxu0
        %v2500 = vadd.f32 %v2471, %v2499
        %2501 = vmatmul.bf16.gmra.mxu0 %v274
        %v2502 = vpop.f32.mrf.mxu0
        %v2503 = vadd.f32 %v2474, %v2502
        %v2504 = vpop.f32.mrf.mxu0
        %v2505 = vadd.f32 %v2476, %v2504
        %2506 = vdwg.mxu0
        %2507 = vmatpush.bf16.msra.mxu0 %v1361
        %2508 = vmatpush.bf16.msra.mxu0 %v1353
        %2509 = vmatpush.bf16.msra.mxu0 %v1345
        %2510 = vmatpush.bf16.msra.mxu0 %v1337
        %2511 = vmatpush.bf16.msra.mxu0 %v1329
        %2512 = vmatpush.bf16.msra.mxu0 %v1321
        %2513 = vmatpush.bf16.msra.mxu0 %v1313
        %2514 = vmatpush.bf16.msra.mxu0 %v1305
        %2515 = vmatmul.bf16.gmra.mxu0 %v259
        %v2516 = vpop.f32.mrf.mxu0
        %v2517 = vadd.f32 0.0, %v2516
        %v2518 = vpop.f32.mrf.mxu0
        %v2519 = vadd.f32 0.0, %v2518
        %2520 = vmatmul.bf16.gmra.mxu0 %v263
        %v2521 = vpop.f32.mrf.mxu0
        %v2522 = vadd.f32 0.0, %v2521
        %v2523 = vpop.f32.mrf.mxu0
        %v2524 = vadd.f32 0.0, %v2523
        %2525 = vmatmul.bf16.gmra.mxu0 %v267
        %v2526 = vpop.f32.mrf.mxu0
        %v2527 = vadd.f32 0.0, %v2526
        %v2528 = vpop.f32.mrf.mxu0
        %v2529 = vadd.f32 0.0, %v2528
        %2530 = vmatmul.bf16.gmra.mxu0 %v271
        %v2531 = vpop.f32.mrf.mxu0
        %v2532 = vadd.f32 0.0, %v2531
        %v2533 = vpop.f32.mrf.mxu0
        %v2534 = vadd.f32 0.0, %v2533
        %2535 = vdwg.mxu0
        %2536 = vmatpush.bf16.msra.mxu0 %v1425
        %2537 = vmatpush.bf16.msra.mxu0 %v1417
        %2538 = vmatpush.bf16.msra.mxu0 %v1409
        %2539 = vmatpush.bf16.msra.mxu0 %v1401
        %2540 = vmatpush.bf16.msra.mxu0 %v1393
        %2541 = vmatpush.bf16.msra.mxu0 %v1385
        %2542 = vmatpush.bf16.msra.mxu0 %v1377
        %2543 = vmatpush.bf16.msra.mxu0 %v1369
        %2544 = vmatmul.bf16.gmra.mxu0 %v260
        %v2545 = vpop.f32.mrf.mxu0
        %v2546 = vadd.f32 %v2517, %v2545
        %v2547 = vpop.f32.mrf.mxu0
        %v2548 = vadd.f32 %v2519, %v2547
        %2549 = vmatmul.bf16.gmra.mxu0 %v264
        %v2550 = vpop.f32.mrf.mxu0
        %v2551 = vadd.f32 %v2522, %v2550
        %v2552 = vpop.f32.mrf.mxu0
        %v2553 = vadd.f32 %v2524, %v2552
        %2554 = vmatmul.bf16.gmra.mxu0 %v268
        %v2555 = vpop.f32.mrf.mxu0
        %v2556 = vadd.f32 %v2527, %v2555
        %v2557 = vpop.f32.mrf.mxu0
        %v2558 = vadd.f32 %v2529, %v2557
        %2559 = vmatmul.bf16.gmra.mxu0 %v272
        %v2560 = vpop.f32.mrf.mxu0
        %v2561 = vadd.f32 %v2532, %v2560
        %v2562 = vpop.f32.mrf.mxu0
        %v2563 = vadd.f32 %v2534, %v2562
        %2564 = vdwg.mxu0
        %2565 = vmatpush.bf16.msra.mxu0 %v1489
        %2566 = vmatpush.bf16.msra.mxu0 %v1481
        %2567 = vmatpush.bf16.msra.mxu0 %v1473
        %2568 = vmatpush.bf16.msra.mxu0 %v1465
        %2569 = vmatpush.bf16.msra.mxu0 %v1457
        %2570 = vmatpush.bf16.msra.mxu0 %v1449
        %2571 = vmatpush.bf16.msra.mxu0 %v1441
        %2572 = vmatpush.bf16.msra.mxu0 %v1433
        %2573 = vmatmul.bf16.gmra.mxu0 %v261
        %v2574 = vpop.f32.mrf.mxu0
        %v2575 = vadd.f32 %v2546, %v2574
        %v2576 = vpop.f32.mrf.mxu0
        %v2577 = vadd.f32 %v2548, %v2576
        %2578 = vmatmul.bf16.gmra.mxu0 %v265
        %v2579 = vpop.f32.mrf.mxu0
        %v2580 = vadd.f32 %v2551, %v2579
        %v2581 = vpop.f32.mrf.mxu0
        %v2582 = vadd.f32 %v2553, %v2581
        %2583 = vmatmul.bf16.gmra.mxu0 %v269
        %v2584 = vpop.f32.mrf.mxu0
        %v2585 = vadd.f32 %v2556, %v2584
        %v2586 = vpop.f32.mrf.mxu0
        %v2587 = vadd.f32 %v2558, %v2586
        %2588 = vmatmul.bf16.gmra.mxu0 %v273
        %v2589 = vpop.f32.mrf.mxu0
        %v2590 = vadd.f32 %v2561, %v2589
        %v2591 = vpop.f32.mrf.mxu0
        %v2592 = vadd.f32 %v2563, %v2591
        %2593 = vdwg.mxu0
        %2594 = vmatpush.bf16.msra.mxu0 %v1553
        %2595 = vmatpush.bf16.msra.mxu0 %v1545
        %2596 = vmatpush.bf16.msra.mxu0 %v1537
        %2597 = vmatpush.bf16.msra.mxu0 %v1529
        %2598 = vmatpush.bf16.msra.mxu0 %v1521
        %2599 = vmatpush.bf16.msra.mxu0 %v1513
        %2600 = vmatpush.bf16.msra.mxu0 %v1505
        %2601 = vmatpush.bf16.msra.mxu0 %v1497
        %2602 = vmatmul.bf16.gmra.mxu0 %v262
        %v2603 = vpop.f32.mrf.mxu0
        %v2604 = vadd.f32 %v2575, %v2603
        %v2605 = vpop.f32.mrf.mxu0
        %v2606 = vadd.f32 %v2577, %v2605
        %2607 = vmatmul.bf16.gmra.mxu0 %v266
        %v2608 = vpop.f32.mrf.mxu0
        %v2609 = vadd.f32 %v2580, %v2608
        %v2610 = vpop.f32.mrf.mxu0
        %v2611 = vadd.f32 %v2582, %v2610
        %2612 = vmatmul.bf16.gmra.mxu0 %v270
        %v2613 = vpop.f32.mrf.mxu0
        %v2614 = vadd.f32 %v2585, %v2613
        %v2615 = vpop.f32.mrf.mxu0
        %v2616 = vadd.f32 %v2587, %v2615
        %2617 = vmatmul.bf16.gmra.mxu0 %v274
        %v2618 = vpop.f32.mrf.mxu0
        %v2619 = vadd.f32 %v2590, %v2618
        %v2620 = vpop.f32.mrf.mxu0
        %v2621 = vadd.f32 %v2592, %v2620
        %2622 = vdwg.mxu0
        %2623 = vmatpush.bf16.msra.mxu0 %v1362
        %2624 = vmatpush.bf16.msra.mxu0 %v1354
        %2625 = vmatpush.bf16.msra.mxu0 %v1346
        %2626 = vmatpush.bf16.msra.mxu0 %v1338
        %2627 = vmatpush.bf16.msra.mxu0 %v1330
        %2628 = vmatpush.bf16.msra.mxu0 %v1322
        %2629 = vmatpush.bf16.msra.mxu0 %v1314
        %2630 = vmatpush.bf16.msra.mxu0 %v1306
        %2631 = vmatmul.bf16.gmra.mxu0 %v259
        %v2632 = vpop.f32.mrf.mxu0
        %v2633 = vadd.f32 0.0, %v2632
        %v2634 = vpop.f32.mrf.mxu0
        %v2635 = vadd.f32 0.0, %v2634
        %2636 = vmatmul.bf16.gmra.mxu0 %v263
        %v2637 = vpop.f32.mrf.mxu0
        %v2638 = vadd.f32 0.0, %v2637
        %v2639 = vpop.f32.mrf.mxu0
        %v2640 = vadd.f32 0.0, %v2639
        %2641 = vmatmul.bf16.gmra.mxu0 %v267
        %v2642 = vpop.f32.mrf.mxu0
        %v2643 = vadd.f32 0.0, %v2642
        %v2644 = vpop.f32.mrf.mxu0
        %v2645 = vadd.f32 0.0, %v2644
        %2646 = vmatmul.bf16.gmra.mxu0 %v271
        %v2647 = vpop.f32.mrf.mxu0
        %v2648 = vadd.f32 0.0, %v2647
        %v2649 = vpop.f32.mrf.mxu0
        %v2650 = vadd.f32 0.0, %v2649
        %2651 = vdwg.mxu0
        %2652 = vmatpush.bf16.msra.mxu0 %v1426
        %2653 = vmatpush.bf16.msra.mxu0 %v1418
        %2654 = vmatpush.bf16.msra.mxu0 %v1410
        %2655 = vmatpush.bf16.msra.mxu0 %v1402
        %2656 = vmatpush.bf16.msra.mxu0 %v1394
        %2657 = vmatpush.bf16.msra.mxu0 %v1386
        %2658 = vmatpush.bf16.msra.mxu0 %v1378
        %2659 = vmatpush.bf16.msra.mxu0 %v1370
        %2660 = vmatmul.bf16.gmra.mxu0 %v260
        %v2661 = vpop.f32.mrf.mxu0
        %v2662 = vadd.f32 %v2633, %v2661
        %v2663 = vpop.f32.mrf.mxu0
        %v2664 = vadd.f32 %v2635, %v2663
        %2665 = vmatmul.bf16.gmra.mxu0 %v264
        %v2666 = vpop.f32.mrf.mxu0
        %v2667 = vadd.f32 %v2638, %v2666
        %v2668 = vpop.f32.mrf.mxu0
        %v2669 = vadd.f32 %v2640, %v2668
        %2670 = vmatmul.bf16.gmra.mxu0 %v268
        %v2671 = vpop.f32.mrf.mxu0
        %v2672 = vadd.f32 %v2643, %v2671
        %v2673 = vpop.f32.mrf.mxu0
        %v2674 = vadd.f32 %v2645, %v2673
        %2675 = vmatmul.bf16.gmra.mxu0 %v272
        %v2676 = vpop.f32.mrf.mxu0
        %v2677 = vadd.f32 %v2648, %v2676
        %v2678 = vpop.f32.mrf.mxu0
        %v2679 = vadd.f32 %v2650, %v2678
        %2680 = vdwg.mxu0
        %2681 = vmatpush.bf16.msra.mxu0 %v1490
        %2682 = vmatpush.bf16.msra.mxu0 %v1482
        %2683 = vmatpush.bf16.msra.mxu0 %v1474
        %2684 = vmatpush.bf16.msra.mxu0 %v1466
        %2685 = vmatpush.bf16.msra.mxu0 %v1458
        %2686 = vmatpush.bf16.msra.mxu0 %v1450
        %2687 = vmatpush.bf16.msra.mxu0 %v1442
        %2688 = vmatpush.bf16.msra.mxu0 %v1434
        %2689 = vmatmul.bf16.gmra.mxu0 %v261
        %v2690 = vpop.f32.mrf.mxu0
        %v2691 = vadd.f32 %v2662, %v2690
        %v2692 = vpop.f32.mrf.mxu0
        %v2693 = vadd.f32 %v2664, %v2692
        %2694 = vmatmul.bf16.gmra.mxu0 %v265
        %v2695 = vpop.f32.mrf.mxu0
        %v2696 = vadd.f32 %v2667, %v2695
        %v2697 = vpop.f32.mrf.mxu0
        %v2698 = vadd.f32 %v2669, %v2697
        %2699 = vmatmul.bf16.gmra.mxu0 %v269
        %v2700 = vpop.f32.mrf.mxu0
        %v2701 = vadd.f32 %v2672, %v2700
        %v2702 = vpop.f32.mrf.mxu0
        %v2703 = vadd.f32 %v2674, %v2702
        %2704 = vmatmul.bf16.gmra.mxu0 %v273
        %v2705 = vpop.f32.mrf.mxu0
        %v2706 = vadd.f32 %v2677, %v2705
        %v2707 = vpop.f32.mrf.mxu0
        %v2708 = vadd.f32 %v2679, %v2707
        %2709 = vdwg.mxu0
        %2710 = vmatpush.bf16.msra.mxu0 %v1554
        %2711 = vmatpush.bf16.msra.mxu0 %v1546
        %2712 = vmatpush.bf16.msra.mxu0 %v1538
        %2713 = vmatpush.bf16.msra.mxu0 %v1530
        %2714 = vmatpush.bf16.msra.mxu0 %v1522
        %2715 = vmatpush.bf16.msra.mxu0 %v1514
        %2716 = vmatpush.bf16.msra.mxu0 %v1506
        %2717 = vmatpush.bf16.msra.mxu0 %v1498
        %2718 = vmatmul.bf16.gmra.mxu0 %v262
        %v2719 = vpop.f32.mrf.mxu0
        %v2720 = vadd.f32 %v2691, %v2719
        %v2721 = vpop.f32.mrf.mxu0
        %v2722 = vadd.f32 %v2693, %v2721
        %2723 = vmatmul.bf16.gmra.mxu0 %v266
        %v2724 = vpop.f32.mrf.mxu0
        %v2725 = vadd.f32 %v2696, %v2724
        %v2726 = vpop.f32.mrf.mxu0
        %v2727 = vadd.f32 %v2698, %v2726
        %2728 = vmatmul.bf16.gmra.mxu0 %v270
        %v2729 = vpop.f32.mrf.mxu0
        %v2730 = vadd.f32 %v2701, %v2729
        %v2731 = vpop.f32.mrf.mxu0
        %v2732 = vadd.f32 %v2703, %v2731
        %2733 = vmatmul.bf16.gmra.mxu0 %v274
        %v2734 = vpop.f32.mrf.mxu0
        %v2735 = vadd.f32 %v2706, %v2734
        %v2736 = vpop.f32.mrf.mxu0
        %v2737 = vadd.f32 %v2708, %v2736
        %2738 = vdwg.mxu0
        %v2739 = vmul.f32 %v1908, 4.0
        %v2740 = vmul.f32 %v2024, 4.0
        %v2741 = vmul.f32 %v2140, 4.0
        %v2742 = vmul.f32 %v2256, 4.0
        %v2743 = vmul.f32 %v2372, 4.0
        %v2744 = vmul.f32 %v2488, 4.0
        %v2745 = vmul.f32 %v2604, 4.0
        %v2746 = vmul.f32 %v2720, 4.0
        %v2747 = vmul.f32 %v1910, 4.0
        %v2748 = vmul.f32 %v2026, 4.0
        %v2749 = vmul.f32 %v2142, 4.0
        %v2750 = vmul.f32 %v2258, 4.0
        %v2751 = vmul.f32 %v2374, 4.0
        %v2752 = vmul.f32 %v2490, 4.0
        %v2753 = vmul.f32 %v2606, 4.0
        %v2754 = vmul.f32 %v2722, 4.0
        %v2755 = vmul.f32 %v1913, 4.0
        %v2756 = vmul.f32 %v2029, 4.0
        %v2757 = vmul.f32 %v2145, 4.0
        %v2758 = vmul.f32 %v2261, 4.0
        %v2759 = vmul.f32 %v2377, 4.0
        %v2760 = vmul.f32 %v2493, 4.0
        %v2761 = vmul.f32 %v2609, 4.0
        %v2762 = vmul.f32 %v2725, 4.0
        %v2763 = vmul.f32 %v1915, 4.0
        %v2764 = vmul.f32 %v2031, 4.0
        %v2765 = vmul.f32 %v2147, 4.0
        %v2766 = vmul.f32 %v2263, 4.0
        %v2767 = vmul.f32 %v2379, 4.0
        %v2768 = vmul.f32 %v2495, 4.0
        %v2769 = vmul.f32 %v2611, 4.0
        %v2770 = vmul.f32 %v2727, 4.0
        %v2771 = vmul.f32 %v1918, 4.0
        %v2772 = vmul.f32 %v2034, 4.0
        %v2773 = vmul.f32 %v2150, 4.0
        %v2774 = vmul.f32 %v2266, 4.0
        %v2775 = vmul.f32 %v2382, 4.0
        %v2776 = vmul.f32 %v2498, 4.0
        %v2777 = vmul.f32 %v2614, 4.0
        %v2778 = vmul.f32 %v2730, 4.0
        %v2779 = vmul.f32 %v1920, 4.0
        %v2780 = vmul.f32 %v2036, 4.0
        %v2781 = vmul.f32 %v2152, 4.0
        %v2782 = vmul.f32 %v2268, 4.0
        %v2783 = vmul.f32 %v2384, 4.0
        %v2784 = vmul.f32 %v2500, 4.0
        %v2785 = vmul.f32 %v2616, 4.0
        %v2786 = vmul.f32 %v2732, 4.0
        %v2787 = vmul.f32 %v1923, 4.0
        %v2788 = vmul.f32 %v2039, 4.0
        %v2789 = vmul.f32 %v2155, 4.0
        %v2790 = vmul.f32 %v2271, 4.0
        %v2791 = vmul.f32 %v2387, 4.0
        %v2792 = vmul.f32 %v2503, 4.0
        %v2793 = vmul.f32 %v2619, 4.0
        %v2794 = vmul.f32 %v2735, 4.0
        %v2795 = vmul.f32 %v1925, 4.0
        %v2796 = vmul.f32 %v2041, 4.0
        %v2797 = vmul.f32 %v2157, 4.0
        %v2798 = vmul.f32 %v2273, 4.0
        %v2799 = vmul.f32 %v2389, 4.0
        %v2800 = vmul.f32 %v2505, 4.0
        %v2801 = vmul.f32 %v2621, 4.0
        %v2802 = vmul.f32 %v2737, 4.0
        %v2803 = vld [vmem:[#allocation6] sm:$0xff]
        %v2805 = vperm.slane %v2803, 0
        %v2806 = vperm.slane %v2803, 1
        %v2807 = vperm.slane %v2803, 2
        %v2808 = vperm.slane %v2803, 3
        %v2809 = vperm.slane %v2803, 4
        %v2810 = vperm.slane %v2803, 5
        %v2811 = vperm.slane %v2803, 6
        %v2812 = vperm.slane %v2803, 7
        %v2821 = vadd.f32 %v2739, %v2805
        %v2822 = vadd.f32 %v2740, %v2806
        %v2823 = vadd.f32 %v2741, %v2807
        %v2824 = vadd.f32 %v2742, %v2808
        %v2825 = vadd.f32 %v2743, %v2809
        %v2826 = vadd.f32 %v2744, %v2810
        %v2827 = vadd.f32 %v2745, %v2811
        %v2828 = vadd.f32 %v2746, %v2812
        %v2829 = vadd.f32 %v2747, %v2805
        %v2830 = vadd.f32 %v2748, %v2806
        %v2831 = vadd.f32 %v2749, %v2807
        %v2832 = vadd.f32 %v2750, %v2808
        %v2833 = vadd.f32 %v2751, %v2809
        %v2834 = vadd.f32 %v2752, %v2810
        %v2835 = vadd.f32 %v2753, %v2811
        %v2836 = vadd.f32 %v2754, %v2812
        %v2837 = vadd.f32 %v2755, %v2805
        %v2838 = vadd.f32 %v2756, %v2806
        %v2839 = vadd.f32 %v2757, %v2807
        %v2840 = vadd.f32 %v2758, %v2808
        %v2841 = vadd.f32 %v2759, %v2809
        %v2842 = vadd.f32 %v2760, %v2810
        %v2843 = vadd.f32 %v2761, %v2811
        %v2844 = vadd.f32 %v2762, %v2812
        %v2845 = vadd.f32 %v2763, %v2805
        %v2846 = vadd.f32 %v2764, %v2806
        %v2847 = vadd.f32 %v2765, %v2807
        %v2848 = vadd.f32 %v2766, %v2808
        %v2849 = vadd.f32 %v2767, %v2809
        %v2850 = vadd.f32 %v2768, %v2810
        %v2851 = vadd.f32 %v2769, %v2811
        %v2852 = vadd.f32 %v2770, %v2812
        %v2853 = vadd.f32 %v2771, %v2805
        %v2854 = vadd.f32 %v2772, %v2806
        %v2855 = vadd.f32 %v2773, %v2807
        %v2856 = vadd.f32 %v2774, %v2808
        %v2857 = vadd.f32 %v2775, %v2809
        %v2858 = vadd.f32 %v2776, %v2810
        %v2859 = vadd.f32 %v2777, %v2811
        %v2860 = vadd.f32 %v2778, %v2812
        %v2861 = vadd.f32 %v2779, %v2805
        %v2862 = vadd.f32 %v2780, %v2806
        %v2863 = vadd.f32 %v2781, %v2807
        %v2864 = vadd.f32 %v2782, %v2808
        %v2865 = vadd.f32 %v2783, %v2809
        %v2866 = vadd.f32 %v2784, %v2810
        %v2867 = vadd.f32 %v2785, %v2811
        %v2868 = vadd.f32 %v2786, %v2812
        %v2869 = vadd.f32 %v2787, %v2805
        %v2870 = vadd.f32 %v2788, %v2806
        %v2871 = vadd.f32 %v2789, %v2807
        %v2872 = vadd.f32 %v2790, %v2808
        %v2873 = vadd.f32 %v2791, %v2809
        %v2874 = vadd.f32 %v2792, %v2810
        %v2875 = vadd.f32 %v2793, %v2811
        %v2876 = vadd.f32 %v2794, %v2812
        %v2877 = vadd.f32 %v2795, %v2805
        %v2878 = vadd.f32 %v2796, %v2806
        %v2879 = vadd.f32 %v2797, %v2807
        %v2880 = vadd.f32 %v2798, %v2808
        %v2881 = vadd.f32 %v2799, %v2809
        %v2882 = vadd.f32 %v2800, %v2810
        %v2883 = vadd.f32 %v2801, %v2811
        %v2884 = vadd.f32 %v2802, %v2812
        %v2885 = vmax.f32 %v2821, -10.0
        %v2886 = vmax.f32 %v2822, -10.0
        %v2887 = vmax.f32 %v2823, -10.0
        %v2888 = vmax.f32 %v2824, -10.0
        %v2889 = vmax.f32 %v2825, -10.0
        %v2890 = vmax.f32 %v2826, -10.0
        %v2891 = vmax.f32 %v2827, -10.0
        %v2892 = vmax.f32 %v2828, -10.0
        %v2893 = vmax.f32 %v2829, -10.0
        %v2894 = vmax.f32 %v2830, -10.0
        %v2895 = vmax.f32 %v2831, -10.0
        %v2896 = vmax.f32 %v2832, -10.0
        %v2897 = vmax.f32 %v2833, -10.0
        %v2898 = vmax.f32 %v2834, -10.0
        %v2899 = vmax.f32 %v2835, -10.0
        %v2900 = vmax.f32 %v2836, -10.0
        %v2901 = vmax.f32 %v2837, -10.0
        %v2902 = vmax.f32 %v2838, -10.0
        %v2903 = vmax.f32 %v2839, -10.0
        %v2904 = vmax.f32 %v2840, -10.0
        %v2905 = vmax.f32 %v2841, -10.0
        %v2906 = vmax.f32 %v2842, -10.0
        %v2907 = vmax.f32 %v2843, -10.0
        %v2908 = vmax.f32 %v2844, -10.0
        %v2909 = vmax.f32 %v2845, -10.0
        %v2910 = vmax.f32 %v2846, -10.0
        %v2911 = vmax.f32 %v2847, -10.0
        %v2912 = vmax.f32 %v2848, -10.0
        %v2913 = vmax.f32 %v2849, -10.0
        %v2914 = vmax.f32 %v2850, -10.0
        %v2915 = vmax.f32 %v2851, -10.0
        %v2916 = vmax.f32 %v2852, -10.0
        %v2917 = vmax.f32 %v2853, -10.0
        %v2918 = vmax.f32 %v2854, -10.0
        %v2919 = vmax.f32 %v2855, -10.0
        %v2920 = vmax.f32 %v2856, -10.0
        %v2921 = vmax.f32 %v2857, -10.0
        %v2922 = vmax.f32 %v2858, -10.0
        %v2923 = vmax.f32 %v2859, -10.0
        %v2924 = vmax.f32 %v2860, -10.0
        %v2925 = vmax.f32 %v2861, -10.0
        %v2926 = vmax.f32 %v2862, -10.0
        %v2927 = vmax.f32 %v2863, -10.0
        %v2928 = vmax.f32 %v2864, -10.0
        %v2929 = vmax.f32 %v2865, -10.0
        %v2930 = vmax.f32 %v2866, -10.0
        %v2931 = vmax.f32 %v2867, -10.0
        %v2932 = vmax.f32 %v2868, -10.0
        %v2933 = vmax.f32 %v2869, -10.0
        %v2934 = vmax.f32 %v2870, -10.0
        %v2935 = vmax.f32 %v2871, -10.0
        %v2936 = vmax.f32 %v2872, -10.0
        %v2937 = vmax.f32 %v2873, -10.0
        %v2938 = vmax.f32 %v2874, -10.0
        %v2939 = vmax.f32 %v2875, -10.0
        %v2940 = vmax.f32 %v2876, -10.0
        %v2941 = vmax.f32 %v2877, -10.0
        %v2942 = vmax.f32 %v2878, -10.0
        %v2943 = vmax.f32 %v2879, -10.0
        %v2944 = vmax.f32 %v2880, -10.0
        %v2945 = vmax.f32 %v2881, -10.0
        %v2946 = vmax.f32 %v2882, -10.0
        %v2947 = vmax.f32 %v2883, -10.0
        %v2948 = vmax.f32 %v2884, -10.0
        %v2949 = vmin.f32 %v2885, 10.0
        %v2950 = vmin.f32 %v2886, 10.0
        %v2951 = vmin.f32 %v2887, 10.0
        %v2952 = vmin.f32 %v2888, 10.0
        %v2953 = vmin.f32 %v2889, 10.0
        %v2954 = vmin.f32 %v2890, 10.0
        %v2955 = vmin.f32 %v2891, 10.0
        %v2956 = vmin.f32 %v2892, 10.0
        %v2957 = vmin.f32 %v2893, 10.0
        %v2958 = vmin.f32 %v2894, 10.0
        %v2959 = vmin.f32 %v2895, 10.0
        %v2960 = vmin.f32 %v2896, 10.0
        %v2961 = vmin.f32 %v2897, 10.0
        %v2962 = vmin.f32 %v2898, 10.0
        %v2963 = vmin.f32 %v2899, 10.0
        %v2964 = vmin.f32 %v2900, 10.0
        %v2965 = vmin.f32 %v2901, 10.0
        %v2966 = vmin.f32 %v2902, 10.0
        %v2967 = vmin.f32 %v2903, 10.0
        %v2968 = vmin.f32 %v2904, 10.0
        %v2969 = vmin.f32 %v2905, 10.0
        %v2970 = vmin.f32 %v2906, 10.0
        %v2971 = vmin.f32 %v2907, 10.0
        %v2972 = vmin.f32 %v2908, 10.0
        %v2973 = vmin.f32 %v2909, 10.0
        %v2974 = vmin.f32 %v2910, 10.0
        %v2975 = vmin.f32 %v2911, 10.0
        %v2976 = vmin.f32 %v2912, 10.0
        %v2977 = vmin.f32 %v2913, 10.0
        %v2978 = vmin.f32 %v2914, 10.0
        %v2979 = vmin.f32 %v2915, 10.0
        %v2980 = vmin.f32 %v2916, 10.0
        %v2981 = vmin.f32 %v2917, 10.0
        %v2982 = vmin.f32 %v2918, 10.0
        %v2983 = vmin.f32 %v2919, 10.0
        %v2984 = vmin.f32 %v2920, 10.0
        %v2985 = vmin.f32 %v2921, 10.0
        %v2986 = vmin.f32 %v2922, 10.0
        %v2987 = vmin.f32 %v2923, 10.0
        %v2988 = vmin.f32 %v2924, 10.0
        %v2989 = vmin.f32 %v2925, 10.0
        %v2990 = vmin.f32 %v2926, 10.0
        %v2991 = vmin.f32 %v2927, 10.0
        %v2992 = vmin.f32 %v2928, 10.0
        %v2993 = vmin.f32 %v2929, 10.0
        %v2994 = vmin.f32 %v2930, 10.0
        %v2995 = vmin.f32 %v2931, 10.0
        %v2996 = vmin.f32 %v2932, 10.0
        %v2997 = vmin.f32 %v2933, 10.0
        %v2998 = vmin.f32 %v2934, 10.0
        %v2999 = vmin.f32 %v2935, 10.0
        %v3000 = vmin.f32 %v2936, 10.0
        %v3001 = vmin.f32 %v2937, 10.0
        %v3002 = vmin.f32 %v2938, 10.0
        %v3003 = vmin.f32 %v2939, 10.0
        %v3004 = vmin.f32 %v2940, 10.0
        %v3005 = vmin.f32 %v2941, 10.0
        %v3006 = vmin.f32 %v2942, 10.0
        %v3007 = vmin.f32 %v2943, 10.0
        %v3008 = vmin.f32 %v2944, 10.0
        %v3009 = vmin.f32 %v2945, 10.0
        %v3010 = vmin.f32 %v2946, 10.0
        %v3011 = vmin.f32 %v2947, 10.0
        %v3012 = vmin.f32 %v2948, 10.0
        %v3013 = vmax.f32 %v2949, %v2950
        %v3014 = vmax.f32 %v3013, %v2951
        %v3015 = vmax.f32 %v3014, %v2952
        %v3016 = vmax.f32 %v3015, %v2953
        %v3017 = vmax.f32 %v3016, %v2954
        %v3018 = vmax.f32 %v3017, %v2955
        %v3019 = vmax.f32 %v3018, %v2956
        %3020 = vmax.xlane.f32.xlu0 %v3019
        %v3021 = vpop.xlane.xlu0 %3020
        %v3022 = vmax.f32 %v2957, %v2958
        %v3023 = vmax.f32 %v3022, %v2959
        %v3024 = vmax.f32 %v3023, %v2960
        %v3025 = vmax.f32 %v3024, %v2961
        %v3026 = vmax.f32 %v3025, %v2962
        %v3027 = vmax.f32 %v3026, %v2963
        %v3028 = vmax.f32 %v3027, %v2964
        %3029 = vmax.xlane.f32.xlu0 %v3028
        %v3030 = vpop.xlane.xlu0 %3029
        %v3031 = vmax.f32 %v2965, %v2966
        %v3032 = vmax.f32 %v3031, %v2967
        %v3033 = vmax.f32 %v3032, %v2968
        %v3034 = vmax.f32 %v3033, %v2969
        %v3035 = vmax.f32 %v3034, %v2970
        %v3036 = vmax.f32 %v3035, %v2971
        %v3037 = vmax.f32 %v3036, %v2972
        %3038 = vmax.xlane.f32.xlu0 %v3037
        %v3039 = vpop.xlane.xlu0 %3038
        %v3040 = vmax.f32 %v2973, %v2974
        %v3041 = vmax.f32 %v3040, %v2975
        %v3042 = vmax.f32 %v3041, %v2976
        %v3043 = vmax.f32 %v3042, %v2977
        %v3044 = vmax.f32 %v3043, %v2978
        %v3045 = vmax.f32 %v3044, %v2979
        %v3046 = vmax.f32 %v3045, %v2980
        %3047 = vmax.xlane.f32.xlu0 %v3046
        %v3048 = vpop.xlane.xlu0 %3047
        %v3049 = vmax.f32 %v2981, %v2982
        %v3050 = vmax.f32 %v3049, %v2983
        %v3051 = vmax.f32 %v3050, %v2984
        %v3052 = vmax.f32 %v3051, %v2985
        %v3053 = vmax.f32 %v3052, %v2986
        %v3054 = vmax.f32 %v3053, %v2987
        %v3055 = vmax.f32 %v3054, %v2988
        %3056 = vmax.xlane.f32.xlu0 %v3055
        %v3057 = vpop.xlane.xlu0 %3056
        %v3058 = vmax.f32 %v2989, %v2990
        %v3059 = vmax.f32 %v3058, %v2991
        %v3060 = vmax.f32 %v3059, %v2992
        %v3061 = vmax.f32 %v3060, %v2993
        %v3062 = vmax.f32 %v3061, %v2994
        %v3063 = vmax.f32 %v3062, %v2995
        %v3064 = vmax.f32 %v3063, %v2996
        %3065 = vmax.xlane.f32.xlu0 %v3064
        %v3066 = vpop.xlane.xlu0 %3065
        %v3067 = vmax.f32 %v2997, %v2998
        %v3068 = vmax.f32 %v3067, %v2999
        %v3069 = vmax.f32 %v3068, %v3000
        %v3070 = vmax.f32 %v3069, %v3001
        %v3071 = vmax.f32 %v3070, %v3002
        %v3072 = vmax.f32 %v3071, %v3003
        %v3073 = vmax.f32 %v3072, %v3004
        %3074 = vmax.xlane.f32.xlu0 %v3073
        %v3075 = vpop.xlane.xlu0 %3074
        %v3076 = vmax.f32 %v3005, %v3006
        %v3077 = vmax.f32 %v3076, %v3007
        %v3078 = vmax.f32 %v3077, %v3008
        %v3079 = vmax.f32 %v3078, %v3009
        %v3080 = vmax.f32 %v3079, %v3010
        %v3081 = vmax.f32 %v3080, %v3011
        %v3082 = vmax.f32 %v3081, %v3012
        %3083 = vmax.xlane.f32.xlu0 %v3082
        %v3084 = vpop.xlane.xlu0 %3083
        %v3085 = vsub.f32 %v2949, %v3021
        %v3086 = vsub.f32 %v2950, %v3021
        %v3087 = vsub.f32 %v2951, %v3021
        %v3088 = vsub.f32 %v2952, %v3021
        %v3089 = vsub.f32 %v2953, %v3021
        %v3090 = vsub.f32 %v2954, %v3021
        %v3091 = vsub.f32 %v2955, %v3021
        %v3092 = vsub.f32 %v2956, %v3021
        %v3093 = vsub.f32 %v2957, %v3030
        %v3094 = vsub.f32 %v2958, %v3030
        %v3095 = vsub.f32 %v2959, %v3030
        %v3096 = vsub.f32 %v2960, %v3030
        %v3097 = vsub.f32 %v2961, %v3030
        %v3098 = vsub.f32 %v2962, %v3030
        %v3099 = vsub.f32 %v2963, %v3030
        %v3100 = vsub.f32 %v2964, %v3030
        %v3101 = vsub.f32 %v2965, %v3039
        %v3102 = vsub.f32 %v2966, %v3039
        %v3103 = vsub.f32 %v2967, %v3039
        %v3104 = vsub.f32 %v2968, %v3039
        %v3105 = vsub.f32 %v2969, %v3039
        %v3106 = vsub.f32 %v2970, %v3039
        %v3107 = vsub.f32 %v2971, %v3039
        %v3108 = vsub.f32 %v2972, %v3039
        %v3109 = vsub.f32 %v2973, %v3048
        %v3110 = vsub.f32 %v2974, %v3048
        %v3111 = vsub.f32 %v2975, %v3048
        %v3112 = vsub.f32 %v2976, %v3048
        %v3113 = vsub.f32 %v2977, %v3048
        %v3114 = vsub.f32 %v2978, %v3048
        %v3115 = vsub.f32 %v2979, %v3048
        %v3116 = vsub.f32 %v2980, %v3048
        %v3117 = vsub.f32 %v2981, %v3057
        %v3118 = vsub.f32 %v2982, %v3057
        %v3119 = vsub.f32 %v2983, %v3057
        %v3120 = vsub.f32 %v2984, %v3057
        %v3121 = vsub.f32 %v2985, %v3057
        %v3122 = vsub.f32 %v2986, %v3057
        %v3123 = vsub.f32 %v2987, %v3057
        %v3124 = vsub.f32 %v2988, %v3057
        %v3125 = vsub.f32 %v2989, %v3066
        %v3126 = vsub.f32 %v2990, %v3066
        %v3127 = vsub.f32 %v2991, %v3066
        %v3128 = vsub.f32 %v2992, %v3066
        %v3129 = vsub.f32 %v2993, %v3066
        %v3130 = vsub.f32 %v2994, %v3066
        %v3131 = vsub.f32 %v2995, %v3066
        %v3132 = vsub.f32 %v2996, %v3066
        %v3133 = vsub.f32 %v2997, %v3075
        %v3134 = vsub.f32 %v2998, %v3075
        %v3135 = vsub.f32 %v2999, %v3075
        %v3136 = vsub.f32 %v3000, %v3075
        %v3137 = vsub.f32 %v3001, %v3075
        %v3138 = vsub.f32 %v3002, %v3075
        %v3139 = vsub.f32 %v3003, %v3075
        %v3140 = vsub.f32 %v3004, %v3075
        %v3141 = vsub.f32 %v3005, %v3084
        %v3142 = vsub.f32 %v3006, %v3084
        %v3143 = vsub.f32 %v3007, %v3084
        %v3144 = vsub.f32 %v3008, %v3084
        %v3145 = vsub.f32 %v3009, %v3084
        %v3146 = vsub.f32 %v3010, %v3084
        %v3147 = vsub.f32 %v3011, %v3084
        %v3148 = vsub.f32 %v3012, %v3084
        %v3149 = vmul.f32 %v3085, 1.442695
        %v3150 = vpow.pop %v3149
        %v3151 = vmul.f32 %v3086, 1.442695
        %v3152 = vpow.pop %v3151
        %v3153 = vmul.f32 %v3087, 1.442695
        %v3154 = vpow.pop %v3153
        %v3155 = vmul.f32 %v3088, 1.442695
        %v3156 = vpow.pop %v3155
        %v3157 = vmul.f32 %v3089, 1.442695
        %v3158 = vpow.pop %v3157
        %v3159 = vmul.f32 %v3090, 1.442695
        %v3160 = vpow.pop %v3159
        %v3161 = vmul.f32 %v3091, 1.442695
        %v3162 = vpow.pop %v3161
        %v3163 = vmul.f32 %v3092, 1.442695
        %v3164 = vpow.pop %v3163
        %v3165 = vmul.f32 %v3093, 1.442695
        %v3166 = vpow.pop %v3165
        %v3167 = vmul.f32 %v3094, 1.442695
        %v3168 = vpow.pop %v3167
        %v3169 = vmul.f32 %v3095, 1.442695
        %v3170 = vpow.pop %v3169
        %v3171 = vmul.f32 %v3096, 1.442695
        %v3172 = vpow.pop %v3171
        %v3173 = vmul.f32 %v3097, 1.442695
        %v3174 = vpow.pop %v3173
        %v3175 = vmul.f32 %v3098, 1.442695
        %v3176 = vpow.pop %v3175
        %v3177 = vmul.f32 %v3099, 1.442695
        %v3178 = vpow.pop %v3177
        %v3179 = vmul.f32 %v3100, 1.442695
        %v3180 = vpow.pop %v3179
        %v3181 = vmul.f32 %v3101, 1.442695
        %v3182 = vpow.pop %v3181
        %v3183 = vmul.f32 %v3102, 1.442695
        %v3184 = vpow.pop %v3183
        %v3185 = vmul.f32 %v3103, 1.442695
        %v3186 = vpow.pop %v3185
        %v3187 = vmul.f32 %v3104, 1.442695
        %v3188 = vpow.pop %v3187
        %v3189 = vmul.f32 %v3105, 1.442695
        %v3190 = vpow.pop %v3189
        %v3191 = vmul.f32 %v3106, 1.442695
        %v3192 = vpow.pop %v3191
        %v3193 = vmul.f32 %v3107, 1.442695
        %v3194 = vpow.pop %v3193
        %v3195 = vmul.f32 %v3108, 1.442695
        %v3196 = vpow.pop %v3195
        %v3197 = vmul.f32 %v3109, 1.442695
        %v3198 = vpow.pop %v3197
        %v3199 = vmul.f32 %v3110, 1.442695
        %v3200 = vpow.pop %v3199
        %v3201 = vmul.f32 %v3111, 1.442695
        %v3202 = vpow.pop %v3201
        %v3203 = vmul.f32 %v3112, 1.442695
        %v3204 = vpow.pop %v3203
        %v3205 = vmul.f32 %v3113, 1.442695
        %v3206 = vpow.pop %v3205
        %v3207 = vmul.f32 %v3114, 1.442695
        %v3208 = vpow.pop %v3207
        %v3209 = vmul.f32 %v3115, 1.442695
        %v3210 = vpow.pop %v3209
        %v3211 = vmul.f32 %v3116, 1.442695
        %v3212 = vpow.pop %v3211
        %v3213 = vmul.f32 %v3117, 1.442695
        %v3214 = vpow.pop %v3213
        %v3215 = vmul.f32 %v3118, 1.442695
        %v3216 = vpow.pop %v3215
        %v3217 = vmul.f32 %v3119, 1.442695
        %v3218 = vpow.pop %v3217
        %v3219 = vmul.f32 %v3120, 1.442695
        %v3220 = vpow.pop %v3219
        %v3221 = vmul.f32 %v3121, 1.442695
        %v3222 = vpow.pop %v3221
        %v3223 = vmul.f32 %v3122, 1.442695
        %v3224 = vpow.pop %v3223
        %v3225 = vmul.f32 %v3123, 1.442695
        %v3226 = vpow.pop %v3225
        %v3227 = vmul.f32 %v3124, 1.442695
        %v3228 = vpow.pop %v3227
        %v3229 = vmul.f32 %v3125, 1.442695
        %v3230 = vpow.pop %v3229
        %v3231 = vmul.f32 %v3126, 1.442695
        %v3232 = vpow.pop %v3231
        %v3233 = vmul.f32 %v3127, 1.442695
        %v3234 = vpow.pop %v3233
        %v3235 = vmul.f32 %v3128, 1.442695
        %v3236 = vpow.pop %v3235
        %v3237 = vmul.f32 %v3129, 1.442695
        %v3238 = vpow.pop %v3237
        %v3239 = vmul.f32 %v3130, 1.442695
        %v3240 = vpow.pop %v3239
        %v3241 = vmul.f32 %v3131, 1.442695
        %v3242 = vpow.pop %v3241
        %v3243 = vmul.f32 %v3132, 1.442695
        %v3244 = vpow.pop %v3243
        %v3245 = vmul.f32 %v3133, 1.442695
        %v3246 = vpow.pop %v3245
        %v3247 = vmul.f32 %v3134, 1.442695
        %v3248 = vpow.pop %v3247
        %v3249 = vmul.f32 %v3135, 1.442695
        %v3250 = vpow.pop %v3249
        %v3251 = vmul.f32 %v3136, 1.442695
        %v3252 = vpow.pop %v3251
        %v3253 = vmul.f32 %v3137, 1.442695
        %v3254 = vpow.pop %v3253
        %v3255 = vmul.f32 %v3138, 1.442695
        %v3256 = vpow.pop %v3255
        %v3257 = vmul.f32 %v3139, 1.442695
        %v3258 = vpow.pop %v3257
        %v3259 = vmul.f32 %v3140, 1.442695
        %v3260 = vpow.pop %v3259
        %v3261 = vmul.f32 %v3141, 1.442695
        %v3262 = vpow.pop %v3261
        %v3263 = vmul.f32 %v3142, 1.442695
        %v3264 = vpow.pop %v3263
        %v3265 = vmul.f32 %v3143, 1.442695
        %v3266 = vpow.pop %v3265
        %v3267 = vmul.f32 %v3144, 1.442695
        %v3268 = vpow.pop %v3267
        %v3269 = vmul.f32 %v3145, 1.442695
        %v3270 = vpow.pop %v3269
        %v3271 = vmul.f32 %v3146, 1.442695
        %v3272 = vpow.pop %v3271
        %v3273 = vmul.f32 %v3147, 1.442695
        %v3274 = vpow.pop %v3273
        %v3275 = vmul.f32 %v3148, 1.442695
        %v3276 = vpow.pop %v3275
        %v3277 = vadd.f32 %v3150, %v3152
        %v3278 = vadd.f32 %v3277, %v3154
        %v3279 = vadd.f32 %v3278, %v3156
        %v3280 = vadd.f32 %v3279, %v3158
        %v3281 = vadd.f32 %v3280, %v3160
        %v3282 = vadd.f32 %v3281, %v3162
        %v3283 = vadd.f32 %v3282, %v3164
        %3284 = vadd.xlane.f32.xlu0 %v3283
        %v3285 = vpop.xlane.xlu0 %3284
        %v3286 = vadd.f32 %v3166, %v3168
        %v3287 = vadd.f32 %v3286, %v3170
        %v3288 = vadd.f32 %v3287, %v3172
        %v3289 = vadd.f32 %v3288, %v3174
        %v3290 = vadd.f32 %v3289, %v3176
        %v3291 = vadd.f32 %v3290, %v3178
        %v3292 = vadd.f32 %v3291, %v3180
        %3293 = vadd.xlane.f32.xlu0 %v3292
        %v3294 = vpop.xlane.xlu0 %3293
        %v3295 = vadd.f32 %v3182, %v3184
        %v3296 = vadd.f32 %v3295, %v3186
        %v3297 = vadd.f32 %v3296, %v3188
        %v3298 = vadd.f32 %v3297, %v3190
        %v3299 = vadd.f32 %v3298, %v3192
        %v3300 = vadd.f32 %v3299, %v3194
        %v3301 = vadd.f32 %v3300, %v3196
        %3302 = vadd.xlane.f32.xlu0 %v3301
        %v3303 = vpop.xlane.xlu0 %3302
        %v3304 = vadd.f32 %v3198, %v3200
        %v3305 = vadd.f32 %v3304, %v3202
        %v3306 = vadd.f32 %v3305, %v3204
        %v3307 = vadd.f32 %v3306, %v3206
        %v3308 = vadd.f32 %v3307, %v3208
        %v3309 = vadd.f32 %v3308, %v3210
        %v3310 = vadd.f32 %v3309, %v3212
        %3311 = vadd.xlane.f32.xlu0 %v3310
        %v3312 = vpop.xlane.xlu0 %3311
        %v3313 = vadd.f32 %v3214, %v3216
        %v3314 = vadd.f32 %v3313, %v3218
        %v3315 = vadd.f32 %v3314, %v3220
        %v3316 = vadd.f32 %v3315, %v3222
        %v3317 = vadd.f32 %v3316, %v3224
        %v3318 = vadd.f32 %v3317, %v3226
        %v3319 = vadd.f32 %v3318, %v3228
        %3320 = vadd.xlane.f32.xlu0 %v3319
        %v3321 = vpop.xlane.xlu0 %3320
        %v3322 = vadd.f32 %v3230, %v3232
        %v3323 = vadd.f32 %v3322, %v3234
        %v3324 = vadd.f32 %v3323, %v3236
        %v3325 = vadd.f32 %v3324, %v3238
        %v3326 = vadd.f32 %v3325, %v3240
        %v3327 = vadd.f32 %v3326, %v3242
        %v3328 = vadd.f32 %v3327, %v3244
        %3329 = vadd.xlane.f32.xlu0 %v3328
        %v3330 = vpop.xlane.xlu0 %3329
        %v3331 = vadd.f32 %v3246, %v3248
        %v3332 = vadd.f32 %v3331, %v3250
        %v3333 = vadd.f32 %v3332, %v3252
        %v3334 = vadd.f32 %v3333, %v3254
        %v3335 = vadd.f32 %v3334, %v3256
        %v3336 = vadd.f32 %v3335, %v3258
        %v3337 = vadd.f32 %v3336, %v3260
        %3338 = vadd.xlane.f32.xlu0 %v3337
        %v3339 = vpop.xlane.xlu0 %3338
        %v3340 = vadd.f32 %v3262, %v3264
        %v3341 = vadd.f32 %v3340, %v3266
        %v3342 = vadd.f32 %v3341, %v3268
        %v3343 = vadd.f32 %v3342, %v3270
        %v3344 = vadd.f32 %v3343, %v3272
        %v3345 = vadd.f32 %v3344, %v3274
        %v3346 = vadd.f32 %v3345, %v3276
        %3347 = vadd.xlane.f32.xlu0 %v3346
        %v3348 = vpop.xlane.xlu0 %3347
        %v3349 = vlog2.pop %v3285
        %v3350 = vmul.f32 %v3349, 0.6931472
        %v3351 = vlog2.pop %v3294
        %v3352 = vmul.f32 %v3351, 0.6931472
        %v3353 = vlog2.pop %v3303
        %v3354 = vmul.f32 %v3353, 0.6931472
        %v3355 = vlog2.pop %v3312
        %v3356 = vmul.f32 %v3355, 0.6931472
        %v3357 = vlog2.pop %v3321
        %v3358 = vmul.f32 %v3357, 0.6931472
        %v3359 = vlog2.pop %v3330
        %v3360 = vmul.f32 %v3359, 0.6931472
        %v3361 = vlog2.pop %v3339
        %v3362 = vmul.f32 %v3361, 0.6931472
        %v3363 = vlog2.pop %v3348
        %v3364 = vmul.f32 %v3363, 0.6931472
        %v3365 = vadd.f32 %v3021, %v3350
        %v3366 = vadd.f32 %v3030, %v3352
        %v3367 = vadd.f32 %v3039, %v3354
        %v3368 = vadd.f32 %v3048, %v3356
        %v3369 = vadd.f32 %v3057, %v3358
        %v3370 = vadd.f32 %v3066, %v3360
        %v3371 = vadd.f32 %v3075, %v3362
        %v3372 = vadd.f32 %v3084, %v3364
        %v3373 = vmax.f32 %v3365, 0.0
        %v3374 = vmax.f32 %v3366, 0.0
        %v3375 = vmax.f32 %v3367, 0.0
        %v3376 = vmax.f32 %v3368, 0.0
        %v3377 = vmax.f32 %v3369, 0.0
        %v3378 = vmax.f32 %v3370, 0.0
        %v3379 = vmax.f32 %v3371, 0.0
        %v3380 = vmax.f32 %v3372, 0.0
        %v3381 = vand.u32 2147483647, %v3365
        %v3382 = vand.u32 2147483647, %v3366
        %v3383 = vand.u32 2147483647, %v3367
        %v3384 = vand.u32 2147483647, %v3368
        %v3385 = vand.u32 2147483647, %v3369
        %v3386 = vand.u32 2147483647, %v3370
        %v3387 = vand.u32 2147483647, %v3371
        %v3388 = vand.u32 2147483647, %v3372
        %v3389 = vsub.f32 0.0, %v3381
        %v3390 = vsub.f32 0.0, %v3382
        %v3391 = vsub.f32 0.0, %v3383
        %v3392 = vsub.f32 0.0, %v3384
        %v3393 = vsub.f32 0.0, %v3385
        %v3394 = vsub.f32 0.0, %v3386
        %v3395 = vsub.f32 0.0, %v3387
        %v3396 = vsub.f32 0.0, %v3388
        %v3397 = vmul.f32 %v3389, 1.442695
        %v3398 = vpow.pop %v3397
        %v3399 = vmul.f32 %v3390, 1.442695
        %v3400 = vpow.pop %v3399
        %v3401 = vmul.f32 %v3391, 1.442695
        %v3402 = vpow.pop %v3401
        %v3403 = vmul.f32 %v3392, 1.442695
        %v3404 = vpow.pop %v3403
        %v3405 = vmul.f32 %v3393, 1.442695
        %v3406 = vpow.pop %v3405
        %v3407 = vmul.f32 %v3394, 1.442695
        %v3408 = vpow.pop %v3407
        %v3409 = vmul.f32 %v3395, 1.442695
        %v3410 = vpow.pop %v3409
        %v3411 = vmul.f32 %v3396, 1.442695
        %v3412 = vpow.pop %v3411
        %v3413 = vadd.f32 %v3398, 1.0
        %v3414 = vlog2.pop %v3413
        %v3415 = vmul.f32 %v3414, 0.6931472
        %v3416 = vmul.f32 -0.5, %v3398
        %v3417 = vadd.f32 %v3416, 1.0
        %v3418 = vmul.f32 %v3417, %v3398
        %v3419 = vand.u32 2147483647, %v3398
        %vm3420 = vcmp.lt.f32.partialorder %v3419, 0.0004427343
        %v3421 = vsel %vm3420, %v3418, %v3415
        %v3422 = vadd.f32 %v3400, 1.0
        %v3423 = vlog2.pop %v3422
        %v3424 = vmul.f32 %v3423, 0.6931472
        %v3425 = vmul.f32 -0.5, %v3400
        %v3426 = vadd.f32 %v3425, 1.0
        %v3427 = vmul.f32 %v3426, %v3400
        %v3428 = vand.u32 2147483647, %v3400
        %vm3429 = vcmp.lt.f32.partialorder %v3428, 0.0004427343
        %v3430 = vsel %vm3429, %v3427, %v3424
        %v3431 = vadd.f32 %v3402, 1.0
        %v3432 = vlog2.pop %v3431
        %v3433 = vmul.f32 %v3432, 0.6931472
        %v3434 = vmul.f32 -0.5, %v3402
        %v3435 = vadd.f32 %v3434, 1.0
        %v3436 = vmul.f32 %v3435, %v3402
        %v3437 = vand.u32 2147483647, %v3402
        %vm3438 = vcmp.lt.f32.partialorder %v3437, 0.0004427343
        %v3439 = vsel %vm3438, %v3436, %v3433
        %v3440 = vadd.f32 %v3404, 1.0
        %v3441 = vlog2.pop %v3440
        %v3442 = vmul.f32 %v3441, 0.6931472
        %v3443 = vmul.f32 -0.5, %v3404
        %v3444 = vadd.f32 %v3443, 1.0
        %v3445 = vmul.f32 %v3444, %v3404
        %v3446 = vand.u32 2147483647, %v3404
        %vm3447 = vcmp.lt.f32.partialorder %v3446, 0.0004427343
        %v3448 = vsel %vm3447, %v3445, %v3442
        %v3449 = vadd.f32 %v3406, 1.0
        %v3450 = vlog2.pop %v3449
        %v3451 = vmul.f32 %v3450, 0.6931472
        %v3452 = vmul.f32 -0.5, %v3406
        %v3453 = vadd.f32 %v3452, 1.0
        %v3454 = vmul.f32 %v3453, %v3406
        %v3455 = vand.u32 2147483647, %v3406
        %vm3456 = vcmp.lt.f32.partialorder %v3455, 0.0004427343
        %v3457 = vsel %vm3456, %v3454, %v3451
        %v3458 = vadd.f32 %v3408, 1.0
        %v3459 = vlog2.pop %v3458
        %v3460 = vmul.f32 %v3459, 0.6931472
        %v3461 = vmul.f32 -0.5, %v3408
        %v3462 = vadd.f32 %v3461, 1.0
        %v3463 = vmul.f32 %v3462, %v3408
        %v3464 = vand.u32 2147483647, %v3408
        %vm3465 = vcmp.lt.f32.partialorder %v3464, 0.0004427343
        %v3466 = vsel %vm3465, %v3463, %v3460
        %v3467 = vadd.f32 %v3410, 1.0
        %v3468 = vlog2.pop %v3467
        %v3469 = vmul.f32 %v3468, 0.6931472
        %v3470 = vmul.f32 -0.5, %v3410
        %v3471 = vadd.f32 %v3470, 1.0
        %v3472 = vmul.f32 %v3471, %v3410
        %v3473 = vand.u32 2147483647, %v3410
        %vm3474 = vcmp.lt.f32.partialorder %v3473, 0.0004427343
        %v3475 = vsel %vm3474, %v3472, %v3469
        %v3476 = vadd.f32 %v3412, 1.0
        %v3477 = vlog2.pop %v3476
        %v3478 = vmul.f32 %v3477, 0.6931472
        %v3479 = vmul.f32 -0.5, %v3412
        %v3480 = vadd.f32 %v3479, 1.0
        %v3481 = vmul.f32 %v3480, %v3412
        %v3482 = vand.u32 2147483647, %v3412
        %vm3483 = vcmp.lt.f32.partialorder %v3482, 0.0004427343
        %v3484 = vsel %vm3483, %v3481, %v3478
        %v3485 = vadd.f32 %v3373, %v3421
        %v3486 = vadd.f32 %v3374, %v3430
        %v3487 = vadd.f32 %v3375, %v3439
        %v3488 = vadd.f32 %v3376, %v3448
        %v3489 = vadd.f32 %v3377, %v3457
        %v3490 = vadd.f32 %v3378, %v3466
        %v3491 = vadd.f32 %v3379, %v3475
        %v3492 = vadd.f32 %v3380, %v3484
        %v3493 = vtanh.pop %v3485
        %v3494 = vtanh.pop %v3486
        %v3495 = vtanh.pop %v3487
        %v3496 = vtanh.pop %v3488
        %v3497 = vtanh.pop %v3489
        %v3498 = vtanh.pop %v3490
        %v3499 = vtanh.pop %v3491
        %v3500 = vtanh.pop %v3492
        %v3501 = vmul.f32 %v3365, %v3493
        %v3502 = vmul.f32 %v3366, %v3494
        %v3503 = vmul.f32 %v3367, %v3495
        %v3504 = vmul.f32 %v3368, %v3496
        %v3505 = vmul.f32 %v3369, %v3497
        %v3506 = vmul.f32 %v3370, %v3498
        %v3507 = vmul.f32 %v3371, %v3499
        %v3508 = vmul.f32 %v3372, %v3500
        %v3509 = vmul.f32 %v3365, %v3501
        %v3510 = vmul.f32 %v3366, %v3502
        %v3511 = vmul.f32 %v3367, %v3503
        %v3512 = vmul.f32 %v3368, %v3504
        %v3513 = vmul.f32 %v3369, %v3505
        %v3514 = vmul.f32 %v3370, %v3506
        %v3515 = vmul.f32 %v3371, %v3507
        %v3516 = vmul.f32 %v3372, %v3508
        %vm3517 = vcmask 7168
        %3518 = vst.msk [vmem:[%s225] sm:$0xff] %vm3517, %v3509
        %3519 = vst.msk [vmem:[%s225 + $0x8] sm:$0xff] %vm3517, %v3510
        %3520 = vst.msk [vmem:[%s225 + $0x10] sm:$0xff] %vm3517, %v3511
        %3521 = vst.msk [vmem:[%s225 + $0x18] sm:$0xff] %vm3517, %v3512
        %3522 = vst.msk [vmem:[%s225 + $0x20] sm:$0xff] %vm3517, %v3513
        %3523 = vst.msk [vmem:[%s225 + $0x28] sm:$0xff] %vm3517, %v3514
        %3524 = vst.msk [vmem:[%s225 + $0x30] sm:$0xff] %vm3517, %v3515
        %3525 = vst.msk [vmem:[%s225 + $0x38] sm:$0xff] %vm3517, %v3516
        %s3526 = smul.u32 8, %s18
        %p3527 = scmp.lt.s32.totalorder %s3526, 15
        %s3528 = scalar_select %p3527, %s3526, 15
        %s3529 = smul.addr %s3528, 8
        %s3530 = scalar_lea.vmem %s3, %s3529
        // Predicated region
        $region45: #{tpu_custom_call.1} parent=31 // pred_check
          %p3531 = pneg %p104
        $region46: #{tpu_custom_call.1} parent=31 // pred_check_branch
          %3533 = sbr.rel (%p3531) target = $region48
        $region47: #{tpu_custom_call.1} parent=31 // pred_region
          %s3534 = smul.u32 8, %s18
        $region48: #{tpu_custom_call.1} parent=31 // pred_fallthru
          _
      $region32: #{tpu_custom_call.1} parent=5 // pred_fallthru
        _
      %p3535 = scmp.le.s32.totalorder 2, %s13
      // Predicated region
      $region49: #{tpu_custom_call.1} parent=5 // pred_check
        %p3536 = pneg %p3535
      $region50: #{tpu_custom_call.1} parent=5 // pred_check_branch
        %3538 = sbr.rel (%p3536) target = $region52
      $region51: #{tpu_custom_call.1} parent=5 // pred_region
        %s3539 = ssub.s32 %s13, 2
        // Predicated region
        $region53: #{tpu_custom_call.1} parent=51 // pred_check
          %p3540 = pneg %p110
        $region54: #{tpu_custom_call.1} parent=51 // pred_check_branch
          %3542 = sbr.rel (%p3540) target = $region56
        $region55: #{tpu_custom_call.1} parent=51 // pred_region
          %s3543 = smul.u32 8, %s19
          %p3544 = scmp.lt.s32.totalorder %s3543, 15
          %s3545 = scalar_select %p3544, %s3543, 15
          %s3546 = smul.addr %s3545, 8
          %s3547 = scalar_lea.vmem %s3, %s3546
        $region56: #{tpu_custom_call.1} parent=51 // pred_fallthru
          _
      $region52: #{tpu_custom_call.1} parent=5 // pred_fallthru
        _
    $region6: #{tpu_custom_call.1} parent=1 // loop_footer
      %s17 = sadd.s32 1, %s13
    $region7: #{tpu_custom_call.1} parent=1 // loop_footer_branch
      %12 = sbr.rel target = $region3
    $region8: #{tpu_custom_call.1} parent=1 // loop_exit
      _
    %3548 = vsyncpa [#allocation3], 1
    %s3549 = scalar_lea.sflag [#allocation3], 1
    %3550 = vsyncpa %s3549, 1
    %3551 = vsyncpa [#allocation5], 1

</llo_original>
